<compile_context>
chip_gen: v6e
topology: v6e:2x2x1
jax: 0.10.0
libtpu: 0.0.40
codegen_flags: <defaults>
</compile_context>

<pallas_src>
import functools

import jax
import jax.numpy as jnp
from jax.experimental import pallas as pl
from jax.experimental.pallas import tpu as pltpu

IN_FEATURES = 128 * 256        # 32768
TK = 8192                      # reduction tile for the first (big) linear
TN = 8192                      # output tile for the last (big) linear


# ---------------------------------------------------------------------------
# Kernel A: first big linear (32768 -> 100) tiled over the reduction axis,
# accumulating directly into the resident (B, 100) output block.  At the final
# grid step the whole chain of tiny linears runs:
#   encoder 100->49->25->9->nb, decoder nb->9->25->49->100, all with ReLU.
# Produces h100 = relu(decoder_linear4(...)) of shape (B, 100).
# ---------------------------------------------------------------------------
def _mlp_core_kernel(x_ref, w1_ref, b1_ref,
                     w2_ref, b2_ref, w3_ref, b3_ref, w4_ref, b4_ref,
                     wb_ref, bb_ref,
                     wd1_ref, bd1_ref, wd2_ref, bd2_ref,
                     wd3_ref, bd3_ref, wd4_ref, bd4_ref,
                     h_out_ref):
    k = pl.program_id(0)

    @pl.when(k == 0)
    def _():
        h_out_ref[...] = jnp.zeros_like(h_out_ref)

    # Hot path: partial bf16 matmul (f32 accumulation) over one K-chunk of the
    # 32768-wide input.  W1 chunk arrives from HBM already in bf16.
    h_out_ref[...] += jnp.dot(x_ref[...].astype(jnp.bfloat16), w1_ref[...],
                              preferred_element_type=jnp.float32)

    @pl.when(k == pl.num_programs(0) - 1)
    def _():
        relu = lambda v: jnp.maximum(v, 0.0)
        dot = functools.partial(jnp.dot, preferred_element_type=jnp.float32)

        h = relu(h_out_ref[...] + b1_ref[...])               # encoder_linear1 + relu
        h = relu(dot(h, w2_ref[...]) + b2_ref[...])          # encoder_linear2 + relu
        h = relu(dot(h, w3_ref[...]) + b3_ref[...])          # encoder_linear3 + relu
        h = relu(dot(h, w4_ref[...]) + b4_ref[...])          # encoder_linear4 + relu
        z = dot(h, wb_ref[...]) + bb_ref[...]                # encoder_bottleneck (no act)
        h = relu(dot(z, wd1_ref[...]) + bd1_ref[...])        # decoder_linear1 + relu
        h = relu(dot(h, wd2_ref[...]) + bd2_ref[...])        # decoder_linear2 + relu
        h = relu(dot(h, wd3_ref[...]) + bd3_ref[...])        # decoder_linear3 + relu
        h = relu(dot(h, wd4_ref[...]) + bd4_ref[...])        # decoder_linear4 + relu
        h_out_ref[...] = h


# ---------------------------------------------------------------------------
# Kernel B: last big linear (100 -> 32768) tiled over the output axis + tanh.
# Wd5 is stored/streamed as bf16; accumulation is f32.  Output tiles stay
# lane-dense (multiple of 128), so stores remain unmasked.
# ---------------------------------------------------------------------------
def _decoder_out_kernel(h_ref, w5_ref, b5_ref, o_ref):
    y = jnp.dot(h_ref[...].astype(jnp.bfloat16), w5_ref[...],
                preferred_element_type=jnp.float32)
    o_ref[...] = jnp.tanh(y + b5_ref[...])


def autoencoder_forward(x_nchw, params):
    """x_nchw: (B, 1, 128, 256) float32. Returns (B, 1, 128, 256) float32."""
    B = x_nchw.shape[0]
    x = x_nchw.reshape(B, -1)                       # (B, 32768)

    (w1, b1, w2, b2, w3, b3, w4, b4, wb, bb,
     wd1, bd1, wd2, bd2, wd3, bd3, wd4, bd4, wd5, bd5) = params

    full2d = lambda shp: pl.BlockSpec(shp, lambda k: (0, 0))

    # ---- Kernel A: grid over K chunks of the 32768-wide input ----
    grid_k = IN_FEATURES // TK                      # 4 steps of 8192
    small_specs = [
        full2d(b1.shape),
        full2d(w2.shape), full2d(b2.shape),
        full2d(w3.shape), full2d(b3.shape),
        full2d(w4.shape), full2d(b4.shape),
        full2d(wb.shape), full2d(bb.shape),
        full2d(wd1.shape), full2d(bd1.shape),
        full2d(wd2.shape), full2d(bd2.shape),
        full2d(wd3.shape), full2d(bd3.shape),
        full2d(wd4.shape), full2d(bd4.shape),
    ]
    h100 = pl.pallas_call(
        _mlp_core_kernel,
        out_shape=jax.ShapeDtypeStruct((B, 100), jnp.float32),
        grid_spec=pltpu.PrefetchScalarGridSpec(
            num_scalar_prefetch=0,
            grid=(grid_k,),
            in_specs=[
                pl.BlockSpec((B, TK), lambda k: (0, k)),      # x chunk (f32)
                pl.BlockSpec((TK, 100), lambda k: (k, 0)),    # W1 chunk (bf16)
            ] + small_specs,
            out_specs=pl.BlockSpec((B, 100), lambda k: (0, 0)),
        ),
        compiler_params=pltpu.CompilerParams(
            dimension_semantics=("arbitrary",)),
    )(x, w1, b1, w2, b2, w3, b3, w4, b4, wb, bb,
      wd1, bd1, wd2, bd2, wd3, bd3, wd4, bd4)

    # ---- Kernel B: grid over N chunks of the 32768-wide output ----
    grid_n = IN_FEATURES // TN                      # 4 steps of 8192
    y = pl.pallas_call(
        _decoder_out_kernel,
        out_shape=jax.ShapeDtypeStruct((B, IN_FEATURES), jnp.float32),
        grid_spec=pltpu.PrefetchScalarGridSpec(
            num_scalar_prefetch=0,
            grid=(grid_n,),
            in_specs=[
                pl.BlockSpec((B, 100), lambda j: (0, 0)),     # h100 (resident)
                pl.BlockSpec((100, TN), lambda j: (0, j)),    # W5 column chunk (bf16)
                pl.BlockSpec((1, TN), lambda j: (0, j)),      # b5 chunk
            ],
            out_specs=pl.BlockSpec((B, TN), lambda j: (0, j)),
        ),
        compiler_params=pltpu.CompilerParams(
            dimension_semantics=("parallel",)),
    )(h100, wd5, bd5)

    return y.reshape(-1, 1, 128, 256)


# ---------------------------------------------------------------------------
# Deterministic parameter construction (synthetic weights, not a checkpoint).
# Linear(n_in, n_out): W (n_in, n_out), b (1, n_out).
# The two HBM-dominant matrices (W1, Wd5) are stored in bf16; everything else
# (all tiny) stays f32.
# ---------------------------------------------------------------------------
def make_params(key, nbottleneck):
    dims = [
        (IN_FEATURES, 100), (100, 49), (49, 25), (25, 9), (9, nbottleneck),   # encoder
        (nbottleneck, 9), (9, 25), (25, 49), (49, 100), (100, IN_FEATURES),   # decoder
    ]
    params = []
    for li, (n_in, n_out) in enumerate(dims):
        key, kw, kb = jax.random.split(key, 3)
        scale = 1.0 / jnp.sqrt(jnp.float32(n_in))
        w = jax.random.uniform(kw, (n_in, n_out), jnp.float32, -scale, scale)
        b = jax.random.uniform(kb, (1, n_out), jnp.float32, -scale, scale)
        if li in (0, len(dims) - 1):        # encoder_linear1 / decoder_linear5
            w = w.astype(jnp.bfloat16)
        params.append(w)
        params.append(b)
    return tuple(params)


def reference_forward(x_nchw, params):
    """Pure-JAX reference mirroring the PyTorch module (with the same bf16
    storage for the two big matrices), for validation."""
    (w1, b1, w2, b2, w3, b3, w4, b4, wb, bb,
     wd1, bd1, wd2, bd2, wd3, bd3, wd4, bd4, wd5, bd5) = params
    relu = lambda v: jnp.maximum(v, 0.0)
    h = x_nchw.reshape(x_nchw.shape[0], -1)
    h = jnp.dot(h.astype(jnp.bfloat16), w1, preferred_element_type=jnp.float32)
    h = relu(h + b1)
    h = relu(h @ w2 + b2)
    h = relu(h @ w3 + b3)
    h = relu(h @ w4 + b4)
    z = h @ wb + bb
    h = relu(z @ wd1 + bd1)
    h = relu(h @ wd2 + bd2)
    h = relu(h @ wd3 + bd3)
    h = relu(h @ wd4 + bd4)
    y = jnp.dot(h.astype(jnp.bfloat16), wd5, preferred_element_type=jnp.float32)
    y = jnp.tanh(y + bd5)
    return y.reshape(-1, 1, 128, 256)


if __name__ == "__main__":
    key = jax.random.PRNGKey(0)
    k_params, k_x = jax.random.split(key)

    nbottleneck = 4
    params = make_params(k_params, nbottleneck)

    B = 2
    x = jax.random.normal(k_x, (B, 1, 128, 256), jnp.float32)

    out = autoencoder_forward(x, params)
    out = jax.block_until_ready(out)

    ref = reference_forward(x, params)
    assert out.shape == (B, 1, 128, 256)
    # bf16 weight storage + tiled f32 accumulation vs. XLA's accumulation
    # order -> slightly looser tolerance than the pure-f32 check.
    assert jnp.allclose(out, ref, atol=2e-3, rtol=2e-3)

    print("KERNEL_OK")
</pallas_src>

<mosaic_0001>
module attributes {stable_mosaic.version = 11 : i64} {
  func.func @_mlp_core_kernel(%arg0: i32, %arg1: memref<2x8192xf32, #tpu.memory_space<vmem>>, %arg2: memref<8192x100xbf16, #tpu.memory_space<vmem>>, %arg3: memref<1x100xf32, #tpu.memory_space<vmem>>, %arg4: memref<100x49xf32, #tpu.memory_space<vmem>>, %arg5: memref<1x49xf32, #tpu.memory_space<vmem>>, %arg6: memref<49x25xf32, #tpu.memory_space<vmem>>, %arg7: memref<1x25xf32, #tpu.memory_space<vmem>>, %arg8: memref<25x9xf32, #tpu.memory_space<vmem>>, %arg9: memref<1x9xf32, #tpu.memory_space<vmem>>, %arg10: memref<9x4xf32, #tpu.memory_space<vmem>>, %arg11: memref<1x4xf32, #tpu.memory_space<vmem>>, %arg12: memref<4x9xf32, #tpu.memory_space<vmem>>, %arg13: memref<1x9xf32, #tpu.memory_space<vmem>>, %arg14: memref<9x25xf32, #tpu.memory_space<vmem>>, %arg15: memref<1x25xf32, #tpu.memory_space<vmem>>, %arg16: memref<25x49xf32, #tpu.memory_space<vmem>>, %arg17: memref<1x49xf32, #tpu.memory_space<vmem>>, %arg18: memref<49x100xf32, #tpu.memory_space<vmem>>, %arg19: memref<1x100xf32, #tpu.memory_space<vmem>>, %arg20: memref<2x100xf32, #tpu.memory_space<vmem>>) attributes {dimension_semantics = [#tpu.dimension_semantics<arbitrary>], iteration_bounds = array<i64: 4>, scalar_prefetch = 0 : i64, scratch_operands = 0 : i64, tpu.core_type = #tpu.core_type<tc>, window_params = [{transform_indices = @transform_0, window_bounds = array<i64: 2, 8192>}, {transform_indices = @transform_1, window_bounds = array<i64: 8192, 100>}, {pipeline_mode = #tpu.pipeline_mode<synchronous>, transform_indices = @transform_2, window_bounds = array<i64: 1, 100>}, {pipeline_mode = #tpu.pipeline_mode<synchronous>, transform_indices = @transform_3, window_bounds = array<i64: 100, 49>}, {pipeline_mode = #tpu.pipeline_mode<synchronous>, transform_indices = @transform_4, window_bounds = array<i64: 1, 49>}, {pipeline_mode = #tpu.pipeline_mode<synchronous>, transform_indices = @transform_5, window_bounds = array<i64: 49, 25>}, {pipeline_mode = #tpu.pipeline_mode<synchronous>, transform_indices = @transform_6, window_bounds = array<i64: 1, 25>}, {pipeline_mode = #tpu.pipeline_mode<synchronous>, transform_indices = @transform_7, window_bounds = array<i64: 25, 9>}, {pipeline_mode = #tpu.pipeline_mode<synchronous>, transform_indices = @transform_8, window_bounds = array<i64: 1, 9>}, {pipeline_mode = #tpu.pipeline_mode<synchronous>, transform_indices = @transform_9, window_bounds = array<i64: 9, 4>}, {pipeline_mode = #tpu.pipeline_mode<synchronous>, transform_indices = @transform_10, window_bounds = array<i64: 1, 4>}, {pipeline_mode = #tpu.pipeline_mode<synchronous>, transform_indices = @transform_11, window_bounds = array<i64: 4, 9>}, {pipeline_mode = #tpu.pipeline_mode<synchronous>, transform_indices = @transform_12, window_bounds = array<i64: 1, 9>}, {pipeline_mode = #tpu.pipeline_mode<synchronous>, transform_indices = @transform_13, window_bounds = array<i64: 9, 25>}, {pipeline_mode = #tpu.pipeline_mode<synchronous>, transform_indices = @transform_14, window_bounds = array<i64: 1, 25>}, {pipeline_mode = #tpu.pipeline_mode<synchronous>, transform_indices = @transform_15, window_bounds = array<i64: 25, 49>}, {pipeline_mode = #tpu.pipeline_mode<synchronous>, transform_indices = @transform_16, window_bounds = array<i64: 1, 49>}, {pipeline_mode = #tpu.pipeline_mode<synchronous>, transform_indices = @transform_17, window_bounds = array<i64: 49, 100>}, {pipeline_mode = #tpu.pipeline_mode<synchronous>, transform_indices = @transform_18, window_bounds = array<i64: 1, 100>}, {pipeline_mode = #tpu.pipeline_mode<synchronous>, transform_indices = @transform_19, window_bounds = array<i64: 2, 100>}]} {
    %c0_i32 = arith.constant 0 : i32
    %0 = arith.cmpi eq, %arg0, %c0_i32 : i32
    %1 = arith.extui %0 : i1 to i32
    %c0_i32_0 = arith.constant 0 : i32
    %2 = arith.cmpi ne, %1, %c0_i32_0 : i32
    scf.if %2 {
      %cst_9 = arith.constant 0.000000e+00 : f32
      %13 = vector.broadcast %cst_9 : f32 to vector<2x100xf32>
      %c0_10 = arith.constant 0 : index
      %c0_11 = arith.constant 0 : index
      %14 = vector.load %arg20[%c0_10, %c0_11] : memref<2x100xf32, #tpu.memory_space<vmem>>, vector<2x100xf32>
      tpu.vector_store %arg20[%c0_10, %c0_11], %13 {strides = array<i32>} : memref<2x100xf32, #tpu.memory_space<vmem>>, vector<2x100xf32>,
    } else {
    }
    %c0 = arith.constant 0 : index
    %c0_1 = arith.constant 0 : index
    %3 = vector.load %arg20[%c0, %c0_1] : memref<2x100xf32, #tpu.memory_space<vmem>>, vector<2x100xf32>
    %c0_2 = arith.constant 0 : index
    %c0_3 = arith.constant 0 : index
    %4 = vector.load %arg1[%c0_2, %c0_3] : memref<2x8192xf32, #tpu.memory_space<vmem>>, vector<2x8192xf32>
    %5 = arith.truncf %4 : vector<2x8192xf32> to vector<2x8192xbf16>
    %c0_4 = arith.constant 0 : index
    %c0_5 = arith.constant 0 : index
    %6 = vector.load %arg2[%c0_4, %c0_5] : memref<8192x100xbf16, #tpu.memory_space<vmem>>, vector<8192x100xbf16>
    %cst = arith.constant dense<0.000000e+00> : vector<2x100xf32>
    %7 = tpu.matmul %5, %6, %cst {dimension_numbers = #tpu.dot_dimension_numbers<[1], [0], [0], [1], [0, 0, 1, 1], [], []>} : vector<2x8192xbf16>, vector<8192x100xbf16>, vector<2x100xf32> -> vector<2x100xf32>
    %8 = arith.addf %3, %7 : vector<2x100xf32>
    %c0_6 = arith.constant 0 : index
    %c0_7 = arith.constant 0 : index
    %9 = vector.load %arg20[%c0_6, %c0_7] : memref<2x100xf32, #tpu.memory_space<vmem>>, vector<2x100xf32>
    tpu.vector_store %arg20[%c0_6, %c0_7], %8 {strides = array<i32>} : memref<2x100xf32, #tpu.memory_space<vmem>>, vector<2x100xf32>,
    %c3_i32 = arith.constant 3 : i32
    %10 = arith.cmpi eq, %arg0, %c3_i32 : i32
    %11 = arith.extui %10 : i1 to i32
    %c0_i32_8 = arith.constant 0 : i32
    %12 = arith.cmpi ne, %11, %c0_i32_8 : i32
    scf.if %12 {
      %c0_9 = arith.constant 0 : index
      %c0_10 = arith.constant 0 : index
      %13 = vector.load %arg20[%c0_9, %c0_10] : memref<2x100xf32, #tpu.memory_space<vmem>>, vector<2x100xf32>
      %c0_11 = arith.constant 0 : index
      %c0_12 = arith.constant 0 : index
      %14 = vector.load %arg3[%c0_11, %c0_12] : memref<1x100xf32, #tpu.memory_space<vmem>>, vector<1x100xf32>
      %15 = vector.broadcast %14 : vector<1x100xf32> to vector<2x100xf32>
      %16 = arith.addf %13, %15 : vector<2x100xf32>
      %cst_13 = arith.constant 0.000000e+00 : f32
      %17 = vector.broadcast %cst_13 : f32 to vector<2x100xf32>
      %18 = arith.maximumf %16, %17 : vector<2x100xf32>
      %c0_14 = arith.constant 0 : index
      %c0_15 = arith.constant 0 : index
      %19 = vector.load %arg4[%c0_14, %c0_15] : memref<100x49xf32, #tpu.memory_space<vmem>>, vector<100x49xf32>
      %cst_16 = arith.constant dense<0.000000e+00> : vector<2x49xf32>
      %20 = tpu.matmul %18, %19, %cst_16 {dimension_numbers = #tpu.dot_dimension_numbers<[1], [0], [0], [1], [0, 0, 1, 1], [], []>} : vector<2x100xf32>, vector<100x49xf32>, vector<2x49xf32> -> vector<2x49xf32>
      %c0_17 = arith.constant 0 : index
      %c0_18 = arith.constant 0 : index
      %21 = vector.load %arg5[%c0_17, %c0_18] : memref<1x49xf32, #tpu.memory_space<vmem>>, vector<1x49xf32>
      %22 = vector.broadcast %21 : vector<1x49xf32> to vector<2x49xf32>
      %23 = arith.addf %20, %22 : vector<2x49xf32>
      %cst_19 = arith.constant 0.000000e+00 : f32
      %24 = vector.broadcast %cst_19 : f32 to vector<2x49xf32>
      %25 = arith.maximumf %23, %24 : vector<2x49xf32>
      %c0_20 = arith.constant 0 : index
      %c0_21 = arith.constant 0 : index
      %26 = vector.load %arg6[%c0_20, %c0_21] : memref<49x25xf32, #tpu.memory_space<vmem>>, vector<49x25xf32>
      %cst_22 = arith.constant dense<0.000000e+00> : vector<2x25xf32>
      %27 = tpu.matmul %25, %26, %cst_22 {dimension_numbers = #tpu.dot_dimension_numbers<[1], [0], [0], [1], [0, 0, 1, 1], [], []>} : vector<2x49xf32>, vector<49x25xf32>, vector<2x25xf32> -> vector<2x25xf32>
      %c0_23 = arith.constant 0 : index
      %c0_24 = arith.constant 0 : index
      %28 = vector.load %arg7[%c0_23, %c0_24] : memref<1x25xf32, #tpu.memory_space<vmem>>, vector<1x25xf32>
      %29 = vector.broadcast %28 : vector<1x25xf32> to vector<2x25xf32>
      %30 = arith.addf %27, %29 : vector<2x25xf32>
      %cst_25 = arith.constant 0.000000e+00 : f32
      %31 = vector.broadcast %cst_25 : f32 to vector<2x25xf32>
      %32 = arith.maximumf %30, %31 : vector<2x25xf32>
      %c0_26 = arith.constant 0 : index
      %c0_27 = arith.constant 0 : index
      %33 = vector.load %arg8[%c0_26, %c0_27] : memref<25x9xf32, #tpu.memory_space<vmem>>, vector<25x9xf32>
      %cst_28 = arith.constant dense<0.000000e+00> : vector<2x9xf32>
      %34 = tpu.matmul %32, %33, %cst_28 {dimension_numbers = #tpu.dot_dimension_numbers<[1], [0], [0], [1], [0, 0, 1, 1], [], []>} : vector<2x25xf32>, vector<25x9xf32>, vector<2x9xf32> -> vector<2x9xf32>
      %c0_29 = arith.constant 0 : index
      %c0_30 = arith.constant 0 : index
      %35 = vector.load %arg9[%c0_29, %c0_30] : memref<1x9xf32, #tpu.memory_space<vmem>>, vector<1x9xf32>
      %36 = vector.broadcast %35 : vector<1x9xf32> to vector<2x9xf32>
      %37 = arith.addf %34, %36 : vector<2x9xf32>
      %cst_31 = arith.constant 0.000000e+00 : f32
      %38 = vector.broadcast %cst_31 : f32 to vector<2x9xf32>
      %39 = arith.maximumf %37, %38 : vector<2x9xf32>
      %c0_32 = arith.constant 0 : index
      %c0_33 = arith.constant 0 : index
      %40 = vector.load %arg10[%c0_32, %c0_33] : memref<9x4xf32, #tpu.memory_space<vmem>>, vector<9x4xf32>
      %cst_34 = arith.constant dense<0.000000e+00> : vector<2x4xf32>
      %41 = tpu.matmul %39, %40, %cst_34 {dimension_numbers = #tpu.dot_dimension_numbers<[1], [0], [0], [1], [0, 0, 1, 1], [], []>} : vector<2x9xf32>, vector<9x4xf32>, vector<2x4xf32> -> vector<2x4xf32>
      %c0_35 = arith.constant 0 : index
      %c0_36 = arith.constant 0 : index
      %42 = vector.load %arg11[%c0_35, %c0_36] : memref<1x4xf32, #tpu.memory_space<vmem>>, vector<1x4xf32>
      %43 = vector.broadcast %42 : vector<1x4xf32> to vector<2x4xf32>
      %44 = arith.addf %41, %43 : vector<2x4xf32>
      %c0_37 = arith.constant 0 : index
      %c0_38 = arith.constant 0 : index
      %45 = vector.load %arg12[%c0_37, %c0_38] : memref<4x9xf32, #tpu.memory_space<vmem>>, vector<4x9xf32>
      %cst_39 = arith.constant dense<0.000000e+00> : vector<2x9xf32>
      %46 = tpu.matmul %44, %45, %cst_39 {dimension_numbers = #tpu.dot_dimension_numbers<[1], [0], [0], [1], [0, 0, 1, 1], [], []>} : vector<2x4xf32>, vector<4x9xf32>, vector<2x9xf32> -> vector<2x9xf32>
      %c0_40 = arith.constant 0 : index
      %c0_41 = arith.constant 0 : index
      %47 = vector.load %arg13[%c0_40, %c0_41] : memref<1x9xf32, #tpu.memory_space<vmem>>, vector<1x9xf32>
      %48 = vector.broadcast %47 : vector<1x9xf32> to vector<2x9xf32>
      %49 = arith.addf %46, %48 : vector<2x9xf32>
      %cst_42 = arith.constant 0.000000e+00 : f32
      %50 = vector.broadcast %cst_42 : f32 to vector<2x9xf32>
      %51 = arith.maximumf %49, %50 : vector<2x9xf32>
      %c0_43 = arith.constant 0 : index
      %c0_44 = arith.constant 0 : index
      %52 = vector.load %arg14[%c0_43, %c0_44] : memref<9x25xf32, #tpu.memory_space<vmem>>, vector<9x25xf32>
      %cst_45 = arith.constant dense<0.000000e+00> : vector<2x25xf32>
      %53 = tpu.matmul %51, %52, %cst_45 {dimension_numbers = #tpu.dot_dimension_numbers<[1], [0], [0], [1], [0, 0, 1, 1], [], []>} : vector<2x9xf32>, vector<9x25xf32>, vector<2x25xf32> -> vector<2x25xf32>
      %c0_46 = arith.constant 0 : index
      %c0_47 = arith.constant 0 : index
      %54 = vector.load %arg15[%c0_46, %c0_47] : memref<1x25xf32, #tpu.memory_space<vmem>>, vector<1x25xf32>
      %55 = vector.broadcast %54 : vector<1x25xf32> to vector<2x25xf32>
      %56 = arith.addf %53, %55 : vector<2x25xf32>
      %cst_48 = arith.constant 0.000000e+00 : f32
      %57 = vector.broadcast %cst_48 : f32 to vector<2x25xf32>
      %58 = arith.maximumf %56, %57 : vector<2x25xf32>
      %c0_49 = arith.constant 0 : index
      %c0_50 = arith.constant 0 : index
      %59 = vector.load %arg16[%c0_49, %c0_50] : memref<25x49xf32, #tpu.memory_space<vmem>>, vector<25x49xf32>
      %cst_51 = arith.constant dense<0.000000e+00> : vector<2x49xf32>
      %60 = tpu.matmul %58, %59, %cst_51 {dimension_numbers = #tpu.dot_dimension_numbers<[1], [0], [0], [1], [0, 0, 1, 1], [], []>} : vector<2x25xf32>, vector<25x49xf32>, vector<2x49xf32> -> vector<2x49xf32>
      %c0_52 = arith.constant 0 : index
      %c0_53 = arith.constant 0 : index
      %61 = vector.load %arg17[%c0_52, %c0_53] : memref<1x49xf32, #tpu.memory_space<vmem>>, vector<1x49xf32>
      %62 = vector.broadcast %61 : vector<1x49xf32> to vector<2x49xf32>
      %63 = arith.addf %60, %62 : vector<2x49xf32>
      %cst_54 = arith.constant 0.000000e+00 : f32
      %64 = vector.broadcast %cst_54 : f32 to vector<2x49xf32>
      %65 = arith.maximumf %63, %64 : vector<2x49xf32>
      %c0_55 = arith.constant 0 : index
      %c0_56 = arith.constant 0 : index
      %66 = vector.load %arg18[%c0_55, %c0_56] : memref<49x100xf32, #tpu.memory_space<vmem>>, vector<49x100xf32>
      %cst_57 = arith.constant dense<0.000000e+00> : vector<2x100xf32>
      %67 = tpu.matmul %65, %66, %cst_57 {dimension_numbers = #tpu.dot_dimension_numbers<[1], [0], [0], [1], [0, 0, 1, 1], [], []>} : vector<2x49xf32>, vector<49x100xf32>, vector<2x100xf32> -> vector<2x100xf32>
      %c0_58 = arith.constant 0 : index
      %c0_59 = arith.constant 0 : index
      %68 = vector.load %arg19[%c0_58, %c0_59] : memref<1x100xf32, #tpu.memory_space<vmem>>, vector<1x100xf32>
      %69 = vector.broadcast %68 : vector<1x100xf32> to vector<2x100xf32>
      %70 = arith.addf %67, %69 : vector<2x100xf32>
      %cst_60 = arith.constant 0.000000e+00 : f32
      %71 = vector.broadcast %cst_60 : f32 to vector<2x100xf32>
      %72 = arith.maximumf %70, %71 : vector<2x100xf32>
      %c0_61 = arith.constant 0 : index
      %c0_62 = arith.constant 0 : index
      %73 = vector.load %arg20[%c0_61, %c0_62] : memref<2x100xf32, #tpu.memory_space<vmem>>, vector<2x100xf32>
      tpu.vector_store %arg20[%c0_61, %c0_62], %72 {strides = array<i32>} : memref<2x100xf32, #tpu.memory_space<vmem>>, vector<2x100xf32>,
    } else {
    }
    return
  }
  func.func @transform_0(%arg0: i32) -> (i32, i32) {
    %c0_i32 = arith.constant 0 : i32
    %c0_i32_0 = arith.constant 0 : i32
    return %c0_i32, %arg0 : i32, i32
  }
  func.func @transform_1(%arg0: i32) -> (i32, i32) {
    %c0_i32 = arith.constant 0 : i32
    %c0_i32_0 = arith.constant 0 : i32
    return %arg0, %c0_i32 : i32, i32
  }
  func.func @transform_2(%arg0: i32) -> (i32, i32) {
    %c0_i32 = arith.constant 0 : i32
    %c0_i32_0 = arith.constant 0 : i32
    %c0_i32_1 = arith.constant 0 : i32
    return %c0_i32, %c0_i32_0 : i32, i32
  }
  func.func @transform_3(%arg0: i32) -> (i32, i32) {
    %c0_i32 = arith.constant 0 : i32
    %c0_i32_0 = arith.constant 0 : i32
    %c0_i32_1 = arith.constant 0 : i32
    return %c0_i32, %c0_i32_0 : i32, i32
  }
  func.func @transform_4(%arg0: i32) -> (i32, i32) {
    %c0_i32 = arith.constant 0 : i32
    %c0_i32_0 = arith.constant 0 : i32
    %c0_i32_1 = arith.constant 0 : i32
    return %c0_i32, %c0_i32_0 : i32, i32
  }
  func.func @transform_5(%arg0: i32) -> (i32, i32) {
    %c0_i32 = arith.constant 0 : i32
    %c0_i32_0 = arith.constant 0 : i32
    %c0_i32_1 = arith.constant 0 : i32
    return %c0_i32, %c0_i32_0 : i32, i32
  }
  func.func @transform_6(%arg0: i32) -> (i32, i32) {
    %c0_i32 = arith.constant 0 : i32
    %c0_i32_0 = arith.constant 0 : i32
    %c0_i32_1 = arith.constant 0 : i32
    return %c0_i32, %c0_i32_0 : i32, i32
  }
  func.func @transform_7(%arg0: i32) -> (i32, i32) {
    %c0_i32 = arith.constant 0 : i32
    %c0_i32_0 = arith.constant 0 : i32
    %c0_i32_1 = arith.constant 0 : i32
    return %c0_i32, %c0_i32_0 : i32, i32
  }
  func.func @transform_8(%arg0: i32) -> (i32, i32) {
    %c0_i32 = arith.constant 0 : i32
    %c0_i32_0 = arith.constant 0 : i32
    %c0_i32_1 = arith.constant 0 : i32
    return %c0_i32, %c0_i32_0 : i32, i32
  }
  func.func @transform_9(%arg0: i32) -> (i32, i32) {
    %c0_i32 = arith.constant 0 : i32
    %c0_i32_0 = arith.constant 0 : i32
    %c0_i32_1 = arith.constant 0 : i32
    return %c0_i32, %c0_i32_0 : i32, i32
  }
  func.func @transform_10(%arg0: i32) -> (i32, i32) {
    %c0_i32 = arith.constant 0 : i32
    %c0_i32_0 = arith.constant 0 : i32
    %c0_i32_1 = arith.constant 0 : i32
    return %c0_i32, %c0_i32_0 : i32, i32
  }
  func.func @transform_11(%arg0: i32) -> (i32, i32) {
    %c0_i32 = arith.constant 0 : i32
    %c0_i32_0 = arith.constant 0 : i32
    %c0_i32_1 = arith.constant 0 : i32
    return %c0_i32, %c0_i32_0 : i32, i32
  }
  func.func @transform_12(%arg0: i32) -> (i32, i32) {
    %c0_i32 = arith.constant 0 : i32
    %c0_i32_0 = arith.constant 0 : i32
    %c0_i32_1 = arith.constant 0 : i32
    return %c0_i32, %c0_i32_0 : i32, i32
  }
  func.func @transform_13(%arg0: i32) -> (i32, i32) {
    %c0_i32 = arith.constant 0 : i32
    %c0_i32_0 = arith.constant 0 : i32
    %c0_i32_1 = arith.constant 0 : i32
    return %c0_i32, %c0_i32_0 : i32, i32
  }
  func.func @transform_14(%arg0: i32) -> (i32, i32) {
    %c0_i32 = arith.constant 0 : i32
    %c0_i32_0 = arith.constant 0 : i32
    %c0_i32_1 = arith.constant 0 : i32
    return %c0_i32, %c0_i32_0 : i32, i32
  }
  func.func @transform_15(%arg0: i32) -> (i32, i32) {
    %c0_i32 = arith.constant 0 : i32
    %c0_i32_0 = arith.constant 0 : i32
    %c0_i32_1 = arith.constant 0 : i32
    return %c0_i32, %c0_i32_0 : i32, i32
  }
  func.func @transform_16(%arg0: i32) -> (i32, i32) {
    %c0_i32 = arith.constant 0 : i32
    %c0_i32_0 = arith.constant 0 : i32
    %c0_i32_1 = arith.constant 0 : i32
    return %c0_i32, %c0_i32_0 : i32, i32
  }
  func.func @transform_17(%arg0: i32) -> (i32, i32) {
    %c0_i32 = arith.constant 0 : i32
    %c0_i32_0 = arith.constant 0 : i32
    %c0_i32_1 = arith.constant 0 : i32
    return %c0_i32, %c0_i32_0 : i32, i32
  }
  func.func @transform_18(%arg0: i32) -> (i32, i32) {
    %c0_i32 = arith.constant 0 : i32
    %c0_i32_0 = arith.constant 0 : i32
    %c0_i32_1 = arith.constant 0 : i32
    return %c0_i32, %c0_i32_0 : i32, i32
  }
  func.func @transform_19(%arg0: i32) -> (i32, i32) {
    %c0_i32 = arith.constant 0 : i32
    %c0_i32_0 = arith.constant 0 : i32
    %c0_i32_1 = arith.constant 0 : i32
    return %c0_i32, %c0_i32_0 : i32, i32
  }
}

</mosaic_0001>

<llo_original>
// kernel: tpu_custom_call.1
$region0: #{tpu_custom_call.1}
  #allocation0 [shape = 'u32[]', space=smem, size = 0x4, offset = 0x4, fixed_abs, tag = 'smem constant byte address 0x4 - core index']
  #allocation1 [shape = 'u32[144,128]{1,0:T(1,128)}', space=vmem, size = 0x12000, scoped, tag = 'internal scratch']
  %s0 = inlined_call_operand.vmem [shape: f32[2,32768], index: 0, kind: input, shape index: {}]
  %s1 = inlined_call_operand.vmem [shape: bf16[32768,100], index: 1, kind: input, shape index: {}]
  %s2 = inlined_call_operand.vmem [shape: f32[1,100], index: 2, kind: input, shape index: {}]
  %s3 = inlined_call_operand.vmem [shape: f32[100,49], index: 3, kind: input, shape index: {}]
  %s4 = inlined_call_operand.vmem [shape: f32[1,49], index: 4, kind: input, shape index: {}]
  %s5 = inlined_call_operand.vmem [shape: f32[49,25], index: 5, kind: input, shape index: {}]
  %s6 = inlined_call_operand.vmem [shape: f32[1,25], index: 6, kind: input, shape index: {}]
  %s7 = inlined_call_operand.vmem [shape: f32[25,9], index: 7, kind: input, shape index: {}]
  %s8 = inlined_call_operand.vmem [shape: f32[1,9], index: 8, kind: input, shape index: {}]
  %s9 = inlined_call_operand.vmem [shape: f32[9,4], index: 9, kind: input, shape index: {}]
  %s10 = inlined_call_operand.vmem [shape: f32[1,4], index: 10, kind: input, shape index: {}]
  %s11 = inlined_call_operand.vmem [shape: f32[4,9], index: 11, kind: input, shape index: {}]
  %s12 = inlined_call_operand.vmem [shape: f32[1,9], index: 12, kind: input, shape index: {}]
  %s13 = inlined_call_operand.vmem [shape: f32[9,25], index: 13, kind: input, shape index: {}]
  %s14 = inlined_call_operand.vmem [shape: f32[1,25], index: 14, kind: input, shape index: {}]
  %s15 = inlined_call_operand.vmem [shape: f32[25,49], index: 15, kind: input, shape index: {}]
  %s16 = inlined_call_operand.vmem [shape: f32[1,49], index: 16, kind: input, shape index: {}]
  %s17 = inlined_call_operand.vmem [shape: f32[49,100], index: 17, kind: input, shape index: {}]
  %s18 = inlined_call_operand.vmem [shape: f32[1,100], index: 18, kind: input, shape index: {}]
  %s19 = inlined_call_operand.hbm [shape: f32[2,100], index: 19, kind: output, shape index: {}]
  %s20 = sld [smem:[#allocation0]]
  $region117: #{tpu_custom_call.1} parent=0
    _
  %s22 = ssub.s32 1, %s20
  %s23 = scalar_select 0, %s22, %s20
  $region1: #{tpu_custom_call.1} parent=0
    #allocation2 [shape = 'u8[1024]{0}', space=vmem, size = 0x400, scoped, tag = 'output window, operand 0, single buffered']
    #allocation3 [shape = 's32[2]{0}', space=sflag, size = 0x8, scoped, tag = 'scoped memory for tpu_custom_call.1']
    %24 = vsyncpa [#allocation3], 0
    loop: start=0, step=1, limit=6
    $region2: #{tpu_custom_call.1} parent=1 // loop_pre_header
      _
    $region3: #{tpu_custom_call.1} parent=1 // loop_header
      %s26 = sphi 0, %s30
      %p27 = scmp.ge.s32.totalorder %s26, 6
      %s36 = sphi 0, %s38
      %s39 = sphi 0, %s36
      %s40 = sphi 0, %s39
      %s56 = sphi 0, %s40
      %s62 = sphi 0, %s64
      %s65 = sphi 0, %s62
      %s66 = sphi 0, %s65
      %s82 = sphi 0, %s66
      %s86 = sphi 0, %s86
      %s88 = sphi 0, %s86
      %s89 = sphi 0, %s88
      %s103 = sphi 0, %s89
      %s107 = sphi 0, %s107
      %s109 = sphi 0, %s107
      %s110 = sphi 0, %s109
      %s124 = sphi 0, %s110
      %s128 = sphi 0, %s128
      %s130 = sphi 0, %s128
      %s131 = sphi 0, %s130
      %s145 = sphi 0, %s131
      %s149 = sphi 0, %s149
      %s151 = sphi 0, %s149
      %s152 = sphi 0, %s151
      %s166 = sphi 0, %s152
      %s170 = sphi 0, %s170
      %s172 = sphi 0, %s170
      %s173 = sphi 0, %s172
      %s187 = sphi 0, %s173
      %s191 = sphi 0, %s191
      %s193 = sphi 0, %s191
      %s194 = sphi 0, %s193
      %s208 = sphi 0, %s194
      %s212 = sphi 0, %s212
      %s214 = sphi 0, %s212
      %s215 = sphi 0, %s214
      %s229 = sphi 0, %s215
      %s233 = sphi 0, %s233
      %s235 = sphi 0, %s233
      %s236 = sphi 0, %s235
      %s250 = sphi 0, %s236
      %s254 = sphi 0, %s254
      %s256 = sphi 0, %s254
      %s257 = sphi 0, %s256
      %s271 = sphi 0, %s257
      %s275 = sphi 0, %s275
      %s277 = sphi 0, %s275
      %s278 = sphi 0, %s277
      %s292 = sphi 0, %s278
      %s296 = sphi 0, %s296
      %s298 = sphi 0, %s296
      %s299 = sphi 0, %s298
      %s313 = sphi 0, %s299
      %s317 = sphi 0, %s317
      %s319 = sphi 0, %s317
      %s320 = sphi 0, %s319
      %s334 = sphi 0, %s320
      %s338 = sphi 0, %s338
      %s340 = sphi 0, %s338
      %s341 = sphi 0, %s340
      %s355 = sphi 0, %s341
      %s359 = sphi 0, %s359
      %s361 = sphi 0, %s359
      %s362 = sphi 0, %s361
      %s376 = sphi 0, %s362
      %s380 = sphi 0, %s380
      %s382 = sphi 0, %s380
      %s383 = sphi 0, %s382
      %s397 = sphi 0, %s383
      %s401 = sphi 0, %s401
      %s403 = sphi 0, %s401
      %s404 = sphi 0, %s403
      %s418 = sphi 0, %s404
      %s422 = sphi 0, %s422
      %s424 = sphi 0, %s422
      %s425 = sphi 0, %s424
      %s439 = sphi 0, %s425
      %s443 = sphi 0, %s443
      %s445 = sphi 0, %s443
      %s446 = sphi 0, %s445
      %s460 = sphi 0, %s446
    $region4: #{tpu_custom_call.1} parent=1 // loop_header_branch
      %29 = sbr.rel (%p27) target = $region8
    $region5: #{tpu_custom_call.1} parent=1 // loop_body
      %s31 = ssub.s32 %s26, 1
      %s32 = ssub.s32 %s26, 2
      %s33 = sadd.s32 %s26, 1
      %s34 = ssub.s32 %s26, %s33
      %p35 = scmp.eq.s32.totalorder %s34, 0
      %s37 = sadd.s32 %s36, 1
      %s38 = scalar_select %p35, %s36, %s37
      %p41 = pneg %p35
      %p42 = scmp.eq.s32.totalorder %s26, 3
      %p43 = por %p41, %p42
      %p44 = scmp.ne.s32.totalorder %s36, %s39
      %p45 = scmp.eq.s32.totalorder %s26, 0
      %p46 = por %p44, %p45
      %p47 = scmp.ne.s32.totalorder %s36, %s39
      %p48 = scmp.eq.s32.totalorder %s31, 3
      %p49 = por %p47, %p48
      %p50 = scmp.ne.s32.totalorder %s39, %s40
      %p51 = scmp.eq.s32.totalorder %s31, 0
      %p52 = por %p50, %p51
      %p53 = scmp.ne.s32.totalorder %s39, %s40
      %p54 = scmp.eq.s32.totalorder %s32, 3
      %p55 = por %p53, %p54
      %p57 = scmp.ne.s32.totalorder %s40, %s56
      %p58 = scmp.eq.s32.totalorder %s32, 0
      %p59 = por %p57, %p58
      %s60 = ssub.s32 %s26, %s33
      %p61 = scmp.eq.s32.totalorder %s60, 0
      %s63 = sadd.s32 %s62, 1
      %s64 = scalar_select %p61, %s62, %s63
      %p67 = pneg %p61
      %p68 = scmp.eq.s32.totalorder %s26, 3
      %p69 = por %p67, %p68
      %p70 = scmp.ne.s32.totalorder %s62, %s65
      %p71 = scmp.eq.s32.totalorder %s26, 0
      %p72 = por %p70, %p71
      %p73 = scmp.ne.s32.totalorder %s62, %s65
      %p74 = scmp.eq.s32.totalorder %s31, 3
      %p75 = por %p73, %p74
      %p76 = scmp.ne.s32.totalorder %s65, %s66
      %p77 = scmp.eq.s32.totalorder %s31, 0
      %p78 = por %p76, %p77
      %p79 = scmp.ne.s32.totalorder %s65, %s66
      %p80 = scmp.eq.s32.totalorder %s32, 3
      %p81 = por %p79, %p80
      %p83 = scmp.ne.s32.totalorder %s66, %s82
      %p84 = scmp.eq.s32.totalorder %s32, 0
      %p85 = por %p83, %p84
      %s87 = sadd.s32 %s86, 1
      %p90 = scmp.eq.s32.totalorder %s26, 3
      %p91 = scmp.ne.s32.totalorder %s86, %s88
      %p92 = scmp.eq.s32.totalorder %s26, 0
      %p93 = por %p91, %p92
      %p94 = scmp.ne.s32.totalorder %s86, %s88
      %p95 = scmp.eq.s32.totalorder %s31, 3
      %p96 = por %p94, %p95
      %p97 = scmp.ne.s32.totalorder %s88, %s89
      %p98 = scmp.eq.s32.totalorder %s31, 0
      %p99 = por %p97, %p98
      %p100 = scmp.ne.s32.totalorder %s88, %s89
      %p101 = scmp.eq.s32.totalorder %s32, 3
      %p102 = por %p100, %p101
      %p104 = scmp.ne.s32.totalorder %s89, %s103
      %p105 = scmp.eq.s32.totalorder %s32, 0
      %p106 = por %p104, %p105
      %s108 = sadd.s32 %s107, 1
      %p111 = scmp.eq.s32.totalorder %s26, 3
      %p112 = scmp.ne.s32.totalorder %s107, %s109
      %p113 = scmp.eq.s32.totalorder %s26, 0
      %p114 = por %p112, %p113
      %p115 = scmp.ne.s32.totalorder %s107, %s109
      %p116 = scmp.eq.s32.totalorder %s31, 3
      %p117 = por %p115, %p116
      %p118 = scmp.ne.s32.totalorder %s109, %s110
      %p119 = scmp.eq.s32.totalorder %s31, 0
      %p120 = por %p118, %p119
      %p121 = scmp.ne.s32.totalorder %s109, %s110
      %p122 = scmp.eq.s32.totalorder %s32, 3
      %p123 = por %p121, %p122
      %p125 = scmp.ne.s32.totalorder %s110, %s124
      %p126 = scmp.eq.s32.totalorder %s32, 0
      %p127 = por %p125, %p126
      %s129 = sadd.s32 %s128, 1
      %p132 = scmp.eq.s32.totalorder %s26, 3
      %p133 = scmp.ne.s32.totalorder %s128, %s130
      %p134 = scmp.eq.s32.totalorder %s26, 0
      %p135 = por %p133, %p134
      %p136 = scmp.ne.s32.totalorder %s128, %s130
      %p137 = scmp.eq.s32.totalorder %s31, 3
      %p138 = por %p136, %p137
      %p139 = scmp.ne.s32.totalorder %s130, %s131
      %p140 = scmp.eq.s32.totalorder %s31, 0
      %p141 = por %p139, %p140
      %p142 = scmp.ne.s32.totalorder %s130, %s131
      %p143 = scmp.eq.s32.totalorder %s32, 3
      %p144 = por %p142, %p143
      %p146 = scmp.ne.s32.totalorder %s131, %s145
      %p147 = scmp.eq.s32.totalorder %s32, 0
      %p148 = por %p146, %p147
      %s150 = sadd.s32 %s149, 1
      %p153 = scmp.eq.s32.totalorder %s26, 3
      %p154 = scmp.ne.s32.totalorder %s149, %s151
      %p155 = scmp.eq.s32.totalorder %s26, 0
      %p156 = por %p154, %p155
      %p157 = scmp.ne.s32.totalorder %s149, %s151
      %p158 = scmp.eq.s32.totalorder %s31, 3
      %p159 = por %p157, %p158
      %p160 = scmp.ne.s32.totalorder %s151, %s152
      %p161 = scmp.eq.s32.totalorder %s31, 0
      %p162 = por %p160, %p161
      %p163 = scmp.ne.s32.totalorder %s151, %s152
      %p164 = scmp.eq.s32.totalorder %s32, 3
      %p165 = por %p163, %p164
      %p167 = scmp.ne.s32.totalorder %s152, %s166
      %p168 = scmp.eq.s32.totalorder %s32, 0
      %p169 = por %p167, %p168
      %s171 = sadd.s32 %s170, 1
      %p174 = scmp.eq.s32.totalorder %s26, 3
      %p175 = scmp.ne.s32.totalorder %s170, %s172
      %p176 = scmp.eq.s32.totalorder %s26, 0
      %p177 = por %p175, %p176
      %p178 = scmp.ne.s32.totalorder %s170, %s172
      %p179 = scmp.eq.s32.totalorder %s31, 3
      %p180 = por %p178, %p179
      %p181 = scmp.ne.s32.totalorder %s172, %s173
      %p182 = scmp.eq.s32.totalorder %s31, 0
      %p183 = por %p181, %p182
      %p184 = scmp.ne.s32.totalorder %s172, %s173
      %p185 = scmp.eq.s32.totalorder %s32, 3
      %p186 = por %p184, %p185
      %p188 = scmp.ne.s32.totalorder %s173, %s187
      %p189 = scmp.eq.s32.totalorder %s32, 0
      %p190 = por %p188, %p189
      %s192 = sadd.s32 %s191, 1
      %p195 = scmp.eq.s32.totalorder %s26, 3
      %p196 = scmp.ne.s32.totalorder %s191, %s193
      %p197 = scmp.eq.s32.totalorder %s26, 0
      %p198 = por %p196, %p197
      %p199 = scmp.ne.s32.totalorder %s191, %s193
      %p200 = scmp.eq.s32.totalorder %s31, 3
      %p201 = por %p199, %p200
      %p202 = scmp.ne.s32.totalorder %s193, %s194
      %p203 = scmp.eq.s32.totalorder %s31, 0
      %p204 = por %p202, %p203
      %p205 = scmp.ne.s32.totalorder %s193, %s194
      %p206 = scmp.eq.s32.totalorder %s32, 3
      %p207 = por %p205, %p206
      %p209 = scmp.ne.s32.totalorder %s194, %s208
      %p210 = scmp.eq.s32.totalorder %s32, 0
      %p211 = por %p209, %p210
      %s213 = sadd.s32 %s212, 1
      %p216 = scmp.eq.s32.totalorder %s26, 3
      %p217 = scmp.ne.s32.totalorder %s212, %s214
      %p218 = scmp.eq.s32.totalorder %s26, 0
      %p219 = por %p217, %p218
      %p220 = scmp.ne.s32.totalorder %s212, %s214
      %p221 = scmp.eq.s32.totalorder %s31, 3
      %p222 = por %p220, %p221
      %p223 = scmp.ne.s32.totalorder %s214, %s215
      %p224 = scmp.eq.s32.totalorder %s31, 0
      %p225 = por %p223, %p224
      %p226 = scmp.ne.s32.totalorder %s214, %s215
      %p227 = scmp.eq.s32.totalorder %s32, 3
      %p228 = por %p226, %p227
      %p230 = scmp.ne.s32.totalorder %s215, %s229
      %p231 = scmp.eq.s32.totalorder %s32, 0
      %p232 = por %p230, %p231
      %s234 = sadd.s32 %s233, 1
      %p237 = scmp.eq.s32.totalorder %s26, 3
      %p238 = scmp.ne.s32.totalorder %s233, %s235
      %p239 = scmp.eq.s32.totalorder %s26, 0
      %p240 = por %p238, %p239
      %p241 = scmp.ne.s32.totalorder %s233, %s235
      %p242 = scmp.eq.s32.totalorder %s31, 3
      %p243 = por %p241, %p242
      %p244 = scmp.ne.s32.totalorder %s235, %s236
      %p245 = scmp.eq.s32.totalorder %s31, 0
      %p246 = por %p244, %p245
      %p247 = scmp.ne.s32.totalorder %s235, %s236
      %p248 = scmp.eq.s32.totalorder %s32, 3
      %p249 = por %p247, %p248
      %p251 = scmp.ne.s32.totalorder %s236, %s250
      %p252 = scmp.eq.s32.totalorder %s32, 0
      %p253 = por %p251, %p252
      %s255 = sadd.s32 %s254, 1
      %p258 = scmp.eq.s32.totalorder %s26, 3
      %p259 = scmp.ne.s32.totalorder %s254, %s256
      %p260 = scmp.eq.s32.totalorder %s26, 0
      %p261 = por %p259, %p260
      %p262 = scmp.ne.s32.totalorder %s254, %s256
      %p263 = scmp.eq.s32.totalorder %s31, 3
      %p264 = por %p262, %p263
      %p265 = scmp.ne.s32.totalorder %s256, %s257
      %p266 = scmp.eq.s32.totalorder %s31, 0
      %p267 = por %p265, %p266
      %p268 = scmp.ne.s32.totalorder %s256, %s257
      %p269 = scmp.eq.s32.totalorder %s32, 3
      %p270 = por %p268, %p269
      %p272 = scmp.ne.s32.totalorder %s257, %s271
      %p273 = scmp.eq.s32.totalorder %s32, 0
      %p274 = por %p272, %p273
      %s276 = sadd.s32 %s275, 1
      %p279 = scmp.eq.s32.totalorder %s26, 3
      %p280 = scmp.ne.s32.totalorder %s275, %s277
      %p281 = scmp.eq.s32.totalorder %s26, 0
      %p282 = por %p280, %p281
      %p283 = scmp.ne.s32.totalorder %s275, %s277
      %p284 = scmp.eq.s32.totalorder %s31, 3
      %p285 = por %p283, %p284
      %p286 = scmp.ne.s32.totalorder %s277, %s278
      %p287 = scmp.eq.s32.totalorder %s31, 0
      %p288 = por %p286, %p287
      %p289 = scmp.ne.s32.totalorder %s277, %s278
      %p290 = scmp.eq.s32.totalorder %s32, 3
      %p291 = por %p289, %p290
      %p293 = scmp.ne.s32.totalorder %s278, %s292
      %p294 = scmp.eq.s32.totalorder %s32, 0
      %p295 = por %p293, %p294
      %s297 = sadd.s32 %s296, 1
      %p300 = scmp.eq.s32.totalorder %s26, 3
      %p301 = scmp.ne.s32.totalorder %s296, %s298
      %p302 = scmp.eq.s32.totalorder %s26, 0
      %p303 = por %p301, %p302
      %p304 = scmp.ne.s32.totalorder %s296, %s298
      %p305 = scmp.eq.s32.totalorder %s31, 3
      %p306 = por %p304, %p305
      %p307 = scmp.ne.s32.totalorder %s298, %s299
      %p308 = scmp.eq.s32.totalorder %s31, 0
      %p309 = por %p307, %p308
      %p310 = scmp.ne.s32.totalorder %s298, %s299
      %p311 = scmp.eq.s32.totalorder %s32, 3
      %p312 = por %p310, %p311
      %p314 = scmp.ne.s32.totalorder %s299, %s313
      %p315 = scmp.eq.s32.totalorder %s32, 0
      %p316 = por %p314, %p315
      %s318 = sadd.s32 %s317, 1
      %p321 = scmp.eq.s32.totalorder %s26, 3
      %p322 = scmp.ne.s32.totalorder %s317, %s319
      %p323 = scmp.eq.s32.totalorder %s26, 0
      %p324 = por %p322, %p323
      %p325 = scmp.ne.s32.totalorder %s317, %s319
      %p326 = scmp.eq.s32.totalorder %s31, 3
      %p327 = por %p325, %p326
      %p328 = scmp.ne.s32.totalorder %s319, %s320
      %p329 = scmp.eq.s32.totalorder %s31, 0
      %p330 = por %p328, %p329
      %p331 = scmp.ne.s32.totalorder %s319, %s320
      %p332 = scmp.eq.s32.totalorder %s32, 3
      %p333 = por %p331, %p332
      %p335 = scmp.ne.s32.totalorder %s320, %s334
      %p336 = scmp.eq.s32.totalorder %s32, 0
      %p337 = por %p335, %p336
      %s339 = sadd.s32 %s338, 1
      %p342 = scmp.eq.s32.totalorder %s26, 3
      %p343 = scmp.ne.s32.totalorder %s338, %s340
      %p344 = scmp.eq.s32.totalorder %s26, 0
      %p345 = por %p343, %p344
      %p346 = scmp.ne.s32.totalorder %s338, %s340
      %p347 = scmp.eq.s32.totalorder %s31, 3
      %p348 = por %p346, %p347
      %p349 = scmp.ne.s32.totalorder %s340, %s341
      %p350 = scmp.eq.s32.totalorder %s31, 0
      %p351 = por %p349, %p350
      %p352 = scmp.ne.s32.totalorder %s340, %s341
      %p353 = scmp.eq.s32.totalorder %s32, 3
      %p354 = por %p352, %p353
      %p356 = scmp.ne.s32.totalorder %s341, %s355
      %p357 = scmp.eq.s32.totalorder %s32, 0
      %p358 = por %p356, %p357
      %s360 = sadd.s32 %s359, 1
      %p363 = scmp.eq.s32.totalorder %s26, 3
      %p364 = scmp.ne.s32.totalorder %s359, %s361
      %p365 = scmp.eq.s32.totalorder %s26, 0
      %p366 = por %p364, %p365
      %p367 = scmp.ne.s32.totalorder %s359, %s361
      %p368 = scmp.eq.s32.totalorder %s31, 3
      %p369 = por %p367, %p368
      %p370 = scmp.ne.s32.totalorder %s361, %s362
      %p371 = scmp.eq.s32.totalorder %s31, 0
      %p372 = por %p370, %p371
      %p373 = scmp.ne.s32.totalorder %s361, %s362
      %p374 = scmp.eq.s32.totalorder %s32, 3
      %p375 = por %p373, %p374
      %p377 = scmp.ne.s32.totalorder %s362, %s376
      %p378 = scmp.eq.s32.totalorder %s32, 0
      %p379 = por %p377, %p378
      %s381 = sadd.s32 %s380, 1
      %p384 = scmp.eq.s32.totalorder %s26, 3
      %p385 = scmp.ne.s32.totalorder %s380, %s382
      %p386 = scmp.eq.s32.totalorder %s26, 0
      %p387 = por %p385, %p386
      %p388 = scmp.ne.s32.totalorder %s380, %s382
      %p389 = scmp.eq.s32.totalorder %s31, 3
      %p390 = por %p388, %p389
      %p391 = scmp.ne.s32.totalorder %s382, %s383
      %p392 = scmp.eq.s32.totalorder %s31, 0
      %p393 = por %p391, %p392
      %p394 = scmp.ne.s32.totalorder %s382, %s383
      %p395 = scmp.eq.s32.totalorder %s32, 3
      %p396 = por %p394, %p395
      %p398 = scmp.ne.s32.totalorder %s383, %s397
      %p399 = scmp.eq.s32.totalorder %s32, 0
      %p400 = por %p398, %p399
      %s402 = sadd.s32 %s401, 1
      %p405 = scmp.eq.s32.totalorder %s26, 3
      %p406 = scmp.ne.s32.totalorder %s401, %s403
      %p407 = scmp.eq.s32.totalorder %s26, 0
      %p408 = por %p406, %p407
      %p409 = scmp.ne.s32.totalorder %s401, %s403
      %p410 = scmp.eq.s32.totalorder %s31, 3
      %p411 = por %p409, %p410
      %p412 = scmp.ne.s32.totalorder %s403, %s404
      %p413 = scmp.eq.s32.totalorder %s31, 0
      %p414 = por %p412, %p413
      %p415 = scmp.ne.s32.totalorder %s403, %s404
      %p416 = scmp.eq.s32.totalorder %s32, 3
      %p417 = por %p415, %p416
      %p419 = scmp.ne.s32.totalorder %s404, %s418
      %p420 = scmp.eq.s32.totalorder %s32, 0
      %p421 = por %p419, %p420
      %s423 = sadd.s32 %s422, 1
      %p426 = scmp.eq.s32.totalorder %s26, 3
      %p427 = scmp.ne.s32.totalorder %s422, %s424
      %p428 = scmp.eq.s32.totalorder %s26, 0
      %p429 = por %p427, %p428
      %p430 = scmp.ne.s32.totalorder %s422, %s424
      %p431 = scmp.eq.s32.totalorder %s31, 3
      %p432 = por %p430, %p431
      %p433 = scmp.ne.s32.totalorder %s424, %s425
      %p434 = scmp.eq.s32.totalorder %s31, 0
      %p435 = por %p433, %p434
      %p436 = scmp.ne.s32.totalorder %s424, %s425
      %p437 = scmp.eq.s32.totalorder %s32, 3
      %p438 = por %p436, %p437
      %p440 = scmp.ne.s32.totalorder %s425, %s439
      %p441 = scmp.eq.s32.totalorder %s32, 0
      %p442 = por %p440, %p441
      %s444 = sadd.s32 %s443, 1
      %p447 = scmp.eq.s32.totalorder %s26, 3
      %p448 = scmp.ne.s32.totalorder %s443, %s445
      %p449 = scmp.eq.s32.totalorder %s26, 0
      %p450 = por %p448, %p449
      %p451 = scmp.ne.s32.totalorder %s443, %s445
      %p452 = scmp.eq.s32.totalorder %s31, 3
      %p453 = por %p451, %p452
      %p454 = scmp.ne.s32.totalorder %s445, %s446
      %p455 = scmp.eq.s32.totalorder %s31, 0
      %p456 = por %p454, %p455
      %p457 = scmp.ne.s32.totalorder %s445, %s446
      %p458 = scmp.eq.s32.totalorder %s32, 3
      %p459 = por %p457, %p458
      %p461 = scmp.ne.s32.totalorder %s446, %s460
      %p462 = scmp.eq.s32.totalorder %s32, 0
      %p463 = por %p461, %p462
      %p464 = scmp.le.s32.totalorder 1, %s26
      %p465 = scmp.lt.s32.totalorder %s26, 5
      %p466 = pnand %p464, %p465
      %p467 = pneg %p466
      // Predicated region
      $region9: #{tpu_custom_call.1} parent=5 // pred_check
        _
      $region10: #{tpu_custom_call.1} parent=5 // pred_check_branch
        %469 = sbr.rel (%p466) target = $region12
      $region11: #{tpu_custom_call.1} parent=5 // pred_region
        %s470 = ssub.s32 %s26, 1
        // Predicated region
        $region13: #{tpu_custom_call.1} parent=11 // pred_check
          %p471 = pneg %p99
        $region14: #{tpu_custom_call.1} parent=11 // pred_check_branch
          %473 = sbr.rel (%p471) target = $region16
        $region15: #{tpu_custom_call.1} parent=11 // pred_region
          _
        $region16: #{tpu_custom_call.1} parent=11 // pred_fallthru
          _
        // Predicated region
        $region17: #{tpu_custom_call.1} parent=11 // pred_check
          %p474 = pneg %p120
        $region18: #{tpu_custom_call.1} parent=11 // pred_check_branch
          %476 = sbr.rel (%p474) target = $region20
        $region19: #{tpu_custom_call.1} parent=11 // pred_region
          _
        $region20: #{tpu_custom_call.1} parent=11 // pred_fallthru
          _
        // Predicated region
        $region21: #{tpu_custom_call.1} parent=11 // pred_check
          %p477 = pneg %p141
        $region22: #{tpu_custom_call.1} parent=11 // pred_check_branch
          %479 = sbr.rel (%p477) target = $region24
        $region23: #{tpu_custom_call.1} parent=11 // pred_region
          _
        $region24: #{tpu_custom_call.1} parent=11 // pred_fallthru
          _
        // Predicated region
        $region25: #{tpu_custom_call.1} parent=11 // pred_check
          %p480 = pneg %p162
        $region26: #{tpu_custom_call.1} parent=11 // pred_check_branch
          %482 = sbr.rel (%p480) target = $region28
        $region27: #{tpu_custom_call.1} parent=11 // pred_region
          _
        $region28: #{tpu_custom_call.1} parent=11 // pred_fallthru
          _
        // Predicated region
        $region29: #{tpu_custom_call.1} parent=11 // pred_check
          %p483 = pneg %p183
        $region30: #{tpu_custom_call.1} parent=11 // pred_check_branch
          %485 = sbr.rel (%p483) target = $region32
        $region31: #{tpu_custom_call.1} parent=11 // pred_region
          _
        $region32: #{tpu_custom_call.1} parent=11 // pred_fallthru
          _
        // Predicated region
        $region33: #{tpu_custom_call.1} parent=11 // pred_check
          %p486 = pneg %p204
        $region34: #{tpu_custom_call.1} parent=11 // pred_check_branch
          %488 = sbr.rel (%p486) target = $region36
        $region35: #{tpu_custom_call.1} parent=11 // pred_region
          _
        $region36: #{tpu_custom_call.1} parent=11 // pred_fallthru
          _
        // Predicated region
        $region37: #{tpu_custom_call.1} parent=11 // pred_check
          %p489 = pneg %p225
        $region38: #{tpu_custom_call.1} parent=11 // pred_check_branch
          %491 = sbr.rel (%p489) target = $region40
        $region39: #{tpu_custom_call.1} parent=11 // pred_region
          _
        $region40: #{tpu_custom_call.1} parent=11 // pred_fallthru
          _
        // Predicated region
        $region41: #{tpu_custom_call.1} parent=11 // pred_check
          %p492 = pneg %p246
        $region42: #{tpu_custom_call.1} parent=11 // pred_check_branch
          %494 = sbr.rel (%p492) target = $region44
        $region43: #{tpu_custom_call.1} parent=11 // pred_region
          _
        $region44: #{tpu_custom_call.1} parent=11 // pred_fallthru
          _
        // Predicated region
        $region45: #{tpu_custom_call.1} parent=11 // pred_check
          %p495 = pneg %p267
        $region46: #{tpu_custom_call.1} parent=11 // pred_check_branch
          %497 = sbr.rel (%p495) target = $region48
        $region47: #{tpu_custom_call.1} parent=11 // pred_region
          _
        $region48: #{tpu_custom_call.1} parent=11 // pred_fallthru
          _
        // Predicated region
        $region49: #{tpu_custom_call.1} parent=11 // pred_check
          %p498 = pneg %p288
        $region50: #{tpu_custom_call.1} parent=11 // pred_check_branch
          %500 = sbr.rel (%p498) target = $region52
        $region51: #{tpu_custom_call.1} parent=11 // pred_region
          _
        $region52: #{tpu_custom_call.1} parent=11 // pred_fallthru
          _
        // Predicated region
        $region53: #{tpu_custom_call.1} parent=11 // pred_check
          %p501 = pneg %p309
        $region54: #{tpu_custom_call.1} parent=11 // pred_check_branch
          %503 = sbr.rel (%p501) target = $region56
        $region55: #{tpu_custom_call.1} parent=11 // pred_region
          _
        $region56: #{tpu_custom_call.1} parent=11 // pred_fallthru
          _
        // Predicated region
        $region57: #{tpu_custom_call.1} parent=11 // pred_check
          %p504 = pneg %p330
        $region58: #{tpu_custom_call.1} parent=11 // pred_check_branch
          %506 = sbr.rel (%p504) target = $region60
        $region59: #{tpu_custom_call.1} parent=11 // pred_region
          _
        $region60: #{tpu_custom_call.1} parent=11 // pred_fallthru
          _
        // Predicated region
        $region61: #{tpu_custom_call.1} parent=11 // pred_check
          %p507 = pneg %p351
        $region62: #{tpu_custom_call.1} parent=11 // pred_check_branch
          %509 = sbr.rel (%p507) target = $region64
        $region63: #{tpu_custom_call.1} parent=11 // pred_region
          _
        $region64: #{tpu_custom_call.1} parent=11 // pred_fallthru
          _
        // Predicated region
        $region65: #{tpu_custom_call.1} parent=11 // pred_check
          %p510 = pneg %p372
        $region66: #{tpu_custom_call.1} parent=11 // pred_check_branch
          %512 = sbr.rel (%p510) target = $region68
        $region67: #{tpu_custom_call.1} parent=11 // pred_region
          _
        $region68: #{tpu_custom_call.1} parent=11 // pred_fallthru
          _
        // Predicated region
        $region69: #{tpu_custom_call.1} parent=11 // pred_check
          %p513 = pneg %p393
        $region70: #{tpu_custom_call.1} parent=11 // pred_check_branch
          %515 = sbr.rel (%p513) target = $region72
        $region71: #{tpu_custom_call.1} parent=11 // pred_region
          _
        $region72: #{tpu_custom_call.1} parent=11 // pred_fallthru
          _
        // Predicated region
        $region73: #{tpu_custom_call.1} parent=11 // pred_check
          %p516 = pneg %p414
        $region74: #{tpu_custom_call.1} parent=11 // pred_check_branch
          %518 = sbr.rel (%p516) target = $region76
        $region75: #{tpu_custom_call.1} parent=11 // pred_region
          _
        $region76: #{tpu_custom_call.1} parent=11 // pred_fallthru
          _
        // Predicated region
        $region77: #{tpu_custom_call.1} parent=11 // pred_check
          %p519 = pneg %p435
        $region78: #{tpu_custom_call.1} parent=11 // pred_check_branch
          %521 = sbr.rel (%p519) target = $region80
        $region79: #{tpu_custom_call.1} parent=11 // pred_region
          _
        $region80: #{tpu_custom_call.1} parent=11 // pred_fallthru
          _
      $region12: #{tpu_custom_call.1} parent=5 // pred_fallthru
        _
      %p522 = scmp.lt.s32.totalorder %s26, 4
      // Predicated region
      $region81: #{tpu_custom_call.1} parent=5 // pred_check
        %p523 = pneg %p522
      $region82: #{tpu_custom_call.1} parent=5 // pred_check_branch
        %525 = sbr.rel (%p523) target = $region84
      $region83: #{tpu_custom_call.1} parent=5 // pred_region
        // Predicated region
        $region85: #{tpu_custom_call.1} parent=83 // pred_check
          %p526 = pneg %p46
        $region86: #{tpu_custom_call.1} parent=83 // pred_check_branch
          %528 = sbr.rel (%p526) target = $region88
        $region87: #{tpu_custom_call.1} parent=83 // pred_region
          %s529 = smul.u32 64, %s26
          %p530 = scmp.lt.s32.totalorder %s529, 255
          %s531 = scalar_select %p530, %s529, 255
          %s532 = smul.addr %s531, 2
          %s533 = scalar_lea.vmem %s0, %s532
          %s534 = smul.u32 64, %s26
        $region88: #{tpu_custom_call.1} parent=83 // pred_fallthru
          _
        // Predicated region
        $region89: #{tpu_custom_call.1} parent=83 // pred_check
          %p535 = pneg %p72
        $region90: #{tpu_custom_call.1} parent=83 // pred_check_branch
          %537 = sbr.rel (%p535) target = $region92
        $region91: #{tpu_custom_call.1} parent=83 // pred_region
          %s538 = smul.u32 1024, %s26
          %p539 = scmp.lt.s32.totalorder %s538, 4095
          %s540 = scalar_select %p539, %s538, 4095
          %s541 = smul.addr %s540, 4
          %s542 = scalar_lea.vmem %s1, %s541
          %s543 = smul.u32 1024, %s26
        $region92: #{tpu_custom_call.1} parent=83 // pred_fallthru
          _
      $region84: #{tpu_custom_call.1} parent=5 // pred_fallthru
        _
      %p544 = scmp.le.s32.totalorder 1, %s26
      %p545 = scmp.lt.s32.totalorder %s26, 5
      %p546 = pnand %p544, %p545
      %p547 = pneg %p546
      // Predicated region
      $region93: #{tpu_custom_call.1} parent=5 // pred_check
        _
      $region94: #{tpu_custom_call.1} parent=5 // pred_check_branch
        %549 = sbr.rel (%p546) target = $region96
      $region95: #{tpu_custom_call.1} parent=5 // pred_region
        %s550 = ssub.s32 %s26, 1
        %s551 = smul.u32 64, %s31
        %p552 = scmp.lt.s32.totalorder %s551, 255
        %s553 = scalar_select %p552, %s551, 255
        %s554 = smul.addr %s553, 2
        %s555 = scalar_lea.vmem %s0, %s554
        %p556 = pneg %p52
        %p557 = pneg %p49
        %s558 = smul.u32 1024, %s31
        %p559 = scmp.lt.s32.totalorder %s558, 4095
        %s560 = scalar_select %p559, %s558, 4095
        %s561 = smul.addr %s560, 4
        %s562 = scalar_lea.vmem %s1, %s561
        %p563 = pneg %p78
        %p564 = pneg %p75
        %p565 = pneg %p99
        %p566 = pneg %p96
        %p567 = pneg %p120
        %p568 = pneg %p117
        %p569 = pneg %p141
        %p570 = pneg %p138
        %p571 = pneg %p162
        %p572 = pneg %p159
        %p573 = pneg %p183
        %p574 = pneg %p180
        %p575 = pneg %p204
        %p576 = pneg %p201
        %p577 = pneg %p225
        %p578 = pneg %p222
        %p579 = pneg %p246
        %p580 = pneg %p243
        %p581 = pneg %p267
        %p582 = pneg %p264
        %p583 = pneg %p288
        %p584 = pneg %p285
        %p585 = pneg %p309
        %p586 = pneg %p306
        %p587 = pneg %p330
        %p588 = pneg %p327
        %p589 = pneg %p351
        %p590 = pneg %p348
        %p591 = pneg %p372
        %p592 = pneg %p369
        %p593 = pneg %p393
        %p594 = pneg %p390
        %p595 = pneg %p414
        %p596 = pneg %p411
        %p597 = pneg %p435
        %p598 = pneg %p432
        %p599 = pneg %p456
        %p600 = pneg %p453
        %s601 = smul.u32 64, %s31
        %p602 = scmp.lt.s32.totalorder %s601, 255
        %s603 = scalar_select %p602, %s601, 255
        %s604 = smul.addr %s603, 2
        %s605 = scalar_lea.vmem %s0, %s604
        %s606 = smul.u32 64, %s31
        %s607 = smul.u32 1024, %s31
        %p608 = scmp.lt.s32.totalorder %s607, 4095
        %s609 = scalar_select %p608, %s607, 4095
        %s610 = smul.addr %s609, 4
        %s611 = scalar_lea.vmem %s1, %s610
        %s612 = smul.u32 1024, %s31
        %p614 = scmp.eq.s32.totalorder %s31, 0
        // Predicated region
        $region97: #{tpu_custom_call.1} parent=95 // pred_check
          %p615 = pneg %p614
        $region98: #{tpu_custom_call.1} parent=95 // pred_check_branch
          %617 = sbr.rel (%p615) target = $region100
        $region99: #{tpu_custom_call.1} parent=95 // pred_region
          %vm618 = vcmask 812032
          %619 = vst.msk [vmem:[#allocation2] sm:$0x3] %vm618, 0.0
        $region100: #{tpu_custom_call.1} parent=95 // pred_fallthru
          _
        %v620 = vld [vmem:[#allocation2] sm:$0x3]
        %v621 = vld [vmem:[%s605] sm:$0xff]
        %v622 = vld [vmem:[%s605 + $0x8] sm:$0xff]
        %v623 = vld [vmem:[%s605 + $0x10] sm:$0xff]
        %v624 = vld [vmem:[%s605 + $0x18] sm:$0xff]
        %v625 = vld [vmem:[%s605 + $0x20] sm:$0xff]
        %v626 = vld [vmem:[%s605 + $0x28] sm:$0xff]
        %v627 = vld [vmem:[%s605 + $0x30] sm:$0xff]
        %v628 = vld [vmem:[%s605 + $0x38] sm:$0xff]
        %v629 = vld [vmem:[%s605 + $0x40] sm:$0xff]
        %v630 = vld [vmem:[%s605 + $0x48] sm:$0xff]
        %v631 = vld [vmem:[%s605 + $0x50] sm:$0xff]
        %v632 = vld [vmem:[%s605 + $0x58] sm:$0xff]
        %v633 = vld [vmem:[%s605 + $0x60] sm:$0xff]
        %v634 = vld [vmem:[%s605 + $0x68] sm:$0xff]
        %v635 = vld [vmem:[%s605 + $0x70] sm:$0xff]
        %v636 = vld [vmem:[%s605 + $0x78] sm:$0xff]
        %v653 = vcombine.high %v621, %v621
        %v655 = vunpack.c.l.s4 1983009808
        %v656 = vunpack.c.0.s8 %v655
        %v657 = vlaneseq
        %v658 = vshrl.u32 %v657, 7
        %v659 = vsub.s32 %v656, %v658
        %v660 = vrot.slane %v621, %v659
        %v662 = vunpack.c.l.s4 1983009808
        %v663 = vunpack.c.0.s8 %v662
        %v664 = vlaneseq
        %v665 = vshrl.u32 %v664, 7
        %v666 = vsub.s32 %v663, %v665
        %v667 = vrot.slane %v653, %v666
        %v668 = vcombine.high %v660, %v660
        %v669 = vcombine.high %v667, %v667
        %v670 = vcombine.high %v622, %v622
        %v672 = vunpack.c.l.s4 1983009808
        %v673 = vunpack.c.0.s8 %v672
        %v674 = vlaneseq
        %v675 = vshrl.u32 %v674, 7
        %v676 = vsub.s32 %v673, %v675
        %v677 = vrot.slane %v622, %v676
        %v679 = vunpack.c.l.s4 1983009808
        %v680 = vunpack.c.0.s8 %v679
        %v681 = vlaneseq
        %v682 = vshrl.u32 %v681, 7
        %v683 = vsub.s32 %v680, %v682
        %v684 = vrot.slane %v670, %v683
        %v685 = vcombine.high %v677, %v677
        %v686 = vcombine.high %v684, %v684
        %v687 = vcombine.high %v623, %v623
        %v689 = vunpack.c.l.s4 1983009808
        %v690 = vunpack.c.0.s8 %v689
        %v691 = vlaneseq
        %v692 = vshrl.u32 %v691, 7
        %v693 = vsub.s32 %v690, %v692
        %v694 = vrot.slane %v623, %v693
        %v696 = vunpack.c.l.s4 1983009808
        %v697 = vunpack.c.0.s8 %v696
        %v698 = vlaneseq
        %v699 = vshrl.u32 %v698, 7
        %v700 = vsub.s32 %v697, %v699
        %v701 = vrot.slane %v687, %v700
        %v702 = vcombine.high %v694, %v694
        %v703 = vcombine.high %v701, %v701
        %v704 = vcombine.high %v624, %v624
        %v706 = vunpack.c.l.s4 1983009808
        %v707 = vunpack.c.0.s8 %v706
        %v708 = vlaneseq
        %v709 = vshrl.u32 %v708, 7
        %v710 = vsub.s32 %v707, %v709
        %v711 = vrot.slane %v624, %v710
        %v713 = vunpack.c.l.s4 1983009808
        %v714 = vunpack.c.0.s8 %v713
        %v715 = vlaneseq
        %v716 = vshrl.u32 %v715, 7
        %v717 = vsub.s32 %v714, %v716
        %v718 = vrot.slane %v704, %v717
        %v719 = vcombine.high %v711, %v711
        %v720 = vcombine.high %v718, %v718
        %v721 = vcombine.high %v625, %v625
        %v723 = vunpack.c.l.s4 1983009808
        %v724 = vunpack.c.0.s8 %v723
        %v725 = vlaneseq
        %v726 = vshrl.u32 %v725, 7
        %v727 = vsub.s32 %v724, %v726
        %v728 = vrot.slane %v625, %v727
        %v730 = vunpack.c.l.s4 1983009808
        %v731 = vunpack.c.0.s8 %v730
        %v732 = vlaneseq
        %v733 = vshrl.u32 %v732, 7
        %v734 = vsub.s32 %v731, %v733
        %v735 = vrot.slane %v721, %v734
        %v736 = vcombine.high %v728, %v728
        %v737 = vcombine.high %v735, %v735
        %v738 = vcombine.high %v626, %v626
        %v740 = vunpack.c.l.s4 1983009808
        %v741 = vunpack.c.0.s8 %v740
        %v742 = vlaneseq
        %v743 = vshrl.u32 %v742, 7
        %v744 = vsub.s32 %v741, %v743
        %v745 = vrot.slane %v626, %v744
        %v747 = vunpack.c.l.s4 1983009808
        %v748 = vunpack.c.0.s8 %v747
        %v749 = vlaneseq
        %v750 = vshrl.u32 %v749, 7
        %v751 = vsub.s32 %v748, %v750
        %v752 = vrot.slane %v738, %v751
        %v753 = vcombine.high %v745, %v745
        %v754 = vcombine.high %v752, %v752
        %v755 = vcombine.high %v627, %v627
        %v757 = vunpack.c.l.s4 1983009808
        %v758 = vunpack.c.0.s8 %v757
        %v759 = vlaneseq
        %v760 = vshrl.u32 %v759, 7
        %v761 = vsub.s32 %v758, %v760
        %v762 = vrot.slane %v627, %v761
        %v764 = vunpack.c.l.s4 1983009808
        %v765 = vunpack.c.0.s8 %v764
        %v766 = vlaneseq
        %v767 = vshrl.u32 %v766, 7
        %v768 = vsub.s32 %v765, %v767
        %v769 = vrot.slane %v755, %v768
        %v770 = vcombine.high %v762, %v762
        %v771 = vcombine.high %v769, %v769
        %v772 = vcombine.high %v628, %v628
        %v774 = vunpack.c.l.s4 1983009808
        %v775 = vunpack.c.0.s8 %v774
        %v776 = vlaneseq
        %v777 = vshrl.u32 %v776, 7
        %v778 = vsub.s32 %v775, %v777
        %v779 = vrot.slane %v628, %v778
        %v781 = vunpack.c.l.s4 1983009808
        %v782 = vunpack.c.0.s8 %v781
        %v783 = vlaneseq
        %v784 = vshrl.u32 %v783, 7
        %v785 = vsub.s32 %v782, %v784
        %v786 = vrot.slane %v772, %v785
        %v787 = vcombine.high %v779, %v779
        %v788 = vcombine.high %v786, %v786
        %v789 = vcombine.high %v629, %v629
        %v791 = vunpack.c.l.s4 1983009808
        %v792 = vunpack.c.0.s8 %v791
        %v793 = vlaneseq
        %v794 = vshrl.u32 %v793, 7
        %v795 = vsub.s32 %v792, %v794
        %v796 = vrot.slane %v629, %v795
        %v798 = vunpack.c.l.s4 1983009808
        %v799 = vunpack.c.0.s8 %v798
        %v800 = vlaneseq
        %v801 = vshrl.u32 %v800, 7
        %v802 = vsub.s32 %v799, %v801
        %v803 = vrot.slane %v789, %v802
        %v804 = vcombine.high %v796, %v796
        %v805 = vcombine.high %v803, %v803
        %v806 = vcombine.high %v630, %v630
        %v808 = vunpack.c.l.s4 1983009808
        %v809 = vunpack.c.0.s8 %v808
        %v810 = vlaneseq
        %v811 = vshrl.u32 %v810, 7
        %v812 = vsub.s32 %v809, %v811
        %v813 = vrot.slane %v630, %v812
        %v815 = vunpack.c.l.s4 1983009808
        %v816 = vunpack.c.0.s8 %v815
        %v817 = vlaneseq
        %v818 = vshrl.u32 %v817, 7
        %v819 = vsub.s32 %v816, %v818
        %v820 = vrot.slane %v806, %v819
        %v821 = vcombine.high %v813, %v813
        %v822 = vcombine.high %v820, %v820
        %v823 = vcombine.high %v631, %v631
        %v825 = vunpack.c.l.s4 1983009808
        %v826 = vunpack.c.0.s8 %v825
        %v827 = vlaneseq
        %v828 = vshrl.u32 %v827, 7
        %v829 = vsub.s32 %v826, %v828
        %v830 = vrot.slane %v631, %v829
        %v832 = vunpack.c.l.s4 1983009808
        %v833 = vunpack.c.0.s8 %v832
        %v834 = vlaneseq
        %v835 = vshrl.u32 %v834, 7
        %v836 = vsub.s32 %v833, %v835
        %v837 = vrot.slane %v823, %v836
        %v838 = vcombine.high %v830, %v830
        %v839 = vcombine.high %v837, %v837
        %v840 = vcombine.high %v632, %v632
        %v842 = vunpack.c.l.s4 1983009808
        %v843 = vunpack.c.0.s8 %v842
        %v844 = vlaneseq
        %v845 = vshrl.u32 %v844, 7
        %v846 = vsub.s32 %v843, %v845
        %v847 = vrot.slane %v632, %v846
        %v849 = vunpack.c.l.s4 1983009808
        %v850 = vunpack.c.0.s8 %v849
        %v851 = vlaneseq
        %v852 = vshrl.u32 %v851, 7
        %v853 = vsub.s32 %v850, %v852
        %v854 = vrot.slane %v840, %v853
        %v855 = vcombine.high %v847, %v847
        %v856 = vcombine.high %v854, %v854
        %v857 = vcombine.high %v633, %v633
        %v859 = vunpack.c.l.s4 1983009808
        %v860 = vunpack.c.0.s8 %v859
        %v861 = vlaneseq
        %v862 = vshrl.u32 %v861, 7
        %v863 = vsub.s32 %v860, %v862
        %v864 = vrot.slane %v633, %v863
        %v866 = vunpack.c.l.s4 1983009808
        %v867 = vunpack.c.0.s8 %v866
        %v868 = vlaneseq
        %v869 = vshrl.u32 %v868, 7
        %v870 = vsub.s32 %v867, %v869
        %v871 = vrot.slane %v857, %v870
        %v872 = vcombine.high %v864, %v864
        %v873 = vcombine.high %v871, %v871
        %v874 = vcombine.high %v634, %v634
        %v876 = vunpack.c.l.s4 1983009808
        %v877 = vunpack.c.0.s8 %v876
        %v878 = vlaneseq
        %v879 = vshrl.u32 %v878, 7
        %v880 = vsub.s32 %v877, %v879
        %v881 = vrot.slane %v634, %v880
        %v883 = vunpack.c.l.s4 1983009808
        %v884 = vunpack.c.0.s8 %v883
        %v885 = vlaneseq
        %v886 = vshrl.u32 %v885, 7
        %v887 = vsub.s32 %v884, %v886
        %v888 = vrot.slane %v874, %v887
        %v889 = vcombine.high %v881, %v881
        %v890 = vcombine.high %v888, %v888
        %v891 = vcombine.high %v635, %v635
        %v893 = vunpack.c.l.s4 1983009808
        %v894 = vunpack.c.0.s8 %v893
        %v895 = vlaneseq
        %v896 = vshrl.u32 %v895, 7
        %v897 = vsub.s32 %v894, %v896
        %v898 = vrot.slane %v635, %v897
        %v900 = vunpack.c.l.s4 1983009808
        %v901 = vunpack.c.0.s8 %v900
        %v902 = vlaneseq
        %v903 = vshrl.u32 %v902, 7
        %v904 = vsub.s32 %v901, %v903
        %v905 = vrot.slane %v891, %v904
        %v906 = vcombine.high %v898, %v898
        %v907 = vcombine.high %v905, %v905
        %v908 = vcombine.high %v636, %v636
        %v910 = vunpack.c.l.s4 1983009808
        %v911 = vunpack.c.0.s8 %v910
        %v912 = vlaneseq
        %v913 = vshrl.u32 %v912, 7
        %v914 = vsub.s32 %v911, %v913
        %v915 = vrot.slane %v636, %v914
        %v917 = vunpack.c.l.s4 1983009808
        %v918 = vunpack.c.0.s8 %v917
        %v919 = vlaneseq
        %v920 = vshrl.u32 %v919, 7
        %v921 = vsub.s32 %v918, %v920
        %v922 = vrot.slane %v908, %v921
        %v923 = vcombine.high %v915, %v915
        %v924 = vcombine.high %v922, %v922
        %v989 = vpack.c.bf16 %v660, %v660
        %v990 = vpack.c.bf16 %v668, %v668
        %v991 = vpack.c.bf16 %v667, %v667
        %v992 = vpack.c.bf16 %v669, %v669
        %v993 = vpack.c.bf16 %v677, %v677
        %v994 = vpack.c.bf16 %v685, %v685
        %v995 = vpack.c.bf16 %v684, %v684
        %v996 = vpack.c.bf16 %v686, %v686
        %v997 = vpack.c.bf16 %v694, %v694
        %v998 = vpack.c.bf16 %v702, %v702
        %v999 = vpack.c.bf16 %v701, %v701
        %v1000 = vpack.c.bf16 %v703, %v703
        %v1001 = vpack.c.bf16 %v711, %v711
        %v1002 = vpack.c.bf16 %v719, %v719
        %v1003 = vpack.c.bf16 %v718, %v718
        %v1004 = vpack.c.bf16 %v720, %v720
        %v1005 = vpack.c.bf16 %v728, %v728
        %v1006 = vpack.c.bf16 %v736, %v736
        %v1007 = vpack.c.bf16 %v735, %v735
        %v1008 = vpack.c.bf16 %v737, %v737
        %v1009 = vpack.c.bf16 %v745, %v745
        %v1010 = vpack.c.bf16 %v753, %v753
        %v1011 = vpack.c.bf16 %v752, %v752
        %v1012 = vpack.c.bf16 %v754, %v754
        %v1013 = vpack.c.bf16 %v762, %v762
        %v1014 = vpack.c.bf16 %v770, %v770
        %v1015 = vpack.c.bf16 %v769, %v769
        %v1016 = vpack.c.bf16 %v771, %v771
        %v1017 = vpack.c.bf16 %v779, %v779
        %v1018 = vpack.c.bf16 %v787, %v787
        %v1019 = vpack.c.bf16 %v786, %v786
        %v1020 = vpack.c.bf16 %v788, %v788
        %v1021 = vpack.c.bf16 %v796, %v796
        %v1022 = vpack.c.bf16 %v804, %v804
        %v1023 = vpack.c.bf16 %v803, %v803
        %v1024 = vpack.c.bf16 %v805, %v805
        %v1025 = vpack.c.bf16 %v813, %v813
        %v1026 = vpack.c.bf16 %v821, %v821
        %v1027 = vpack.c.bf16 %v820, %v820
        %v1028 = vpack.c.bf16 %v822, %v822
        %v1029 = vpack.c.bf16 %v830, %v830
        %v1030 = vpack.c.bf16 %v838, %v838
        %v1031 = vpack.c.bf16 %v837, %v837
        %v1032 = vpack.c.bf16 %v839, %v839
        %v1033 = vpack.c.bf16 %v847, %v847
        %v1034 = vpack.c.bf16 %v855, %v855
        %v1035 = vpack.c.bf16 %v854, %v854
        %v1036 = vpack.c.bf16 %v856, %v856
        %v1037 = vpack.c.bf16 %v864, %v864
        %v1038 = vpack.c.bf16 %v872, %v872
        %v1039 = vpack.c.bf16 %v871, %v871
        %v1040 = vpack.c.bf16 %v873, %v873
        %v1041 = vpack.c.bf16 %v881, %v881
        %v1042 = vpack.c.bf16 %v889, %v889
        %v1043 = vpack.c.bf16 %v888, %v888
        %v1044 = vpack.c.bf16 %v890, %v890
        %v1045 = vpack.c.bf16 %v898, %v898
        %v1046 = vpack.c.bf16 %v906, %v906
        %v1047 = vpack.c.bf16 %v905, %v905
        %v1048 = vpack.c.bf16 %v907, %v907
        %v1049 = vpack.c.bf16 %v915, %v915
        %v1050 = vpack.c.bf16 %v923, %v923
        %v1051 = vpack.c.bf16 %v922, %v922
        %v1052 = vpack.c.bf16 %v924, %v924
        %v1053 = vld [vmem:[%s611] sm:$0xf]
        %v1054 = vld [vmem:[%s611 + $0x4] sm:$0xf]
        %v1055 = vld [vmem:[%s611 + $0x8] sm:$0xf]
        %v1056 = vld [vmem:[%s611 + $0xc] sm:$0xf]
        %v1057 = vld [vmem:[%s611 + $0x10] sm:$0xf]
        %v1058 = vld [vmem:[%s611 + $0x14] sm:$0xf]
        %v1059 = vld [vmem:[%s611 + $0x18] sm:$0xf]
        %v1060 = vld [vmem:[%s611 + $0x1c] sm:$0xf]
        %v1061 = vld [vmem:[%s611 + $0x20] sm:$0xf]
        %v1062 = vld [vmem:[%s611 + $0x24] sm:$0xf]
        %v1063 = vld [vmem:[%s611 + $0x28] sm:$0xf]
        %v1064 = vld [vmem:[%s611 + $0x2c] sm:$0xf]
        %v1065 = vld [vmem:[%s611 + $0x30] sm:$0xf]
        %v1066 = vld [vmem:[%s611 + $0x34] sm:$0xf]
        %v1067 = vld [vmem:[%s611 + $0x38] sm:$0xf]
        %v1068 = vld [vmem:[%s611 + $0x3c] sm:$0xf]
        %v1069 = vld [vmem:[%s611 + $0x40] sm:$0xf]
        %v1070 = vld [vmem:[%s611 + $0x44] sm:$0xf]
        %v1071 = vld [vmem:[%s611 + $0x48] sm:$0xf]
        %v1072 = vld [vmem:[%s611 + $0x4c] sm:$0xf]
        %v1073 = vld [vmem:[%s611 + $0x50] sm:$0xf]
        %v1074 = vld [vmem:[%s611 + $0x54] sm:$0xf]
        %v1075 = vld [vmem:[%s611 + $0x58] sm:$0xf]
        %v1076 = vld [vmem:[%s611 + $0x5c] sm:$0xf]
        %v1077 = vld [vmem:[%s611 + $0x60] sm:$0xf]
        %v1078 = vld [vmem:[%s611 + $0x64] sm:$0xf]
        %v1079 = vld [vmem:[%s611 + $0x68] sm:$0xf]
        %v1080 = vld [vmem:[%s611 + $0x6c] sm:$0xf]
        %v1081 = vld [vmem:[%s611 + $0x70] sm:$0xf]
        %v1082 = vld [vmem:[%s611 + $0x74] sm:$0xf]
        %v1083 = vld [vmem:[%s611 + $0x78] sm:$0xf]
        %v1084 = vld [vmem:[%s611 + $0x7c] sm:$0xf]
        %v1085 = vld [vmem:[%s611 + $0x80] sm:$0xf]
        %v1086 = vld [vmem:[%s611 + $0x84] sm:$0xf]
        %v1087 = vld [vmem:[%s611 + $0x88] sm:$0xf]
        %v1088 = vld [vmem:[%s611 + $0x8c] sm:$0xf]
        %v1089 = vld [vmem:[%s611 + $0x90] sm:$0xf]
        %v1090 = vld [vmem:[%s611 + $0x94] sm:$0xf]
        %v1091 = vld [vmem:[%s611 + $0x98] sm:$0xf]
        %v1092 = vld [vmem:[%s611 + $0x9c] sm:$0xf]
        %v1093 = vld [vmem:[%s611 + $0xa0] sm:$0xf]
        %v1094 = vld [vmem:[%s611 + $0xa4] sm:$0xf]
        %v1095 = vld [vmem:[%s611 + $0xa8] sm:$0xf]
        %v1096 = vld [vmem:[%s611 + $0xac] sm:$0xf]
        %v1097 = vld [vmem:[%s611 + $0xb0] sm:$0xf]
        %v1098 = vld [vmem:[%s611 + $0xb4] sm:$0xf]
        %v1099 = vld [vmem:[%s611 + $0xb8] sm:$0xf]
        %v1100 = vld [vmem:[%s611 + $0xbc] sm:$0xf]
        %v1101 = vld [vmem:[%s611 + $0xc0] sm:$0xf]
        %v1102 = vld [vmem:[%s611 + $0xc4] sm:$0xf]
        %v1103 = vld [vmem:[%s611 + $0xc8] sm:$0xf]
        %v1104 = vld [vmem:[%s611 + $0xcc] sm:$0xf]
        %v1105 = vld [vmem:[%s611 + $0xd0] sm:$0xf]
        %v1106 = vld [vmem:[%s611 + $0xd4] sm:$0xf]
        %v1107 = vld [vmem:[%s611 + $0xd8] sm:$0xf]
        %v1108 = vld [vmem:[%s611 + $0xdc] sm:$0xf]
        %v1109 = vld [vmem:[%s611 + $0xe0] sm:$0xf]
        %v1110 = vld [vmem:[%s611 + $0xe4] sm:$0xf]
        %v1111 = vld [vmem:[%s611 + $0xe8] sm:$0xf]
        %v1112 = vld [vmem:[%s611 + $0xec] sm:$0xf]
        %v1113 = vld [vmem:[%s611 + $0xf0] sm:$0xf]
        %v1114 = vld [vmem:[%s611 + $0xf4] sm:$0xf]
        %v1115 = vld [vmem:[%s611 + $0xf8] sm:$0xf]
        %v1116 = vld [vmem:[%s611 + $0xfc] sm:$0xf]
        %v1117 = vld [vmem:[%s611 + $0x100] sm:$0xf]
        %v1118 = vld [vmem:[%s611 + $0x104] sm:$0xf]
        %v1119 = vld [vmem:[%s611 + $0x108] sm:$0xf]
        %v1120 = vld [vmem:[%s611 + $0x10c] sm:$0xf]
        %v1121 = vld [vmem:[%s611 + $0x110] sm:$0xf]
        %v1122 = vld [vmem:[%s611 + $0x114] sm:$0xf]
        %v1123 = vld [vmem:[%s611 + $0x118] sm:$0xf]
        %v1124 = vld [vmem:[%s611 + $0x11c] sm:$0xf]
        %v1125 = vld [vmem:[%s611 + $0x120] sm:$0xf]
        %v1126 = vld [vmem:[%s611 + $0x124] sm:$0xf]
        %v1127 = vld [vmem:[%s611 + $0x128] sm:$0xf]
        %v1128 = vld [vmem:[%s611 + $0x12c] sm:$0xf]
        %v1129 = vld [vmem:[%s611 + $0x130] sm:$0xf]
        %v1130 = vld [vmem:[%s611 + $0x134] sm:$0xf]
        %v1131 = vld [vmem:[%s611 + $0x138] sm:$0xf]
        %v1132 = vld [vmem:[%s611 + $0x13c] sm:$0xf]
        %v1133 = vld [vmem:[%s611 + $0x140] sm:$0xf]
        %v1134 = vld [vmem:[%s611 + $0x144] sm:$0xf]
        %v1135 = vld [vmem:[%s611 + $0x148] sm:$0xf]
        %v1136 = vld [vmem:[%s611 + $0x14c] sm:$0xf]
        %v1137 = vld [vmem:[%s611 + $0x150] sm:$0xf]
        %v1138 = vld [vmem:[%s611 + $0x154] sm:$0xf]
        %v1139 = vld [vmem:[%s611 + $0x158] sm:$0xf]
        %v1140 = vld [vmem:[%s611 + $0x15c] sm:$0xf]
        %v1141 = vld [vmem:[%s611 + $0x160] sm:$0xf]
        %v1142 = vld [vmem:[%s611 + $0x164] sm:$0xf]
        %v1143 = vld [vmem:[%s611 + $0x168] sm:$0xf]
        %v1144 = vld [vmem:[%s611 + $0x16c] sm:$0xf]
        %v1145 = vld [vmem:[%s611 + $0x170] sm:$0xf]
        %v1146 = vld [vmem:[%s611 + $0x174] sm:$0xf]
        %v1147 = vld [vmem:[%s611 + $0x178] sm:$0xf]
        %v1148 = vld [vmem:[%s611 + $0x17c] sm:$0xf]
        %v1149 = vld [vmem:[%s611 + $0x180] sm:$0xf]
        %v1150 = vld [vmem:[%s611 + $0x184] sm:$0xf]
        %v1151 = vld [vmem:[%s611 + $0x188] sm:$0xf]
        %v1152 = vld [vmem:[%s611 + $0x18c] sm:$0xf]
        %v1153 = vld [vmem:[%s611 + $0x190] sm:$0xf]
        %v1154 = vld [vmem:[%s611 + $0x194] sm:$0xf]
        %v1155 = vld [vmem:[%s611 + $0x198] sm:$0xf]
        %v1156 = vld [vmem:[%s611 + $0x19c] sm:$0xf]
        %v1157 = vld [vmem:[%s611 + $0x1a0] sm:$0xf]
        %v1158 = vld [vmem:[%s611 + $0x1a4] sm:$0xf]
        %v1159 = vld [vmem:[%s611 + $0x1a8] sm:$0xf]
        %v1160 = vld [vmem:[%s611 + $0x1ac] sm:$0xf]
        %v1161 = vld [vmem:[%s611 + $0x1b0] sm:$0xf]
        %v1162 = vld [vmem:[%s611 + $0x1b4] sm:$0xf]
        %v1163 = vld [vmem:[%s611 + $0x1b8] sm:$0xf]
        %v1164 = vld [vmem:[%s611 + $0x1bc] sm:$0xf]
        %v1165 = vld [vmem:[%s611 + $0x1c0] sm:$0xf]
        %v1166 = vld [vmem:[%s611 + $0x1c4] sm:$0xf]
        %v1167 = vld [vmem:[%s611 + $0x1c8] sm:$0xf]
        %v1168 = vld [vmem:[%s611 + $0x1cc] sm:$0xf]
        %v1169 = vld [vmem:[%s611 + $0x1d0] sm:$0xf]
        %v1170 = vld [vmem:[%s611 + $0x1d4] sm:$0xf]
        %v1171 = vld [vmem:[%s611 + $0x1d8] sm:$0xf]
        %v1172 = vld [vmem:[%s611 + $0x1dc] sm:$0xf]
        %v1173 = vld [vmem:[%s611 + $0x1e0] sm:$0xf]
        %v1174 = vld [vmem:[%s611 + $0x1e4] sm:$0xf]
        %v1175 = vld [vmem:[%s611 + $0x1e8] sm:$0xf]
        %v1176 = vld [vmem:[%s611 + $0x1ec] sm:$0xf]
        %v1177 = vld [vmem:[%s611 + $0x1f0] sm:$0xf]
        %v1178 = vld [vmem:[%s611 + $0x1f4] sm:$0xf]
        %v1179 = vld [vmem:[%s611 + $0x1f8] sm:$0xf]
        %v1180 = vld [vmem:[%s611 + $0x1fc] sm:$0xf]
        %v1181 = vld [vmem:[%s611 + $0x200] sm:$0xf]
        %v1182 = vld [vmem:[%s611 + $0x204] sm:$0xf]
        %v1183 = vld [vmem:[%s611 + $0x208] sm:$0xf]
        %v1184 = vld [vmem:[%s611 + $0x20c] sm:$0xf]
        %v1185 = vld [vmem:[%s611 + $0x210] sm:$0xf]
        %v1186 = vld [vmem:[%s611 + $0x214] sm:$0xf]
        %v1187 = vld [vmem:[%s611 + $0x218] sm:$0xf]
        %v1188 = vld [vmem:[%s611 + $0x21c] sm:$0xf]
        %v1189 = vld [vmem:[%s611 + $0x220] sm:$0xf]
        %v1190 = vld [vmem:[%s611 + $0x224] sm:$0xf]
        %v1191 = vld [vmem:[%s611 + $0x228] sm:$0xf]
        %v1192 = vld [vmem:[%s611 + $0x22c] sm:$0xf]
        %v1193 = vld [vmem:[%s611 + $0x230] sm:$0xf]
        %v1194 = vld [vmem:[%s611 + $0x234] sm:$0xf]
        %v1195 = vld [vmem:[%s611 + $0x238] sm:$0xf]
        %v1196 = vld [vmem:[%s611 + $0x23c] sm:$0xf]
        %v1197 = vld [vmem:[%s611 + $0x240] sm:$0xf]
        %v1198 = vld [vmem:[%s611 + $0x244] sm:$0xf]
        %v1199 = vld [vmem:[%s611 + $0x248] sm:$0xf]
        %v1200 = vld [vmem:[%s611 + $0x24c] sm:$0xf]
        %v1201 = vld [vmem:[%s611 + $0x250] sm:$0xf]
        %v1202 = vld [vmem:[%s611 + $0x254] sm:$0xf]
        %v1203 = vld [vmem:[%s611 + $0x258] sm:$0xf]
        %v1204 = vld [vmem:[%s611 + $0x25c] sm:$0xf]
        %v1205 = vld [vmem:[%s611 + $0x260] sm:$0xf]
        %v1206 = vld [vmem:[%s611 + $0x264] sm:$0xf]
        %v1207 = vld [vmem:[%s611 + $0x268] sm:$0xf]
        %v1208 = vld [vmem:[%s611 + $0x26c] sm:$0xf]
        %v1209 = vld [vmem:[%s611 + $0x270] sm:$0xf]
        %v1210 = vld [vmem:[%s611 + $0x274] sm:$0xf]
        %v1211 = vld [vmem:[%s611 + $0x278] sm:$0xf]
        %v1212 = vld [vmem:[%s611 + $0x27c] sm:$0xf]
        %v1213 = vld [vmem:[%s611 + $0x280] sm:$0xf]
        %v1214 = vld [vmem:[%s611 + $0x284] sm:$0xf]
        %v1215 = vld [vmem:[%s611 + $0x288] sm:$0xf]
        %v1216 = vld [vmem:[%s611 + $0x28c] sm:$0xf]
        %v1217 = vld [vmem:[%s611 + $0x290] sm:$0xf]
        %v1218 = vld [vmem:[%s611 + $0x294] sm:$0xf]
        %v1219 = vld [vmem:[%s611 + $0x298] sm:$0xf]
        %v1220 = vld [vmem:[%s611 + $0x29c] sm:$0xf]
        %v1221 = vld [vmem:[%s611 + $0x2a0] sm:$0xf]
        %v1222 = vld [vmem:[%s611 + $0x2a4] sm:$0xf]
        %v1223 = vld [vmem:[%s611 + $0x2a8] sm:$0xf]
        %v1224 = vld [vmem:[%s611 + $0x2ac] sm:$0xf]
        %v1225 = vld [vmem:[%s611 + $0x2b0] sm:$0xf]
        %v1226 = vld [vmem:[%s611 + $0x2b4] sm:$0xf]
        %v1227 = vld [vmem:[%s611 + $0x2b8] sm:$0xf]
        %v1228 = vld [vmem:[%s611 + $0x2bc] sm:$0xf]
        %v1229 = vld [vmem:[%s611 + $0x2c0] sm:$0xf]
        %v1230 = vld [vmem:[%s611 + $0x2c4] sm:$0xf]
        %v1231 = vld [vmem:[%s611 + $0x2c8] sm:$0xf]
        %v1232 = vld [vmem:[%s611 + $0x2cc] sm:$0xf]
        %v1233 = vld [vmem:[%s611 + $0x2d0] sm:$0xf]
        %v1234 = vld [vmem:[%s611 + $0x2d4] sm:$0xf]
        %v1235 = vld [vmem:[%s611 + $0x2d8] sm:$0xf]
        %v1236 = vld [vmem:[%s611 + $0x2dc] sm:$0xf]
        %v1237 = vld [vmem:[%s611 + $0x2e0] sm:$0xf]
        %v1238 = vld [vmem:[%s611 + $0x2e4] sm:$0xf]
        %v1239 = vld [vmem:[%s611 + $0x2e8] sm:$0xf]
        %v1240 = vld [vmem:[%s611 + $0x2ec] sm:$0xf]
        %v1241 = vld [vmem:[%s611 + $0x2f0] sm:$0xf]
        %v1242 = vld [vmem:[%s611 + $0x2f4] sm:$0xf]
        %v1243 = vld [vmem:[%s611 + $0x2f8] sm:$0xf]
        %v1244 = vld [vmem:[%s611 + $0x2fc] sm:$0xf]
        %v1245 = vld [vmem:[%s611 + $0x300] sm:$0xf]
        %v1246 = vld [vmem:[%s611 + $0x304] sm:$0xf]
        %v1247 = vld [vmem:[%s611 + $0x308] sm:$0xf]
        %v1248 = vld [vmem:[%s611 + $0x30c] sm:$0xf]
        %v1249 = vld [vmem:[%s611 + $0x310] sm:$0xf]
        %v1250 = vld [vmem:[%s611 + $0x314] sm:$0xf]
        %v1251 = vld [vmem:[%s611 + $0x318] sm:$0xf]
        %v1252 = vld [vmem:[%s611 + $0x31c] sm:$0xf]
        %v1253 = vld [vmem:[%s611 + $0x320] sm:$0xf]
        %v1254 = vld [vmem:[%s611 + $0x324] sm:$0xf]
        %v1255 = vld [vmem:[%s611 + $0x328] sm:$0xf]
        %v1256 = vld [vmem:[%s611 + $0x32c] sm:$0xf]
        %v1257 = vld [vmem:[%s611 + $0x330] sm:$0xf]
        %v1258 = vld [vmem:[%s611 + $0x334] sm:$0xf]
        %v1259 = vld [vmem:[%s611 + $0x338] sm:$0xf]
        %v1260 = vld [vmem:[%s611 + $0x33c] sm:$0xf]
        %v1261 = vld [vmem:[%s611 + $0x340] sm:$0xf]
        %v1262 = vld [vmem:[%s611 + $0x344] sm:$0xf]
        %v1263 = vld [vmem:[%s611 + $0x348] sm:$0xf]
        %v1264 = vld [vmem:[%s611 + $0x34c] sm:$0xf]
        %v1265 = vld [vmem:[%s611 + $0x350] sm:$0xf]
        %v1266 = vld [vmem:[%s611 + $0x354] sm:$0xf]
        %v1267 = vld [vmem:[%s611 + $0x358] sm:$0xf]
        %v1268 = vld [vmem:[%s611 + $0x35c] sm:$0xf]
        %v1269 = vld [vmem:[%s611 + $0x360] sm:$0xf]
        %v1270 = vld [vmem:[%s611 + $0x364] sm:$0xf]
        %v1271 = vld [vmem:[%s611 + $0x368] sm:$0xf]
        %v1272 = vld [vmem:[%s611 + $0x36c] sm:$0xf]
        %v1273 = vld [vmem:[%s611 + $0x370] sm:$0xf]
        %v1274 = vld [vmem:[%s611 + $0x374] sm:$0xf]
        %v1275 = vld [vmem:[%s611 + $0x378] sm:$0xf]
        %v1276 = vld [vmem:[%s611 + $0x37c] sm:$0xf]
        %v1277 = vld [vmem:[%s611 + $0x380] sm:$0xf]
        %v1278 = vld [vmem:[%s611 + $0x384] sm:$0xf]
        %v1279 = vld [vmem:[%s611 + $0x388] sm:$0xf]
        %v1280 = vld [vmem:[%s611 + $0x38c] sm:$0xf]
        %v1281 = vld [vmem:[%s611 + $0x390] sm:$0xf]
        %v1282 = vld [vmem:[%s611 + $0x394] sm:$0xf]
        %v1283 = vld [vmem:[%s611 + $0x398] sm:$0xf]
        %v1284 = vld [vmem:[%s611 + $0x39c] sm:$0xf]
        %v1285 = vld [vmem:[%s611 + $0x3a0] sm:$0xf]
        %v1286 = vld [vmem:[%s611 + $0x3a4] sm:$0xf]
        %v1287 = vld [vmem:[%s611 + $0x3a8] sm:$0xf]
        %v1288 = vld [vmem:[%s611 + $0x3ac] sm:$0xf]
        %v1289 = vld [vmem:[%s611 + $0x3b0] sm:$0xf]
        %v1290 = vld [vmem:[%s611 + $0x3b4] sm:$0xf]
        %v1291 = vld [vmem:[%s611 + $0x3b8] sm:$0xf]
        %v1292 = vld [vmem:[%s611 + $0x3bc] sm:$0xf]
        %v1293 = vld [vmem:[%s611 + $0x3c0] sm:$0xf]
        %v1294 = vld [vmem:[%s611 + $0x3c4] sm:$0xf]
        %v1295 = vld [vmem:[%s611 + $0x3c8] sm:$0xf]
        %v1296 = vld [vmem:[%s611 + $0x3cc] sm:$0xf]
        %v1297 = vld [vmem:[%s611 + $0x3d0] sm:$0xf]
        %v1298 = vld [vmem:[%s611 + $0x3d4] sm:$0xf]
        %v1299 = vld [vmem:[%s611 + $0x3d8] sm:$0xf]
        %v1300 = vld [vmem:[%s611 + $0x3dc] sm:$0xf]
        %v1301 = vld [vmem:[%s611 + $0x3e0] sm:$0xf]
        %v1302 = vld [vmem:[%s611 + $0x3e4] sm:$0xf]
        %v1303 = vld [vmem:[%s611 + $0x3e8] sm:$0xf]
        %v1304 = vld [vmem:[%s611 + $0x3ec] sm:$0xf]
        %v1305 = vld [vmem:[%s611 + $0x3f0] sm:$0xf]
        %v1306 = vld [vmem:[%s611 + $0x3f4] sm:$0xf]
        %v1307 = vld [vmem:[%s611 + $0x3f8] sm:$0xf]
        %v1308 = vld [vmem:[%s611 + $0x3fc] sm:$0xf]
        %v1309 = vld [vmem:[%s611 + $0x400] sm:$0xf]
        %v1310 = vld [vmem:[%s611 + $0x404] sm:$0xf]
        %v1311 = vld [vmem:[%s611 + $0x408] sm:$0xf]
        %v1312 = vld [vmem:[%s611 + $0x40c] sm:$0xf]
        %v1313 = vld [vmem:[%s611 + $0x410] sm:$0xf]
        %v1314 = vld [vmem:[%s611 + $0x414] sm:$0xf]
        %v1315 = vld [vmem:[%s611 + $0x418] sm:$0xf]
        %v1316 = vld [vmem:[%s611 + $0x41c] sm:$0xf]
        %v1317 = vld [vmem:[%s611 + $0x420] sm:$0xf]
        %v1318 = vld [vmem:[%s611 + $0x424] sm:$0xf]
        %v1319 = vld [vmem:[%s611 + $0x428] sm:$0xf]
        %v1320 = vld [vmem:[%s611 + $0x42c] sm:$0xf]
        %v1321 = vld [vmem:[%s611 + $0x430] sm:$0xf]
        %v1322 = vld [vmem:[%s611 + $0x434] sm:$0xf]
        %v1323 = vld [vmem:[%s611 + $0x438] sm:$0xf]
        %v1324 = vld [vmem:[%s611 + $0x43c] sm:$0xf]
        %v1325 = vld [vmem:[%s611 + $0x440] sm:$0xf]
        %v1326 = vld [vmem:[%s611 + $0x444] sm:$0xf]
        %v1327 = vld [vmem:[%s611 + $0x448] sm:$0xf]
        %v1328 = vld [vmem:[%s611 + $0x44c] sm:$0xf]
        %v1329 = vld [vmem:[%s611 + $0x450] sm:$0xf]
        %v1330 = vld [vmem:[%s611 + $0x454] sm:$0xf]
        %v1331 = vld [vmem:[%s611 + $0x458] sm:$0xf]
        %v1332 = vld [vmem:[%s611 + $0x45c] sm:$0xf]
        %v1333 = vld [vmem:[%s611 + $0x460] sm:$0xf]
        %v1334 = vld [vmem:[%s611 + $0x464] sm:$0xf]
        %v1335 = vld [vmem:[%s611 + $0x468] sm:$0xf]
        %v1336 = vld [vmem:[%s611 + $0x46c] sm:$0xf]
        %v1337 = vld [vmem:[%s611 + $0x470] sm:$0xf]
        %v1338 = vld [vmem:[%s611 + $0x474] sm:$0xf]
        %v1339 = vld [vmem:[%s611 + $0x478] sm:$0xf]
        %v1340 = vld [vmem:[%s611 + $0x47c] sm:$0xf]
        %v1341 = vld [vmem:[%s611 + $0x480] sm:$0xf]
        %v1342 = vld [vmem:[%s611 + $0x484] sm:$0xf]
        %v1343 = vld [vmem:[%s611 + $0x488] sm:$0xf]
        %v1344 = vld [vmem:[%s611 + $0x48c] sm:$0xf]
        %v1345 = vld [vmem:[%s611 + $0x490] sm:$0xf]
        %v1346 = vld [vmem:[%s611 + $0x494] sm:$0xf]
        %v1347 = vld [vmem:[%s611 + $0x498] sm:$0xf]
        %v1348 = vld [vmem:[%s611 + $0x49c] sm:$0xf]
        %v1349 = vld [vmem:[%s611 + $0x4a0] sm:$0xf]
        %v1350 = vld [vmem:[%s611 + $0x4a4] sm:$0xf]
        %v1351 = vld [vmem:[%s611 + $0x4a8] sm:$0xf]
        %v1352 = vld [vmem:[%s611 + $0x4ac] sm:$0xf]
        %v1353 = vld [vmem:[%s611 + $0x4b0] sm:$0xf]
        %v1354 = vld [vmem:[%s611 + $0x4b4] sm:$0xf]
        %v1355 = vld [vmem:[%s611 + $0x4b8] sm:$0xf]
        %v1356 = vld [vmem:[%s611 + $0x4bc] sm:$0xf]
        %v1357 = vld [vmem:[%s611 + $0x4c0] sm:$0xf]
        %v1358 = vld [vmem:[%s611 + $0x4c4] sm:$0xf]
        %v1359 = vld [vmem:[%s611 + $0x4c8] sm:$0xf]
        %v1360 = vld [vmem:[%s611 + $0x4cc] sm:$0xf]
        %v1361 = vld [vmem:[%s611 + $0x4d0] sm:$0xf]
        %v1362 = vld [vmem:[%s611 + $0x4d4] sm:$0xf]
        %v1363 = vld [vmem:[%s611 + $0x4d8] sm:$0xf]
        %v1364 = vld [vmem:[%s611 + $0x4dc] sm:$0xf]
        %v1365 = vld [vmem:[%s611 + $0x4e0] sm:$0xf]
        %v1366 = vld [vmem:[%s611 + $0x4e4] sm:$0xf]
        %v1367 = vld [vmem:[%s611 + $0x4e8] sm:$0xf]
        %v1368 = vld [vmem:[%s611 + $0x4ec] sm:$0xf]
        %v1369 = vld [vmem:[%s611 + $0x4f0] sm:$0xf]
        %v1370 = vld [vmem:[%s611 + $0x4f4] sm:$0xf]
        %v1371 = vld [vmem:[%s611 + $0x4f8] sm:$0xf]
        %v1372 = vld [vmem:[%s611 + $0x4fc] sm:$0xf]
        %v1373 = vld [vmem:[%s611 + $0x500] sm:$0xf]
        %v1374 = vld [vmem:[%s611 + $0x504] sm:$0xf]
        %v1375 = vld [vmem:[%s611 + $0x508] sm:$0xf]
        %v1376 = vld [vmem:[%s611 + $0x50c] sm:$0xf]
        %v1377 = vld [vmem:[%s611 + $0x510] sm:$0xf]
        %v1378 = vld [vmem:[%s611 + $0x514] sm:$0xf]
        %v1379 = vld [vmem:[%s611 + $0x518] sm:$0xf]
        %v1380 = vld [vmem:[%s611 + $0x51c] sm:$0xf]
        %v1381 = vld [vmem:[%s611 + $0x520] sm:$0xf]
        %v1382 = vld [vmem:[%s611 + $0x524] sm:$0xf]
        %v1383 = vld [vmem:[%s611 + $0x528] sm:$0xf]
        %v1384 = vld [vmem:[%s611 + $0x52c] sm:$0xf]
        %v1385 = vld [vmem:[%s611 + $0x530] sm:$0xf]
        %v1386 = vld [vmem:[%s611 + $0x534] sm:$0xf]
        %v1387 = vld [vmem:[%s611 + $0x538] sm:$0xf]
        %v1388 = vld [vmem:[%s611 + $0x53c] sm:$0xf]
        %v1389 = vld [vmem:[%s611 + $0x540] sm:$0xf]
        %v1390 = vld [vmem:[%s611 + $0x544] sm:$0xf]
        %v1391 = vld [vmem:[%s611 + $0x548] sm:$0xf]
        %v1392 = vld [vmem:[%s611 + $0x54c] sm:$0xf]
        %v1393 = vld [vmem:[%s611 + $0x550] sm:$0xf]
        %v1394 = vld [vmem:[%s611 + $0x554] sm:$0xf]
        %v1395 = vld [vmem:[%s611 + $0x558] sm:$0xf]
        %v1396 = vld [vmem:[%s611 + $0x55c] sm:$0xf]
        %v1397 = vld [vmem:[%s611 + $0x560] sm:$0xf]
        %v1398 = vld [vmem:[%s611 + $0x564] sm:$0xf]
        %v1399 = vld [vmem:[%s611 + $0x568] sm:$0xf]
        %v1400 = vld [vmem:[%s611 + $0x56c] sm:$0xf]
        %v1401 = vld [vmem:[%s611 + $0x570] sm:$0xf]
        %v1402 = vld [vmem:[%s611 + $0x574] sm:$0xf]
        %v1403 = vld [vmem:[%s611 + $0x578] sm:$0xf]
        %v1404 = vld [vmem:[%s611 + $0x57c] sm:$0xf]
        %v1405 = vld [vmem:[%s611 + $0x580] sm:$0xf]
        %v1406 = vld [vmem:[%s611 + $0x584] sm:$0xf]
        %v1407 = vld [vmem:[%s611 + $0x588] sm:$0xf]
        %v1408 = vld [vmem:[%s611 + $0x58c] sm:$0xf]
        %v1409 = vld [vmem:[%s611 + $0x590] sm:$0xf]
        %v1410 = vld [vmem:[%s611 + $0x594] sm:$0xf]
        %v1411 = vld [vmem:[%s611 + $0x598] sm:$0xf]
        %v1412 = vld [vmem:[%s611 + $0x59c] sm:$0xf]
        %v1413 = vld [vmem:[%s611 + $0x5a0] sm:$0xf]
        %v1414 = vld [vmem:[%s611 + $0x5a4] sm:$0xf]
        %v1415 = vld [vmem:[%s611 + $0x5a8] sm:$0xf]
        %v1416 = vld [vmem:[%s611 + $0x5ac] sm:$0xf]
        %v1417 = vld [vmem:[%s611 + $0x5b0] sm:$0xf]
        %v1418 = vld [vmem:[%s611 + $0x5b4] sm:$0xf]
        %v1419 = vld [vmem:[%s611 + $0x5b8] sm:$0xf]
        %v1420 = vld [vmem:[%s611 + $0x5bc] sm:$0xf]
        %v1421 = vld [vmem:[%s611 + $0x5c0] sm:$0xf]
        %v1422 = vld [vmem:[%s611 + $0x5c4] sm:$0xf]
        %v1423 = vld [vmem:[%s611 + $0x5c8] sm:$0xf]
        %v1424 = vld [vmem:[%s611 + $0x5cc] sm:$0xf]
        %v1425 = vld [vmem:[%s611 + $0x5d0] sm:$0xf]
        %v1426 = vld [vmem:[%s611 + $0x5d4] sm:$0xf]
        %v1427 = vld [vmem:[%s611 + $0x5d8] sm:$0xf]
        %v1428 = vld [vmem:[%s611 + $0x5dc] sm:$0xf]
        %v1429 = vld [vmem:[%s611 + $0x5e0] sm:$0xf]
        %v1430 = vld [vmem:[%s611 + $0x5e4] sm:$0xf]
        %v1431 = vld [vmem:[%s611 + $0x5e8] sm:$0xf]
        %v1432 = vld [vmem:[%s611 + $0x5ec] sm:$0xf]
        %v1433 = vld [vmem:[%s611 + $0x5f0] sm:$0xf]
        %v1434 = vld [vmem:[%s611 + $0x5f4] sm:$0xf]
        %v1435 = vld [vmem:[%s611 + $0x5f8] sm:$0xf]
        %v1436 = vld [vmem:[%s611 + $0x5fc] sm:$0xf]
        %v1437 = vld [vmem:[%s611 + $0x600] sm:$0xf]
        %v1438 = vld [vmem:[%s611 + $0x604] sm:$0xf]
        %v1439 = vld [vmem:[%s611 + $0x608] sm:$0xf]
        %v1440 = vld [vmem:[%s611 + $0x60c] sm:$0xf]
        %v1441 = vld [vmem:[%s611 + $0x610] sm:$0xf]
        %v1442 = vld [vmem:[%s611 + $0x614] sm:$0xf]
        %v1443 = vld [vmem:[%s611 + $0x618] sm:$0xf]
        %v1444 = vld [vmem:[%s611 + $0x61c] sm:$0xf]
        %v1445 = vld [vmem:[%s611 + $0x620] sm:$0xf]
        %v1446 = vld [vmem:[%s611 + $0x624] sm:$0xf]
        %v1447 = vld [vmem:[%s611 + $0x628] sm:$0xf]
        %v1448 = vld [vmem:[%s611 + $0x62c] sm:$0xf]
        %v1449 = vld [vmem:[%s611 + $0x630] sm:$0xf]
        %v1450 = vld [vmem:[%s611 + $0x634] sm:$0xf]
        %v1451 = vld [vmem:[%s611 + $0x638] sm:$0xf]
        %v1452 = vld [vmem:[%s611 + $0x63c] sm:$0xf]
        %v1453 = vld [vmem:[%s611 + $0x640] sm:$0xf]
        %v1454 = vld [vmem:[%s611 + $0x644] sm:$0xf]
        %v1455 = vld [vmem:[%s611 + $0x648] sm:$0xf]
        %v1456 = vld [vmem:[%s611 + $0x64c] sm:$0xf]
        %v1457 = vld [vmem:[%s611 + $0x650] sm:$0xf]
        %v1458 = vld [vmem:[%s611 + $0x654] sm:$0xf]
        %v1459 = vld [vmem:[%s611 + $0x658] sm:$0xf]
        %v1460 = vld [vmem:[%s611 + $0x65c] sm:$0xf]
        %v1461 = vld [vmem:[%s611 + $0x660] sm:$0xf]
        %v1462 = vld [vmem:[%s611 + $0x664] sm:$0xf]
        %v1463 = vld [vmem:[%s611 + $0x668] sm:$0xf]
        %v1464 = vld [vmem:[%s611 + $0x66c] sm:$0xf]
        %v1465 = vld [vmem:[%s611 + $0x670] sm:$0xf]
        %v1466 = vld [vmem:[%s611 + $0x674] sm:$0xf]
        %v1467 = vld [vmem:[%s611 + $0x678] sm:$0xf]
        %v1468 = vld [vmem:[%s611 + $0x67c] sm:$0xf]
        %v1469 = vld [vmem:[%s611 + $0x680] sm:$0xf]
        %v1470 = vld [vmem:[%s611 + $0x684] sm:$0xf]
        %v1471 = vld [vmem:[%s611 + $0x688] sm:$0xf]
        %v1472 = vld [vmem:[%s611 + $0x68c] sm:$0xf]
        %v1473 = vld [vmem:[%s611 + $0x690] sm:$0xf]
        %v1474 = vld [vmem:[%s611 + $0x694] sm:$0xf]
        %v1475 = vld [vmem:[%s611 + $0x698] sm:$0xf]
        %v1476 = vld [vmem:[%s611 + $0x69c] sm:$0xf]
        %v1477 = vld [vmem:[%s611 + $0x6a0] sm:$0xf]
        %v1478 = vld [vmem:[%s611 + $0x6a4] sm:$0xf]
        %v1479 = vld [vmem:[%s611 + $0x6a8] sm:$0xf]
        %v1480 = vld [vmem:[%s611 + $0x6ac] sm:$0xf]
        %v1481 = vld [vmem:[%s611 + $0x6b0] sm:$0xf]
        %v1482 = vld [vmem:[%s611 + $0x6b4] sm:$0xf]
        %v1483 = vld [vmem:[%s611 + $0x6b8] sm:$0xf]
        %v1484 = vld [vmem:[%s611 + $0x6bc] sm:$0xf]
        %v1485 = vld [vmem:[%s611 + $0x6c0] sm:$0xf]
        %v1486 = vld [vmem:[%s611 + $0x6c4] sm:$0xf]
        %v1487 = vld [vmem:[%s611 + $0x6c8] sm:$0xf]
        %v1488 = vld [vmem:[%s611 + $0x6cc] sm:$0xf]
        %v1489 = vld [vmem:[%s611 + $0x6d0] sm:$0xf]
        %v1490 = vld [vmem:[%s611 + $0x6d4] sm:$0xf]
        %v1491 = vld [vmem:[%s611 + $0x6d8] sm:$0xf]
        %v1492 = vld [vmem:[%s611 + $0x6dc] sm:$0xf]
        %v1493 = vld [vmem:[%s611 + $0x6e0] sm:$0xf]
        %v1494 = vld [vmem:[%s611 + $0x6e4] sm:$0xf]
        %v1495 = vld [vmem:[%s611 + $0x6e8] sm:$0xf]
        %v1496 = vld [vmem:[%s611 + $0x6ec] sm:$0xf]
        %v1497 = vld [vmem:[%s611 + $0x6f0] sm:$0xf]
        %v1498 = vld [vmem:[%s611 + $0x6f4] sm:$0xf]
        %v1499 = vld [vmem:[%s611 + $0x6f8] sm:$0xf]
        %v1500 = vld [vmem:[%s611 + $0x6fc] sm:$0xf]
        %v1501 = vld [vmem:[%s611 + $0x700] sm:$0xf]
        %v1502 = vld [vmem:[%s611 + $0x704] sm:$0xf]
        %v1503 = vld [vmem:[%s611 + $0x708] sm:$0xf]
        %v1504 = vld [vmem:[%s611 + $0x70c] sm:$0xf]
        %v1505 = vld [vmem:[%s611 + $0x710] sm:$0xf]
        %v1506 = vld [vmem:[%s611 + $0x714] sm:$0xf]
        %v1507 = vld [vmem:[%s611 + $0x718] sm:$0xf]
        %v1508 = vld [vmem:[%s611 + $0x71c] sm:$0xf]
        %v1509 = vld [vmem:[%s611 + $0x720] sm:$0xf]
        %v1510 = vld [vmem:[%s611 + $0x724] sm:$0xf]
        %v1511 = vld [vmem:[%s611 + $0x728] sm:$0xf]
        %v1512 = vld [vmem:[%s611 + $0x72c] sm:$0xf]
        %v1513 = vld [vmem:[%s611 + $0x730] sm:$0xf]
        %v1514 = vld [vmem:[%s611 + $0x734] sm:$0xf]
        %v1515 = vld [vmem:[%s611 + $0x738] sm:$0xf]
        %v1516 = vld [vmem:[%s611 + $0x73c] sm:$0xf]
        %v1517 = vld [vmem:[%s611 + $0x740] sm:$0xf]
        %v1518 = vld [vmem:[%s611 + $0x744] sm:$0xf]
        %v1519 = vld [vmem:[%s611 + $0x748] sm:$0xf]
        %v1520 = vld [vmem:[%s611 + $0x74c] sm:$0xf]
        %v1521 = vld [vmem:[%s611 + $0x750] sm:$0xf]
        %v1522 = vld [vmem:[%s611 + $0x754] sm:$0xf]
        %v1523 = vld [vmem:[%s611 + $0x758] sm:$0xf]
        %v1524 = vld [vmem:[%s611 + $0x75c] sm:$0xf]
        %v1525 = vld [vmem:[%s611 + $0x760] sm:$0xf]
        %v1526 = vld [vmem:[%s611 + $0x764] sm:$0xf]
        %v1527 = vld [vmem:[%s611 + $0x768] sm:$0xf]
        %v1528 = vld [vmem:[%s611 + $0x76c] sm:$0xf]
        %v1529 = vld [vmem:[%s611 + $0x770] sm:$0xf]
        %v1530 = vld [vmem:[%s611 + $0x774] sm:$0xf]
        %v1531 = vld [vmem:[%s611 + $0x778] sm:$0xf]
        %v1532 = vld [vmem:[%s611 + $0x77c] sm:$0xf]
        %v1533 = vld [vmem:[%s611 + $0x780] sm:$0xf]
        %v1534 = vld [vmem:[%s611 + $0x784] sm:$0xf]
        %v1535 = vld [vmem:[%s611 + $0x788] sm:$0xf]
        %v1536 = vld [vmem:[%s611 + $0x78c] sm:$0xf]
        %v1537 = vld [vmem:[%s611 + $0x790] sm:$0xf]
        %v1538 = vld [vmem:[%s611 + $0x794] sm:$0xf]
        %v1539 = vld [vmem:[%s611 + $0x798] sm:$0xf]
        %v1540 = vld [vmem:[%s611 + $0x79c] sm:$0xf]
        %v1541 = vld [vmem:[%s611 + $0x7a0] sm:$0xf]
        %v1542 = vld [vmem:[%s611 + $0x7a4] sm:$0xf]
        %v1543 = vld [vmem:[%s611 + $0x7a8] sm:$0xf]
        %v1544 = vld [vmem:[%s611 + $0x7ac] sm:$0xf]
        %v1545 = vld [vmem:[%s611 + $0x7b0] sm:$0xf]
        %v1546 = vld [vmem:[%s611 + $0x7b4] sm:$0xf]
        %v1547 = vld [vmem:[%s611 + $0x7b8] sm:$0xf]
        %v1548 = vld [vmem:[%s611 + $0x7bc] sm:$0xf]
        %v1549 = vld [vmem:[%s611 + $0x7c0] sm:$0xf]
        %v1550 = vld [vmem:[%s611 + $0x7c4] sm:$0xf]
        %v1551 = vld [vmem:[%s611 + $0x7c8] sm:$0xf]
        %v1552 = vld [vmem:[%s611 + $0x7cc] sm:$0xf]
        %v1553 = vld [vmem:[%s611 + $0x7d0] sm:$0xf]
        %v1554 = vld [vmem:[%s611 + $0x7d4] sm:$0xf]
        %v1555 = vld [vmem:[%s611 + $0x7d8] sm:$0xf]
        %v1556 = vld [vmem:[%s611 + $0x7dc] sm:$0xf]
        %v1557 = vld [vmem:[%s611 + $0x7e0] sm:$0xf]
        %v1558 = vld [vmem:[%s611 + $0x7e4] sm:$0xf]
        %v1559 = vld [vmem:[%s611 + $0x7e8] sm:$0xf]
        %v1560 = vld [vmem:[%s611 + $0x7ec] sm:$0xf]
        %v1561 = vld [vmem:[%s611 + $0x7f0] sm:$0xf]
        %v1562 = vld [vmem:[%s611 + $0x7f4] sm:$0xf]
        %v1563 = vld [vmem:[%s611 + $0x7f8] sm:$0xf]
        %v1564 = vld [vmem:[%s611 + $0x7fc] sm:$0xf]
        %v1565 = vld [vmem:[%s611 + $0x800] sm:$0xf]
        %v1566 = vld [vmem:[%s611 + $0x804] sm:$0xf]
        %v1567 = vld [vmem:[%s611 + $0x808] sm:$0xf]
        %v1568 = vld [vmem:[%s611 + $0x80c] sm:$0xf]
        %v1569 = vld [vmem:[%s611 + $0x810] sm:$0xf]
        %v1570 = vld [vmem:[%s611 + $0x814] sm:$0xf]
        %v1571 = vld [vmem:[%s611 + $0x818] sm:$0xf]
        %v1572 = vld [vmem:[%s611 + $0x81c] sm:$0xf]
        %v1573 = vld [vmem:[%s611 + $0x820] sm:$0xf]
        %v1574 = vld [vmem:[%s611 + $0x824] sm:$0xf]
        %v1575 = vld [vmem:[%s611 + $0x828] sm:$0xf]
        %v1576 = vld [vmem:[%s611 + $0x82c] sm:$0xf]
        %v1577 = vld [vmem:[%s611 + $0x830] sm:$0xf]
        %v1578 = vld [vmem:[%s611 + $0x834] sm:$0xf]
        %v1579 = vld [vmem:[%s611 + $0x838] sm:$0xf]
        %v1580 = vld [vmem:[%s611 + $0x83c] sm:$0xf]
        %v1581 = vld [vmem:[%s611 + $0x840] sm:$0xf]
        %v1582 = vld [vmem:[%s611 + $0x844] sm:$0xf]
        %v1583 = vld [vmem:[%s611 + $0x848] sm:$0xf]
        %v1584 = vld [vmem:[%s611 + $0x84c] sm:$0xf]
        %v1585 = vld [vmem:[%s611 + $0x850] sm:$0xf]
        %v1586 = vld [vmem:[%s611 + $0x854] sm:$0xf]
        %v1587 = vld [vmem:[%s611 + $0x858] sm:$0xf]
        %v1588 = vld [vmem:[%s611 + $0x85c] sm:$0xf]
        %v1589 = vld [vmem:[%s611 + $0x860] sm:$0xf]
        %v1590 = vld [vmem:[%s611 + $0x864] sm:$0xf]
        %v1591 = vld [vmem:[%s611 + $0x868] sm:$0xf]
        %v1592 = vld [vmem:[%s611 + $0x86c] sm:$0xf]
        %v1593 = vld [vmem:[%s611 + $0x870] sm:$0xf]
        %v1594 = vld [vmem:[%s611 + $0x874] sm:$0xf]
        %v1595 = vld [vmem:[%s611 + $0x878] sm:$0xf]
        %v1596 = vld [vmem:[%s611 + $0x87c] sm:$0xf]
        %v1597 = vld [vmem:[%s611 + $0x880] sm:$0xf]
        %v1598 = vld [vmem:[%s611 + $0x884] sm:$0xf]
        %v1599 = vld [vmem:[%s611 + $0x888] sm:$0xf]
        %v1600 = vld [vmem:[%s611 + $0x88c] sm:$0xf]
        %v1601 = vld [vmem:[%s611 + $0x890] sm:$0xf]
        %v1602 = vld [vmem:[%s611 + $0x894] sm:$0xf]
        %v1603 = vld [vmem:[%s611 + $0x898] sm:$0xf]
        %v1604 = vld [vmem:[%s611 + $0x89c] sm:$0xf]
        %v1605 = vld [vmem:[%s611 + $0x8a0] sm:$0xf]
        %v1606 = vld [vmem:[%s611 + $0x8a4] sm:$0xf]
        %v1607 = vld [vmem:[%s611 + $0x8a8] sm:$0xf]
        %v1608 = vld [vmem:[%s611 + $0x8ac] sm:$0xf]
        %v1609 = vld [vmem:[%s611 + $0x8b0] sm:$0xf]
        %v1610 = vld [vmem:[%s611 + $0x8b4] sm:$0xf]
        %v1611 = vld [vmem:[%s611 + $0x8b8] sm:$0xf]
        %v1612 = vld [vmem:[%s611 + $0x8bc] sm:$0xf]
        %v1613 = vld [vmem:[%s611 + $0x8c0] sm:$0xf]
        %v1614 = vld [vmem:[%s611 + $0x8c4] sm:$0xf]
        %v1615 = vld [vmem:[%s611 + $0x8c8] sm:$0xf]
        %v1616 = vld [vmem:[%s611 + $0x8cc] sm:$0xf]
        %v1617 = vld [vmem:[%s611 + $0x8d0] sm:$0xf]
        %v1618 = vld [vmem:[%s611 + $0x8d4] sm:$0xf]
        %v1619 = vld [vmem:[%s611 + $0x8d8] sm:$0xf]
        %v1620 = vld [vmem:[%s611 + $0x8dc] sm:$0xf]
        %v1621 = vld [vmem:[%s611 + $0x8e0] sm:$0xf]
        %v1622 = vld [vmem:[%s611 + $0x8e4] sm:$0xf]
        %v1623 = vld [vmem:[%s611 + $0x8e8] sm:$0xf]
        %v1624 = vld [vmem:[%s611 + $0x8ec] sm:$0xf]
        %v1625 = vld [vmem:[%s611 + $0x8f0] sm:$0xf]
        %v1626 = vld [vmem:[%s611 + $0x8f4] sm:$0xf]
        %v1627 = vld [vmem:[%s611 + $0x8f8] sm:$0xf]
        %v1628 = vld [vmem:[%s611 + $0x8fc] sm:$0xf]
        %v1629 = vld [vmem:[%s611 + $0x900] sm:$0xf]
        %v1630 = vld [vmem:[%s611 + $0x904] sm:$0xf]
        %v1631 = vld [vmem:[%s611 + $0x908] sm:$0xf]
        %v1632 = vld [vmem:[%s611 + $0x90c] sm:$0xf]
        %v1633 = vld [vmem:[%s611 + $0x910] sm:$0xf]
        %v1634 = vld [vmem:[%s611 + $0x914] sm:$0xf]
        %v1635 = vld [vmem:[%s611 + $0x918] sm:$0xf]
        %v1636 = vld [vmem:[%s611 + $0x91c] sm:$0xf]
        %v1637 = vld [vmem:[%s611 + $0x920] sm:$0xf]
        %v1638 = vld [vmem:[%s611 + $0x924] sm:$0xf]
        %v1639 = vld [vmem:[%s611 + $0x928] sm:$0xf]
        %v1640 = vld [vmem:[%s611 + $0x92c] sm:$0xf]
        %v1641 = vld [vmem:[%s611 + $0x930] sm:$0xf]
        %v1642 = vld [vmem:[%s611 + $0x934] sm:$0xf]
        %v1643 = vld [vmem:[%s611 + $0x938] sm:$0xf]
        %v1644 = vld [vmem:[%s611 + $0x93c] sm:$0xf]
        %v1645 = vld [vmem:[%s611 + $0x940] sm:$0xf]
        %v1646 = vld [vmem:[%s611 + $0x944] sm:$0xf]
        %v1647 = vld [vmem:[%s611 + $0x948] sm:$0xf]
        %v1648 = vld [vmem:[%s611 + $0x94c] sm:$0xf]
        %v1649 = vld [vmem:[%s611 + $0x950] sm:$0xf]
        %v1650 = vld [vmem:[%s611 + $0x954] sm:$0xf]
        %v1651 = vld [vmem:[%s611 + $0x958] sm:$0xf]
        %v1652 = vld [vmem:[%s611 + $0x95c] sm:$0xf]
        %v1653 = vld [vmem:[%s611 + $0x960] sm:$0xf]
        %v1654 = vld [vmem:[%s611 + $0x964] sm:$0xf]
        %v1655 = vld [vmem:[%s611 + $0x968] sm:$0xf]
        %v1656 = vld [vmem:[%s611 + $0x96c] sm:$0xf]
        %v1657 = vld [vmem:[%s611 + $0x970] sm:$0xf]
        %v1658 = vld [vmem:[%s611 + $0x974] sm:$0xf]
        %v1659 = vld [vmem:[%s611 + $0x978] sm:$0xf]
        %v1660 = vld [vmem:[%s611 + $0x97c] sm:$0xf]
        %v1661 = vld [vmem:[%s611 + $0x980] sm:$0xf]
        %v1662 = vld [vmem:[%s611 + $0x984] sm:$0xf]
        %v1663 = vld [vmem:[%s611 + $0x988] sm:$0xf]
        %v1664 = vld [vmem:[%s611 + $0x98c] sm:$0xf]
        %v1665 = vld [vmem:[%s611 + $0x990] sm:$0xf]
        %v1666 = vld [vmem:[%s611 + $0x994] sm:$0xf]
        %v1667 = vld [vmem:[%s611 + $0x998] sm:$0xf]
        %v1668 = vld [vmem:[%s611 + $0x99c] sm:$0xf]
        %v1669 = vld [vmem:[%s611 + $0x9a0] sm:$0xf]
        %v1670 = vld [vmem:[%s611 + $0x9a4] sm:$0xf]
        %v1671 = vld [vmem:[%s611 + $0x9a8] sm:$0xf]
        %v1672 = vld [vmem:[%s611 + $0x9ac] sm:$0xf]
        %v1673 = vld [vmem:[%s611 + $0x9b0] sm:$0xf]
        %v1674 = vld [vmem:[%s611 + $0x9b4] sm:$0xf]
        %v1675 = vld [vmem:[%s611 + $0x9b8] sm:$0xf]
        %v1676 = vld [vmem:[%s611 + $0x9bc] sm:$0xf]
        %v1677 = vld [vmem:[%s611 + $0x9c0] sm:$0xf]
        %v1678 = vld [vmem:[%s611 + $0x9c4] sm:$0xf]
        %v1679 = vld [vmem:[%s611 + $0x9c8] sm:$0xf]
        %v1680 = vld [vmem:[%s611 + $0x9cc] sm:$0xf]
        %v1681 = vld [vmem:[%s611 + $0x9d0] sm:$0xf]
        %v1682 = vld [vmem:[%s611 + $0x9d4] sm:$0xf]
        %v1683 = vld [vmem:[%s611 + $0x9d8] sm:$0xf]
        %v1684 = vld [vmem:[%s611 + $0x9dc] sm:$0xf]
        %v1685 = vld [vmem:[%s611 + $0x9e0] sm:$0xf]
        %v1686 = vld [vmem:[%s611 + $0x9e4] sm:$0xf]
        %v1687 = vld [vmem:[%s611 + $0x9e8] sm:$0xf]
        %v1688 = vld [vmem:[%s611 + $0x9ec] sm:$0xf]
        %v1689 = vld [vmem:[%s611 + $0x9f0] sm:$0xf]
        %v1690 = vld [vmem:[%s611 + $0x9f4] sm:$0xf]
        %v1691 = vld [vmem:[%s611 + $0x9f8] sm:$0xf]
        %v1692 = vld [vmem:[%s611 + $0x9fc] sm:$0xf]
        %v1693 = vld [vmem:[%s611 + $0xa00] sm:$0xf]
        %v1694 = vld [vmem:[%s611 + $0xa04] sm:$0xf]
        %v1695 = vld [vmem:[%s611 + $0xa08] sm:$0xf]
        %v1696 = vld [vmem:[%s611 + $0xa0c] sm:$0xf]
        %v1697 = vld [vmem:[%s611 + $0xa10] sm:$0xf]
        %v1698 = vld [vmem:[%s611 + $0xa14] sm:$0xf]
        %v1699 = vld [vmem:[%s611 + $0xa18] sm:$0xf]
        %v1700 = vld [vmem:[%s611 + $0xa1c] sm:$0xf]
        %v1701 = vld [vmem:[%s611 + $0xa20] sm:$0xf]
        %v1702 = vld [vmem:[%s611 + $0xa24] sm:$0xf]
        %v1703 = vld [vmem:[%s611 + $0xa28] sm:$0xf]
        %v1704 = vld [vmem:[%s611 + $0xa2c] sm:$0xf]
        %v1705 = vld [vmem:[%s611 + $0xa30] sm:$0xf]
        %v1706 = vld [vmem:[%s611 + $0xa34] sm:$0xf]
        %v1707 = vld [vmem:[%s611 + $0xa38] sm:$0xf]
        %v1708 = vld [vmem:[%s611 + $0xa3c] sm:$0xf]
        %v1709 = vld [vmem:[%s611 + $0xa40] sm:$0xf]
        %v1710 = vld [vmem:[%s611 + $0xa44] sm:$0xf]
        %v1711 = vld [vmem:[%s611 + $0xa48] sm:$0xf]
        %v1712 = vld [vmem:[%s611 + $0xa4c] sm:$0xf]
        %v1713 = vld [vmem:[%s611 + $0xa50] sm:$0xf]
        %v1714 = vld [vmem:[%s611 + $0xa54] sm:$0xf]
        %v1715 = vld [vmem:[%s611 + $0xa58] sm:$0xf]
        %v1716 = vld [vmem:[%s611 + $0xa5c] sm:$0xf]
        %v1717 = vld [vmem:[%s611 + $0xa60] sm:$0xf]
        %v1718 = vld [vmem:[%s611 + $0xa64] sm:$0xf]
        %v1719 = vld [vmem:[%s611 + $0xa68] sm:$0xf]
        %v1720 = vld [vmem:[%s611 + $0xa6c] sm:$0xf]
        %v1721 = vld [vmem:[%s611 + $0xa70] sm:$0xf]
        %v1722 = vld [vmem:[%s611 + $0xa74] sm:$0xf]
        %v1723 = vld [vmem:[%s611 + $0xa78] sm:$0xf]
        %v1724 = vld [vmem:[%s611 + $0xa7c] sm:$0xf]
        %v1725 = vld [vmem:[%s611 + $0xa80] sm:$0xf]
        %v1726 = vld [vmem:[%s611 + $0xa84] sm:$0xf]
        %v1727 = vld [vmem:[%s611 + $0xa88] sm:$0xf]
        %v1728 = vld [vmem:[%s611 + $0xa8c] sm:$0xf]
        %v1729 = vld [vmem:[%s611 + $0xa90] sm:$0xf]
        %v1730 = vld [vmem:[%s611 + $0xa94] sm:$0xf]
        %v1731 = vld [vmem:[%s611 + $0xa98] sm:$0xf]
        %v1732 = vld [vmem:[%s611 + $0xa9c] sm:$0xf]
        %v1733 = vld [vmem:[%s611 + $0xaa0] sm:$0xf]
        %v1734 = vld [vmem:[%s611 + $0xaa4] sm:$0xf]
        %v1735 = vld [vmem:[%s611 + $0xaa8] sm:$0xf]
        %v1736 = vld [vmem:[%s611 + $0xaac] sm:$0xf]
        %v1737 = vld [vmem:[%s611 + $0xab0] sm:$0xf]
        %v1738 = vld [vmem:[%s611 + $0xab4] sm:$0xf]
        %v1739 = vld [vmem:[%s611 + $0xab8] sm:$0xf]
        %v1740 = vld [vmem:[%s611 + $0xabc] sm:$0xf]
        %v1741 = vld [vmem:[%s611 + $0xac0] sm:$0xf]
        %v1742 = vld [vmem:[%s611 + $0xac4] sm:$0xf]
        %v1743 = vld [vmem:[%s611 + $0xac8] sm:$0xf]
        %v1744 = vld [vmem:[%s611 + $0xacc] sm:$0xf]
        %v1745 = vld [vmem:[%s611 + $0xad0] sm:$0xf]
        %v1746 = vld [vmem:[%s611 + $0xad4] sm:$0xf]
        %v1747 = vld [vmem:[%s611 + $0xad8] sm:$0xf]
        %v1748 = vld [vmem:[%s611 + $0xadc] sm:$0xf]
        %v1749 = vld [vmem:[%s611 + $0xae0] sm:$0xf]
        %v1750 = vld [vmem:[%s611 + $0xae4] sm:$0xf]
        %v1751 = vld [vmem:[%s611 + $0xae8] sm:$0xf]
        %v1752 = vld [vmem:[%s611 + $0xaec] sm:$0xf]
        %v1753 = vld [vmem:[%s611 + $0xaf0] sm:$0xf]
        %v1754 = vld [vmem:[%s611 + $0xaf4] sm:$0xf]
        %v1755 = vld [vmem:[%s611 + $0xaf8] sm:$0xf]
        %v1756 = vld [vmem:[%s611 + $0xafc] sm:$0xf]
        %v1757 = vld [vmem:[%s611 + $0xb00] sm:$0xf]
        %v1758 = vld [vmem:[%s611 + $0xb04] sm:$0xf]
        %v1759 = vld [vmem:[%s611 + $0xb08] sm:$0xf]
        %v1760 = vld [vmem:[%s611 + $0xb0c] sm:$0xf]
        %v1761 = vld [vmem:[%s611 + $0xb10] sm:$0xf]
        %v1762 = vld [vmem:[%s611 + $0xb14] sm:$0xf]
        %v1763 = vld [vmem:[%s611 + $0xb18] sm:$0xf]
        %v1764 = vld [vmem:[%s611 + $0xb1c] sm:$0xf]
        %v1765 = vld [vmem:[%s611 + $0xb20] sm:$0xf]
        %v1766 = vld [vmem:[%s611 + $0xb24] sm:$0xf]
        %v1767 = vld [vmem:[%s611 + $0xb28] sm:$0xf]
        %v1768 = vld [vmem:[%s611 + $0xb2c] sm:$0xf]
        %v1769 = vld [vmem:[%s611 + $0xb30] sm:$0xf]
        %v1770 = vld [vmem:[%s611 + $0xb34] sm:$0xf]
        %v1771 = vld [vmem:[%s611 + $0xb38] sm:$0xf]
        %v1772 = vld [vmem:[%s611 + $0xb3c] sm:$0xf]
        %v1773 = vld [vmem:[%s611 + $0xb40] sm:$0xf]
        %v1774 = vld [vmem:[%s611 + $0xb44] sm:$0xf]
        %v1775 = vld [vmem:[%s611 + $0xb48] sm:$0xf]
        %v1776 = vld [vmem:[%s611 + $0xb4c] sm:$0xf]
        %v1777 = vld [vmem:[%s611 + $0xb50] sm:$0xf]
        %v1778 = vld [vmem:[%s611 + $0xb54] sm:$0xf]
        %v1779 = vld [vmem:[%s611 + $0xb58] sm:$0xf]
        %v1780 = vld [vmem:[%s611 + $0xb5c] sm:$0xf]
        %v1781 = vld [vmem:[%s611 + $0xb60] sm:$0xf]
        %v1782 = vld [vmem:[%s611 + $0xb64] sm:$0xf]
        %v1783 = vld [vmem:[%s611 + $0xb68] sm:$0xf]
        %v1784 = vld [vmem:[%s611 + $0xb6c] sm:$0xf]
        %v1785 = vld [vmem:[%s611 + $0xb70] sm:$0xf]
        %v1786 = vld [vmem:[%s611 + $0xb74] sm:$0xf]
        %v1787 = vld [vmem:[%s611 + $0xb78] sm:$0xf]
        %v1788 = vld [vmem:[%s611 + $0xb7c] sm:$0xf]
        %v1789 = vld [vmem:[%s611 + $0xb80] sm:$0xf]
        %v1790 = vld [vmem:[%s611 + $0xb84] sm:$0xf]
        %v1791 = vld [vmem:[%s611 + $0xb88] sm:$0xf]
        %v1792 = vld [vmem:[%s611 + $0xb8c] sm:$0xf]
        %v1793 = vld [vmem:[%s611 + $0xb90] sm:$0xf]
        %v1794 = vld [vmem:[%s611 + $0xb94] sm:$0xf]
        %v1795 = vld [vmem:[%s611 + $0xb98] sm:$0xf]
        %v1796 = vld [vmem:[%s611 + $0xb9c] sm:$0xf]
        %v1797 = vld [vmem:[%s611 + $0xba0] sm:$0xf]
        %v1798 = vld [vmem:[%s611 + $0xba4] sm:$0xf]
        %v1799 = vld [vmem:[%s611 + $0xba8] sm:$0xf]
        %v1800 = vld [vmem:[%s611 + $0xbac] sm:$0xf]
        %v1801 = vld [vmem:[%s611 + $0xbb0] sm:$0xf]
        %v1802 = vld [vmem:[%s611 + $0xbb4] sm:$0xf]
        %v1803 = vld [vmem:[%s611 + $0xbb8] sm:$0xf]
        %v1804 = vld [vmem:[%s611 + $0xbbc] sm:$0xf]
        %v1805 = vld [vmem:[%s611 + $0xbc0] sm:$0xf]
        %v1806 = vld [vmem:[%s611 + $0xbc4] sm:$0xf]
        %v1807 = vld [vmem:[%s611 + $0xbc8] sm:$0xf]
        %v1808 = vld [vmem:[%s611 + $0xbcc] sm:$0xf]
        %v1809 = vld [vmem:[%s611 + $0xbd0] sm:$0xf]
        %v1810 = vld [vmem:[%s611 + $0xbd4] sm:$0xf]
        %v1811 = vld [vmem:[%s611 + $0xbd8] sm:$0xf]
        %v1812 = vld [vmem:[%s611 + $0xbdc] sm:$0xf]
        %v1813 = vld [vmem:[%s611 + $0xbe0] sm:$0xf]
        %v1814 = vld [vmem:[%s611 + $0xbe4] sm:$0xf]
        %v1815 = vld [vmem:[%s611 + $0xbe8] sm:$0xf]
        %v1816 = vld [vmem:[%s611 + $0xbec] sm:$0xf]
        %v1817 = vld [vmem:[%s611 + $0xbf0] sm:$0xf]
        %v1818 = vld [vmem:[%s611 + $0xbf4] sm:$0xf]
        %v1819 = vld [vmem:[%s611 + $0xbf8] sm:$0xf]
        %v1820 = vld [vmem:[%s611 + $0xbfc] sm:$0xf]
        %v1821 = vld [vmem:[%s611 + $0xc00] sm:$0xf]
        %v1822 = vld [vmem:[%s611 + $0xc04] sm:$0xf]
        %v1823 = vld [vmem:[%s611 + $0xc08] sm:$0xf]
        %v1824 = vld [vmem:[%s611 + $0xc0c] sm:$0xf]
        %v1825 = vld [vmem:[%s611 + $0xc10] sm:$0xf]
        %v1826 = vld [vmem:[%s611 + $0xc14] sm:$0xf]
        %v1827 = vld [vmem:[%s611 + $0xc18] sm:$0xf]
        %v1828 = vld [vmem:[%s611 + $0xc1c] sm:$0xf]
        %v1829 = vld [vmem:[%s611 + $0xc20] sm:$0xf]
        %v1830 = vld [vmem:[%s611 + $0xc24] sm:$0xf]
        %v1831 = vld [vmem:[%s611 + $0xc28] sm:$0xf]
        %v1832 = vld [vmem:[%s611 + $0xc2c] sm:$0xf]
        %v1833 = vld [vmem:[%s611 + $0xc30] sm:$0xf]
        %v1834 = vld [vmem:[%s611 + $0xc34] sm:$0xf]
        %v1835 = vld [vmem:[%s611 + $0xc38] sm:$0xf]
        %v1836 = vld [vmem:[%s611 + $0xc3c] sm:$0xf]
        %v1837 = vld [vmem:[%s611 + $0xc40] sm:$0xf]
        %v1838 = vld [vmem:[%s611 + $0xc44] sm:$0xf]
        %v1839 = vld [vmem:[%s611 + $0xc48] sm:$0xf]
        %v1840 = vld [vmem:[%s611 + $0xc4c] sm:$0xf]
        %v1841 = vld [vmem:[%s611 + $0xc50] sm:$0xf]
        %v1842 = vld [vmem:[%s611 + $0xc54] sm:$0xf]
        %v1843 = vld [vmem:[%s611 + $0xc58] sm:$0xf]
        %v1844 = vld [vmem:[%s611 + $0xc5c] sm:$0xf]
        %v1845 = vld [vmem:[%s611 + $0xc60] sm:$0xf]
        %v1846 = vld [vmem:[%s611 + $0xc64] sm:$0xf]
        %v1847 = vld [vmem:[%s611 + $0xc68] sm:$0xf]
        %v1848 = vld [vmem:[%s611 + $0xc6c] sm:$0xf]
        %v1849 = vld [vmem:[%s611 + $0xc70] sm:$0xf]
        %v1850 = vld [vmem:[%s611 + $0xc74] sm:$0xf]
        %v1851 = vld [vmem:[%s611 + $0xc78] sm:$0xf]
        %v1852 = vld [vmem:[%s611 + $0xc7c] sm:$0xf]
        %v1853 = vld [vmem:[%s611 + $0xc80] sm:$0xf]
        %v1854 = vld [vmem:[%s611 + $0xc84] sm:$0xf]
        %v1855 = vld [vmem:[%s611 + $0xc88] sm:$0xf]
        %v1856 = vld [vmem:[%s611 + $0xc8c] sm:$0xf]
        %v1857 = vld [vmem:[%s611 + $0xc90] sm:$0xf]
        %v1858 = vld [vmem:[%s611 + $0xc94] sm:$0xf]
        %v1859 = vld [vmem:[%s611 + $0xc98] sm:$0xf]
        %v1860 = vld [vmem:[%s611 + $0xc9c] sm:$0xf]
        %v1861 = vld [vmem:[%s611 + $0xca0] sm:$0xf]
        %v1862 = vld [vmem:[%s611 + $0xca4] sm:$0xf]
        %v1863 = vld [vmem:[%s611 + $0xca8] sm:$0xf]
        %v1864 = vld [vmem:[%s611 + $0xcac] sm:$0xf]
        %v1865 = vld [vmem:[%s611 + $0xcb0] sm:$0xf]
        %v1866 = vld [vmem:[%s611 + $0xcb4] sm:$0xf]
        %v1867 = vld [vmem:[%s611 + $0xcb8] sm:$0xf]
        %v1868 = vld [vmem:[%s611 + $0xcbc] sm:$0xf]
        %v1869 = vld [vmem:[%s611 + $0xcc0] sm:$0xf]
        %v1870 = vld [vmem:[%s611 + $0xcc4] sm:$0xf]
        %v1871 = vld [vmem:[%s611 + $0xcc8] sm:$0xf]
        %v1872 = vld [vmem:[%s611 + $0xccc] sm:$0xf]
        %v1873 = vld [vmem:[%s611 + $0xcd0] sm:$0xf]
        %v1874 = vld [vmem:[%s611 + $0xcd4] sm:$0xf]
        %v1875 = vld [vmem:[%s611 + $0xcd8] sm:$0xf]
        %v1876 = vld [vmem:[%s611 + $0xcdc] sm:$0xf]
        %v1877 = vld [vmem:[%s611 + $0xce0] sm:$0xf]
        %v1878 = vld [vmem:[%s611 + $0xce4] sm:$0xf]
        %v1879 = vld [vmem:[%s611 + $0xce8] sm:$0xf]
        %v1880 = vld [vmem:[%s611 + $0xcec] sm:$0xf]
        %v1881 = vld [vmem:[%s611 + $0xcf0] sm:$0xf]
        %v1882 = vld [vmem:[%s611 + $0xcf4] sm:$0xf]
        %v1883 = vld [vmem:[%s611 + $0xcf8] sm:$0xf]
        %v1884 = vld [vmem:[%s611 + $0xcfc] sm:$0xf]
        %v1885 = vld [vmem:[%s611 + $0xd00] sm:$0xf]
        %v1886 = vld [vmem:[%s611 + $0xd04] sm:$0xf]
        %v1887 = vld [vmem:[%s611 + $0xd08] sm:$0xf]
        %v1888 = vld [vmem:[%s611 + $0xd0c] sm:$0xf]
        %v1889 = vld [vmem:[%s611 + $0xd10] sm:$0xf]
        %v1890 = vld [vmem:[%s611 + $0xd14] sm:$0xf]
        %v1891 = vld [vmem:[%s611 + $0xd18] sm:$0xf]
        %v1892 = vld [vmem:[%s611 + $0xd1c] sm:$0xf]
        %v1893 = vld [vmem:[%s611 + $0xd20] sm:$0xf]
        %v1894 = vld [vmem:[%s611 + $0xd24] sm:$0xf]
        %v1895 = vld [vmem:[%s611 + $0xd28] sm:$0xf]
        %v1896 = vld [vmem:[%s611 + $0xd2c] sm:$0xf]
        %v1897 = vld [vmem:[%s611 + $0xd30] sm:$0xf]
        %v1898 = vld [vmem:[%s611 + $0xd34] sm:$0xf]
        %v1899 = vld [vmem:[%s611 + $0xd38] sm:$0xf]
        %v1900 = vld [vmem:[%s611 + $0xd3c] sm:$0xf]
        %v1901 = vld [vmem:[%s611 + $0xd40] sm:$0xf]
        %v1902 = vld [vmem:[%s611 + $0xd44] sm:$0xf]
        %v1903 = vld [vmem:[%s611 + $0xd48] sm:$0xf]
        %v1904 = vld [vmem:[%s611 + $0xd4c] sm:$0xf]
        %v1905 = vld [vmem:[%s611 + $0xd50] sm:$0xf]
        %v1906 = vld [vmem:[%s611 + $0xd54] sm:$0xf]
        %v1907 = vld [vmem:[%s611 + $0xd58] sm:$0xf]
        %v1908 = vld [vmem:[%s611 + $0xd5c] sm:$0xf]
        %v1909 = vld [vmem:[%s611 + $0xd60] sm:$0xf]
        %v1910 = vld [vmem:[%s611 + $0xd64] sm:$0xf]
        %v1911 = vld [vmem:[%s611 + $0xd68] sm:$0xf]
        %v1912 = vld [vmem:[%s611 + $0xd6c] sm:$0xf]
        %v1913 = vld [vmem:[%s611 + $0xd70] sm:$0xf]
        %v1914 = vld [vmem:[%s611 + $0xd74] sm:$0xf]
        %v1915 = vld [vmem:[%s611 + $0xd78] sm:$0xf]
        %v1916 = vld [vmem:[%s611 + $0xd7c] sm:$0xf]
        %v1917 = vld [vmem:[%s611 + $0xd80] sm:$0xf]
        %v1918 = vld [vmem:[%s611 + $0xd84] sm:$0xf]
        %v1919 = vld [vmem:[%s611 + $0xd88] sm:$0xf]
        %v1920 = vld [vmem:[%s611 + $0xd8c] sm:$0xf]
        %v1921 = vld [vmem:[%s611 + $0xd90] sm:$0xf]
        %v1922 = vld [vmem:[%s611 + $0xd94] sm:$0xf]
        %v1923 = vld [vmem:[%s611 + $0xd98] sm:$0xf]
        %v1924 = vld [vmem:[%s611 + $0xd9c] sm:$0xf]
        %v1925 = vld [vmem:[%s611 + $0xda0] sm:$0xf]
        %v1926 = vld [vmem:[%s611 + $0xda4] sm:$0xf]
        %v1927 = vld [vmem:[%s611 + $0xda8] sm:$0xf]
        %v1928 = vld [vmem:[%s611 + $0xdac] sm:$0xf]
        %v1929 = vld [vmem:[%s611 + $0xdb0] sm:$0xf]
        %v1930 = vld [vmem:[%s611 + $0xdb4] sm:$0xf]
        %v1931 = vld [vmem:[%s611 + $0xdb8] sm:$0xf]
        %v1932 = vld [vmem:[%s611 + $0xdbc] sm:$0xf]
        %v1933 = vld [vmem:[%s611 + $0xdc0] sm:$0xf]
        %v1934 = vld [vmem:[%s611 + $0xdc4] sm:$0xf]
        %v1935 = vld [vmem:[%s611 + $0xdc8] sm:$0xf]
        %v1936 = vld [vmem:[%s611 + $0xdcc] sm:$0xf]
        %v1937 = vld [vmem:[%s611 + $0xdd0] sm:$0xf]
        %v1938 = vld [vmem:[%s611 + $0xdd4] sm:$0xf]
        %v1939 = vld [vmem:[%s611 + $0xdd8] sm:$0xf]
        %v1940 = vld [vmem:[%s611 + $0xddc] sm:$0xf]
        %v1941 = vld [vmem:[%s611 + $0xde0] sm:$0xf]
        %v1942 = vld [vmem:[%s611 + $0xde4] sm:$0xf]
        %v1943 = vld [vmem:[%s611 + $0xde8] sm:$0xf]
        %v1944 = vld [vmem:[%s611 + $0xdec] sm:$0xf]
        %v1945 = vld [vmem:[%s611 + $0xdf0] sm:$0xf]
        %v1946 = vld [vmem:[%s611 + $0xdf4] sm:$0xf]
        %v1947 = vld [vmem:[%s611 + $0xdf8] sm:$0xf]
        %v1948 = vld [vmem:[%s611 + $0xdfc] sm:$0xf]
        %v1949 = vld [vmem:[%s611 + $0xe00] sm:$0xf]
        %v1950 = vld [vmem:[%s611 + $0xe04] sm:$0xf]
        %v1951 = vld [vmem:[%s611 + $0xe08] sm:$0xf]
        %v1952 = vld [vmem:[%s611 + $0xe0c] sm:$0xf]
        %v1953 = vld [vmem:[%s611 + $0xe10] sm:$0xf]
        %v1954 = vld [vmem:[%s611 + $0xe14] sm:$0xf]
        %v1955 = vld [vmem:[%s611 + $0xe18] sm:$0xf]
        %v1956 = vld [vmem:[%s611 + $0xe1c] sm:$0xf]
        %v1957 = vld [vmem:[%s611 + $0xe20] sm:$0xf]
        %v1958 = vld [vmem:[%s611 + $0xe24] sm:$0xf]
        %v1959 = vld [vmem:[%s611 + $0xe28] sm:$0xf]
        %v1960 = vld [vmem:[%s611 + $0xe2c] sm:$0xf]
        %v1961 = vld [vmem:[%s611 + $0xe30] sm:$0xf]
        %v1962 = vld [vmem:[%s611 + $0xe34] sm:$0xf]
        %v1963 = vld [vmem:[%s611 + $0xe38] sm:$0xf]
        %v1964 = vld [vmem:[%s611 + $0xe3c] sm:$0xf]
        %v1965 = vld [vmem:[%s611 + $0xe40] sm:$0xf]
        %v1966 = vld [vmem:[%s611 + $0xe44] sm:$0xf]
        %v1967 = vld [vmem:[%s611 + $0xe48] sm:$0xf]
        %v1968 = vld [vmem:[%s611 + $0xe4c] sm:$0xf]
        %v1969 = vld [vmem:[%s611 + $0xe50] sm:$0xf]
        %v1970 = vld [vmem:[%s611 + $0xe54] sm:$0xf]
        %v1971 = vld [vmem:[%s611 + $0xe58] sm:$0xf]
        %v1972 = vld [vmem:[%s611 + $0xe5c] sm:$0xf]
        %v1973 = vld [vmem:[%s611 + $0xe60] sm:$0xf]
        %v1974 = vld [vmem:[%s611 + $0xe64] sm:$0xf]
        %v1975 = vld [vmem:[%s611 + $0xe68] sm:$0xf]
        %v1976 = vld [vmem:[%s611 + $0xe6c] sm:$0xf]
        %v1977 = vld [vmem:[%s611 + $0xe70] sm:$0xf]
        %v1978 = vld [vmem:[%s611 + $0xe74] sm:$0xf]
        %v1979 = vld [vmem:[%s611 + $0xe78] sm:$0xf]
        %v1980 = vld [vmem:[%s611 + $0xe7c] sm:$0xf]
        %v1981 = vld [vmem:[%s611 + $0xe80] sm:$0xf]
        %v1982 = vld [vmem:[%s611 + $0xe84] sm:$0xf]
        %v1983 = vld [vmem:[%s611 + $0xe88] sm:$0xf]
        %v1984 = vld [vmem:[%s611 + $0xe8c] sm:$0xf]
        %v1985 = vld [vmem:[%s611 + $0xe90] sm:$0xf]
        %v1986 = vld [vmem:[%s611 + $0xe94] sm:$0xf]
        %v1987 = vld [vmem:[%s611 + $0xe98] sm:$0xf]
        %v1988 = vld [vmem:[%s611 + $0xe9c] sm:$0xf]
        %v1989 = vld [vmem:[%s611 + $0xea0] sm:$0xf]
        %v1990 = vld [vmem:[%s611 + $0xea4] sm:$0xf]
        %v1991 = vld [vmem:[%s611 + $0xea8] sm:$0xf]
        %v1992 = vld [vmem:[%s611 + $0xeac] sm:$0xf]
        %v1993 = vld [vmem:[%s611 + $0xeb0] sm:$0xf]
        %v1994 = vld [vmem:[%s611 + $0xeb4] sm:$0xf]
        %v1995 = vld [vmem:[%s611 + $0xeb8] sm:$0xf]
        %v1996 = vld [vmem:[%s611 + $0xebc] sm:$0xf]
        %v1997 = vld [vmem:[%s611 + $0xec0] sm:$0xf]
        %v1998 = vld [vmem:[%s611 + $0xec4] sm:$0xf]
        %v1999 = vld [vmem:[%s611 + $0xec8] sm:$0xf]
        %v2000 = vld [vmem:[%s611 + $0xecc] sm:$0xf]
        %v2001 = vld [vmem:[%s611 + $0xed0] sm:$0xf]
        %v2002 = vld [vmem:[%s611 + $0xed4] sm:$0xf]
        %v2003 = vld [vmem:[%s611 + $0xed8] sm:$0xf]
        %v2004 = vld [vmem:[%s611 + $0xedc] sm:$0xf]
        %v2005 = vld [vmem:[%s611 + $0xee0] sm:$0xf]
        %v2006 = vld [vmem:[%s611 + $0xee4] sm:$0xf]
        %v2007 = vld [vmem:[%s611 + $0xee8] sm:$0xf]
        %v2008 = vld [vmem:[%s611 + $0xeec] sm:$0xf]
        %v2009 = vld [vmem:[%s611 + $0xef0] sm:$0xf]
        %v2010 = vld [vmem:[%s611 + $0xef4] sm:$0xf]
        %v2011 = vld [vmem:[%s611 + $0xef8] sm:$0xf]
        %v2012 = vld [vmem:[%s611 + $0xefc] sm:$0xf]
        %v2013 = vld [vmem:[%s611 + $0xf00] sm:$0xf]
        %v2014 = vld [vmem:[%s611 + $0xf04] sm:$0xf]
        %v2015 = vld [vmem:[%s611 + $0xf08] sm:$0xf]
        %v2016 = vld [vmem:[%s611 + $0xf0c] sm:$0xf]
        %v2017 = vld [vmem:[%s611 + $0xf10] sm:$0xf]
        %v2018 = vld [vmem:[%s611 + $0xf14] sm:$0xf]
        %v2019 = vld [vmem:[%s611 + $0xf18] sm:$0xf]
        %v2020 = vld [vmem:[%s611 + $0xf1c] sm:$0xf]
        %v2021 = vld [vmem:[%s611 + $0xf20] sm:$0xf]
        %v2022 = vld [vmem:[%s611 + $0xf24] sm:$0xf]
        %v2023 = vld [vmem:[%s611 + $0xf28] sm:$0xf]
        %v2024 = vld [vmem:[%s611 + $0xf2c] sm:$0xf]
        %v2025 = vld [vmem:[%s611 + $0xf30] sm:$0xf]
        %v2026 = vld [vmem:[%s611 + $0xf34] sm:$0xf]
        %v2027 = vld [vmem:[%s611 + $0xf38] sm:$0xf]
        %v2028 = vld [vmem:[%s611 + $0xf3c] sm:$0xf]
        %v2029 = vld [vmem:[%s611 + $0xf40] sm:$0xf]
        %v2030 = vld [vmem:[%s611 + $0xf44] sm:$0xf]
        %v2031 = vld [vmem:[%s611 + $0xf48] sm:$0xf]
        %v2032 = vld [vmem:[%s611 + $0xf4c] sm:$0xf]
        %v2033 = vld [vmem:[%s611 + $0xf50] sm:$0xf]
        %v2034 = vld [vmem:[%s611 + $0xf54] sm:$0xf]
        %v2035 = vld [vmem:[%s611 + $0xf58] sm:$0xf]
        %v2036 = vld [vmem:[%s611 + $0xf5c] sm:$0xf]
        %v2037 = vld [vmem:[%s611 + $0xf60] sm:$0xf]
        %v2038 = vld [vmem:[%s611 + $0xf64] sm:$0xf]
        %v2039 = vld [vmem:[%s611 + $0xf68] sm:$0xf]
        %v2040 = vld [vmem:[%s611 + $0xf6c] sm:$0xf]
        %v2041 = vld [vmem:[%s611 + $0xf70] sm:$0xf]
        %v2042 = vld [vmem:[%s611 + $0xf74] sm:$0xf]
        %v2043 = vld [vmem:[%s611 + $0xf78] sm:$0xf]
        %v2044 = vld [vmem:[%s611 + $0xf7c] sm:$0xf]
        %v2045 = vld [vmem:[%s611 + $0xf80] sm:$0xf]
        %v2046 = vld [vmem:[%s611 + $0xf84] sm:$0xf]
        %v2047 = vld [vmem:[%s611 + $0xf88] sm:$0xf]
        %v2048 = vld [vmem:[%s611 + $0xf8c] sm:$0xf]
        %v2049 = vld [vmem:[%s611 + $0xf90] sm:$0xf]
        %v2050 = vld [vmem:[%s611 + $0xf94] sm:$0xf]
        %v2051 = vld [vmem:[%s611 + $0xf98] sm:$0xf]
        %v2052 = vld [vmem:[%s611 + $0xf9c] sm:$0xf]
        %v2053 = vld [vmem:[%s611 + $0xfa0] sm:$0xf]
        %v2054 = vld [vmem:[%s611 + $0xfa4] sm:$0xf]
        %v2055 = vld [vmem:[%s611 + $0xfa8] sm:$0xf]
        %v2056 = vld [vmem:[%s611 + $0xfac] sm:$0xf]
        %v2057 = vld [vmem:[%s611 + $0xfb0] sm:$0xf]
        %v2058 = vld [vmem:[%s611 + $0xfb4] sm:$0xf]
        %v2059 = vld [vmem:[%s611 + $0xfb8] sm:$0xf]
        %v2060 = vld [vmem:[%s611 + $0xfbc] sm:$0xf]
        %v2061 = vld [vmem:[%s611 + $0xfc0] sm:$0xf]
        %v2062 = vld [vmem:[%s611 + $0xfc4] sm:$0xf]
        %v2063 = vld [vmem:[%s611 + $0xfc8] sm:$0xf]
        %v2064 = vld [vmem:[%s611 + $0xfcc] sm:$0xf]
        %v2065 = vld [vmem:[%s611 + $0xfd0] sm:$0xf]
        %v2066 = vld [vmem:[%s611 + $0xfd4] sm:$0xf]
        %v2067 = vld [vmem:[%s611 + $0xfd8] sm:$0xf]
        %v2068 = vld [vmem:[%s611 + $0xfdc] sm:$0xf]
        %v2069 = vld [vmem:[%s611 + $0xfe0] sm:$0xf]
        %v2070 = vld [vmem:[%s611 + $0xfe4] sm:$0xf]
        %v2071 = vld [vmem:[%s611 + $0xfe8] sm:$0xf]
        %v2072 = vld [vmem:[%s611 + $0xfec] sm:$0xf]
        %v2073 = vld [vmem:[%s611 + $0xff0] sm:$0xf]
        %v2074 = vld [vmem:[%s611 + $0xff4] sm:$0xf]
        %v2075 = vld [vmem:[%s611 + $0xff8] sm:$0xf]
        %v2076 = vld [vmem:[%s611 + $0xffc] sm:$0xf]
        %v3101 = vunpack.c.l.b16 %v1053
        %v3102 = vunpack.c.l.b16 %v1054
        %v3103 = vunpack.c.l.b16 %v1055
        %v3104 = vunpack.c.l.b16 %v1056
        %v3105 = vunpack.c.l.b16 %v1057
        %v3106 = vunpack.c.l.b16 %v1058
        %v3107 = vunpack.c.l.b16 %v1059
        %v3108 = vunpack.c.l.b16 %v1060
        %v3109 = vunpack.c.l.b16 %v1061
        %v3110 = vunpack.c.l.b16 %v1062
        %v3111 = vunpack.c.l.b16 %v1063
        %v3112 = vunpack.c.l.b16 %v1064
        %v3113 = vunpack.c.l.b16 %v1065
        %v3114 = vunpack.c.l.b16 %v1066
        %v3115 = vunpack.c.l.b16 %v1067
        %v3116 = vunpack.c.l.b16 %v1068
        %v3117 = vunpack.c.l.b16 %v1069
        %v3118 = vunpack.c.l.b16 %v1070
        %v3119 = vunpack.c.l.b16 %v1071
        %v3120 = vunpack.c.l.b16 %v1072
        %v3121 = vunpack.c.l.b16 %v1073
        %v3122 = vunpack.c.l.b16 %v1074
        %v3123 = vunpack.c.l.b16 %v1075
        %v3124 = vunpack.c.l.b16 %v1076
        %v3125 = vunpack.c.l.b16 %v1077
        %v3126 = vunpack.c.l.b16 %v1078
        %v3127 = vunpack.c.l.b16 %v1079
        %v3128 = vunpack.c.l.b16 %v1080
        %v3129 = vunpack.c.l.b16 %v1081
        %v3130 = vunpack.c.l.b16 %v1082
        %v3131 = vunpack.c.l.b16 %v1083
        %v3132 = vunpack.c.l.b16 %v1084
        %v3133 = vunpack.c.l.b16 %v1085
        %v3134 = vunpack.c.l.b16 %v1086
        %v3135 = vunpack.c.l.b16 %v1087
        %v3136 = vunpack.c.l.b16 %v1088
        %v3137 = vunpack.c.l.b16 %v1089
        %v3138 = vunpack.c.l.b16 %v1090
        %v3139 = vunpack.c.l.b16 %v1091
        %v3140 = vunpack.c.l.b16 %v1092
        %v3141 = vunpack.c.l.b16 %v1093
        %v3142 = vunpack.c.l.b16 %v1094
        %v3143 = vunpack.c.l.b16 %v1095
        %v3144 = vunpack.c.l.b16 %v1096
        %v3145 = vunpack.c.l.b16 %v1097
        %v3146 = vunpack.c.l.b16 %v1098
        %v3147 = vunpack.c.l.b16 %v1099
        %v3148 = vunpack.c.l.b16 %v1100
        %v3149 = vunpack.c.l.b16 %v1101
        %v3150 = vunpack.c.l.b16 %v1102
        %v3151 = vunpack.c.l.b16 %v1103
        %v3152 = vunpack.c.l.b16 %v1104
        %v3153 = vunpack.c.l.b16 %v1105
        %v3154 = vunpack.c.l.b16 %v1106
        %v3155 = vunpack.c.l.b16 %v1107
        %v3156 = vunpack.c.l.b16 %v1108
        %v3157 = vunpack.c.l.b16 %v1109
        %v3158 = vunpack.c.l.b16 %v1110
        %v3159 = vunpack.c.l.b16 %v1111
        %v3160 = vunpack.c.l.b16 %v1112
        %v3161 = vunpack.c.l.b16 %v1113
        %v3162 = vunpack.c.l.b16 %v1114
        %v3163 = vunpack.c.l.b16 %v1115
        %v3164 = vunpack.c.l.b16 %v1116
        %v3165 = vunpack.c.l.b16 %v1117
        %v3166 = vunpack.c.l.b16 %v1118
        %v3167 = vunpack.c.l.b16 %v1119
        %v3168 = vunpack.c.l.b16 %v1120
        %v3169 = vunpack.c.l.b16 %v1121
        %v3170 = vunpack.c.l.b16 %v1122
        %v3171 = vunpack.c.l.b16 %v1123
        %v3172 = vunpack.c.l.b16 %v1124
        %v3173 = vunpack.c.l.b16 %v1125
        %v3174 = vunpack.c.l.b16 %v1126
        %v3175 = vunpack.c.l.b16 %v1127
        %v3176 = vunpack.c.l.b16 %v1128
        %v3177 = vunpack.c.l.b16 %v1129
        %v3178 = vunpack.c.l.b16 %v1130
        %v3179 = vunpack.c.l.b16 %v1131
        %v3180 = vunpack.c.l.b16 %v1132
        %v3181 = vunpack.c.l.b16 %v1133
        %v3182 = vunpack.c.l.b16 %v1134
        %v3183 = vunpack.c.l.b16 %v1135
        %v3184 = vunpack.c.l.b16 %v1136
        %v3185 = vunpack.c.l.b16 %v1137
        %v3186 = vunpack.c.l.b16 %v1138
        %v3187 = vunpack.c.l.b16 %v1139
        %v3188 = vunpack.c.l.b16 %v1140
        %v3189 = vunpack.c.l.b16 %v1141
        %v3190 = vunpack.c.l.b16 %v1142
        %v3191 = vunpack.c.l.b16 %v1143
        %v3192 = vunpack.c.l.b16 %v1144
        %v3193 = vunpack.c.l.b16 %v1145
        %v3194 = vunpack.c.l.b16 %v1146
        %v3195 = vunpack.c.l.b16 %v1147
        %v3196 = vunpack.c.l.b16 %v1148
        %v3197 = vunpack.c.l.b16 %v1149
        %v3198 = vunpack.c.l.b16 %v1150
        %v3199 = vunpack.c.l.b16 %v1151
        %v3200 = vunpack.c.l.b16 %v1152
        %v3201 = vunpack.c.l.b16 %v1153
        %v3202 = vunpack.c.l.b16 %v1154
        %v3203 = vunpack.c.l.b16 %v1155
        %v3204 = vunpack.c.l.b16 %v1156
        %v3205 = vunpack.c.l.b16 %v1157
        %v3206 = vunpack.c.l.b16 %v1158
        %v3207 = vunpack.c.l.b16 %v1159
        %v3208 = vunpack.c.l.b16 %v1160
        %v3209 = vunpack.c.l.b16 %v1161
        %v3210 = vunpack.c.l.b16 %v1162
        %v3211 = vunpack.c.l.b16 %v1163
        %v3212 = vunpack.c.l.b16 %v1164
        %v3213 = vunpack.c.l.b16 %v1165
        %v3214 = vunpack.c.l.b16 %v1166
        %v3215 = vunpack.c.l.b16 %v1167
        %v3216 = vunpack.c.l.b16 %v1168
        %v3217 = vunpack.c.l.b16 %v1169
        %v3218 = vunpack.c.l.b16 %v1170
        %v3219 = vunpack.c.l.b16 %v1171
        %v3220 = vunpack.c.l.b16 %v1172
        %v3221 = vunpack.c.l.b16 %v1173
        %v3222 = vunpack.c.l.b16 %v1174
        %v3223 = vunpack.c.l.b16 %v1175
        %v3224 = vunpack.c.l.b16 %v1176
        %v3225 = vunpack.c.l.b16 %v1177
        %v3226 = vunpack.c.l.b16 %v1178
        %v3227 = vunpack.c.l.b16 %v1179
        %v3228 = vunpack.c.l.b16 %v1180
        %v3229 = vunpack.c.l.b16 %v1181
        %v3230 = vunpack.c.l.b16 %v1182
        %v3231 = vunpack.c.l.b16 %v1183
        %v3232 = vunpack.c.l.b16 %v1184
        %v3233 = vunpack.c.l.b16 %v1185
        %v3234 = vunpack.c.l.b16 %v1186
        %v3235 = vunpack.c.l.b16 %v1187
        %v3236 = vunpack.c.l.b16 %v1188
        %v3237 = vunpack.c.l.b16 %v1189
        %v3238 = vunpack.c.l.b16 %v1190
        %v3239 = vunpack.c.l.b16 %v1191
        %v3240 = vunpack.c.l.b16 %v1192
        %v3241 = vunpack.c.l.b16 %v1193
        %v3242 = vunpack.c.l.b16 %v1194
        %v3243 = vunpack.c.l.b16 %v1195
        %v3244 = vunpack.c.l.b16 %v1196
        %v3245 = vunpack.c.l.b16 %v1197
        %v3246 = vunpack.c.l.b16 %v1198
        %v3247 = vunpack.c.l.b16 %v1199
        %v3248 = vunpack.c.l.b16 %v1200
        %v3249 = vunpack.c.l.b16 %v1201
        %v3250 = vunpack.c.l.b16 %v1202
        %v3251 = vunpack.c.l.b16 %v1203
        %v3252 = vunpack.c.l.b16 %v1204
        %v3253 = vunpack.c.l.b16 %v1205
        %v3254 = vunpack.c.l.b16 %v1206
        %v3255 = vunpack.c.l.b16 %v1207
        %v3256 = vunpack.c.l.b16 %v1208
        %v3257 = vunpack.c.l.b16 %v1209
        %v3258 = vunpack.c.l.b16 %v1210
        %v3259 = vunpack.c.l.b16 %v1211
        %v3260 = vunpack.c.l.b16 %v1212
        %v3261 = vunpack.c.l.b16 %v1213
        %v3262 = vunpack.c.l.b16 %v1214
        %v3263 = vunpack.c.l.b16 %v1215
        %v3264 = vunpack.c.l.b16 %v1216
        %v3265 = vunpack.c.l.b16 %v1217
        %v3266 = vunpack.c.l.b16 %v1218
        %v3267 = vunpack.c.l.b16 %v1219
        %v3268 = vunpack.c.l.b16 %v1220
        %v3269 = vunpack.c.l.b16 %v1221
        %v3270 = vunpack.c.l.b16 %v1222
        %v3271 = vunpack.c.l.b16 %v1223
        %v3272 = vunpack.c.l.b16 %v1224
        %v3273 = vunpack.c.l.b16 %v1225
        %v3274 = vunpack.c.l.b16 %v1226
        %v3275 = vunpack.c.l.b16 %v1227
        %v3276 = vunpack.c.l.b16 %v1228
        %v3277 = vunpack.c.l.b16 %v1229
        %v3278 = vunpack.c.l.b16 %v1230
        %v3279 = vunpack.c.l.b16 %v1231
        %v3280 = vunpack.c.l.b16 %v1232
        %v3281 = vunpack.c.l.b16 %v1233
        %v3282 = vunpack.c.l.b16 %v1234
        %v3283 = vunpack.c.l.b16 %v1235
        %v3284 = vunpack.c.l.b16 %v1236
        %v3285 = vunpack.c.l.b16 %v1237
        %v3286 = vunpack.c.l.b16 %v1238
        %v3287 = vunpack.c.l.b16 %v1239
        %v3288 = vunpack.c.l.b16 %v1240
        %v3289 = vunpack.c.l.b16 %v1241
        %v3290 = vunpack.c.l.b16 %v1242
        %v3291 = vunpack.c.l.b16 %v1243
        %v3292 = vunpack.c.l.b16 %v1244
        %v3293 = vunpack.c.l.b16 %v1245
        %v3294 = vunpack.c.l.b16 %v1246
        %v3295 = vunpack.c.l.b16 %v1247
        %v3296 = vunpack.c.l.b16 %v1248
        %v3297 = vunpack.c.l.b16 %v1249
        %v3298 = vunpack.c.l.b16 %v1250
        %v3299 = vunpack.c.l.b16 %v1251
        %v3300 = vunpack.c.l.b16 %v1252
        %v3301 = vunpack.c.l.b16 %v1253
        %v3302 = vunpack.c.l.b16 %v1254
        %v3303 = vunpack.c.l.b16 %v1255
        %v3304 = vunpack.c.l.b16 %v1256
        %v3305 = vunpack.c.l.b16 %v1257
        %v3306 = vunpack.c.l.b16 %v1258
        %v3307 = vunpack.c.l.b16 %v1259
        %v3308 = vunpack.c.l.b16 %v1260
        %v3309 = vunpack.c.l.b16 %v1261
        %v3310 = vunpack.c.l.b16 %v1262
        %v3311 = vunpack.c.l.b16 %v1263
        %v3312 = vunpack.c.l.b16 %v1264
        %v3313 = vunpack.c.l.b16 %v1265
        %v3314 = vunpack.c.l.b16 %v1266
        %v3315 = vunpack.c.l.b16 %v1267
        %v3316 = vunpack.c.l.b16 %v1268
        %v3317 = vunpack.c.l.b16 %v1269
        %v3318 = vunpack.c.l.b16 %v1270
        %v3319 = vunpack.c.l.b16 %v1271
        %v3320 = vunpack.c.l.b16 %v1272
        %v3321 = vunpack.c.l.b16 %v1273
        %v3322 = vunpack.c.l.b16 %v1274
        %v3323 = vunpack.c.l.b16 %v1275
        %v3324 = vunpack.c.l.b16 %v1276
        %v3325 = vunpack.c.l.b16 %v1277
        %v3326 = vunpack.c.l.b16 %v1278
        %v3327 = vunpack.c.l.b16 %v1279
        %v3328 = vunpack.c.l.b16 %v1280
        %v3329 = vunpack.c.l.b16 %v1281
        %v3330 = vunpack.c.l.b16 %v1282
        %v3331 = vunpack.c.l.b16 %v1283
        %v3332 = vunpack.c.l.b16 %v1284
        %v3333 = vunpack.c.l.b16 %v1285
        %v3334 = vunpack.c.l.b16 %v1286
        %v3335 = vunpack.c.l.b16 %v1287
        %v3336 = vunpack.c.l.b16 %v1288
        %v3337 = vunpack.c.l.b16 %v1289
        %v3338 = vunpack.c.l.b16 %v1290
        %v3339 = vunpack.c.l.b16 %v1291
        %v3340 = vunpack.c.l.b16 %v1292
        %v3341 = vunpack.c.l.b16 %v1293
        %v3342 = vunpack.c.l.b16 %v1294
        %v3343 = vunpack.c.l.b16 %v1295
        %v3344 = vunpack.c.l.b16 %v1296
        %v3345 = vunpack.c.l.b16 %v1297
        %v3346 = vunpack.c.l.b16 %v1298
        %v3347 = vunpack.c.l.b16 %v1299
        %v3348 = vunpack.c.l.b16 %v1300
        %v3349 = vunpack.c.l.b16 %v1301
        %v3350 = vunpack.c.l.b16 %v1302
        %v3351 = vunpack.c.l.b16 %v1303
        %v3352 = vunpack.c.l.b16 %v1304
        %v3353 = vunpack.c.l.b16 %v1305
        %v3354 = vunpack.c.l.b16 %v1306
        %v3355 = vunpack.c.l.b16 %v1307
        %v3356 = vunpack.c.l.b16 %v1308
        %v3357 = vunpack.c.l.b16 %v1309
        %v3358 = vunpack.c.l.b16 %v1310
        %v3359 = vunpack.c.l.b16 %v1311
        %v3360 = vunpack.c.l.b16 %v1312
        %v3361 = vunpack.c.l.b16 %v1313
        %v3362 = vunpack.c.l.b16 %v1314
        %v3363 = vunpack.c.l.b16 %v1315
        %v3364 = vunpack.c.l.b16 %v1316
        %v3365 = vunpack.c.l.b16 %v1317
        %v3366 = vunpack.c.l.b16 %v1318
        %v3367 = vunpack.c.l.b16 %v1319
        %v3368 = vunpack.c.l.b16 %v1320
        %v3369 = vunpack.c.l.b16 %v1321
        %v3370 = vunpack.c.l.b16 %v1322
        %v3371 = vunpack.c.l.b16 %v1323
        %v3372 = vunpack.c.l.b16 %v1324
        %v3373 = vunpack.c.l.b16 %v1325
        %v3374 = vunpack.c.l.b16 %v1326
        %v3375 = vunpack.c.l.b16 %v1327
        %v3376 = vunpack.c.l.b16 %v1328
        %v3377 = vunpack.c.l.b16 %v1329
        %v3378 = vunpack.c.l.b16 %v1330
        %v3379 = vunpack.c.l.b16 %v1331
        %v3380 = vunpack.c.l.b16 %v1332
        %v3381 = vunpack.c.l.b16 %v1333
        %v3382 = vunpack.c.l.b16 %v1334
        %v3383 = vunpack.c.l.b16 %v1335
        %v3384 = vunpack.c.l.b16 %v1336
        %v3385 = vunpack.c.l.b16 %v1337
        %v3386 = vunpack.c.l.b16 %v1338
        %v3387 = vunpack.c.l.b16 %v1339
        %v3388 = vunpack.c.l.b16 %v1340
        %v3389 = vunpack.c.l.b16 %v1341
        %v3390 = vunpack.c.l.b16 %v1342
        %v3391 = vunpack.c.l.b16 %v1343
        %v3392 = vunpack.c.l.b16 %v1344
        %v3393 = vunpack.c.l.b16 %v1345
        %v3394 = vunpack.c.l.b16 %v1346
        %v3395 = vunpack.c.l.b16 %v1347
        %v3396 = vunpack.c.l.b16 %v1348
        %v3397 = vunpack.c.l.b16 %v1349
        %v3398 = vunpack.c.l.b16 %v1350
        %v3399 = vunpack.c.l.b16 %v1351
        %v3400 = vunpack.c.l.b16 %v1352
        %v3401 = vunpack.c.l.b16 %v1353
        %v3402 = vunpack.c.l.b16 %v1354
        %v3403 = vunpack.c.l.b16 %v1355
        %v3404 = vunpack.c.l.b16 %v1356
        %v3405 = vunpack.c.l.b16 %v1357
        %v3406 = vunpack.c.l.b16 %v1358
        %v3407 = vunpack.c.l.b16 %v1359
        %v3408 = vunpack.c.l.b16 %v1360
        %v3409 = vunpack.c.l.b16 %v1361
        %v3410 = vunpack.c.l.b16 %v1362
        %v3411 = vunpack.c.l.b16 %v1363
        %v3412 = vunpack.c.l.b16 %v1364
        %v3413 = vunpack.c.l.b16 %v1365
        %v3414 = vunpack.c.l.b16 %v1366
        %v3415 = vunpack.c.l.b16 %v1367
        %v3416 = vunpack.c.l.b16 %v1368
        %v3417 = vunpack.c.l.b16 %v1369
        %v3418 = vunpack.c.l.b16 %v1370
        %v3419 = vunpack.c.l.b16 %v1371
        %v3420 = vunpack.c.l.b16 %v1372
        %v3421 = vunpack.c.l.b16 %v1373
        %v3422 = vunpack.c.l.b16 %v1374
        %v3423 = vunpack.c.l.b16 %v1375
        %v3424 = vunpack.c.l.b16 %v1376
        %v3425 = vunpack.c.l.b16 %v1377
        %v3426 = vunpack.c.l.b16 %v1378
        %v3427 = vunpack.c.l.b16 %v1379
        %v3428 = vunpack.c.l.b16 %v1380
        %v3429 = vunpack.c.l.b16 %v1381
        %v3430 = vunpack.c.l.b16 %v1382
        %v3431 = vunpack.c.l.b16 %v1383
        %v3432 = vunpack.c.l.b16 %v1384
        %v3433 = vunpack.c.l.b16 %v1385
        %v3434 = vunpack.c.l.b16 %v1386
        %v3435 = vunpack.c.l.b16 %v1387
        %v3436 = vunpack.c.l.b16 %v1388
        %v3437 = vunpack.c.l.b16 %v1389
        %v3438 = vunpack.c.l.b16 %v1390
        %v3439 = vunpack.c.l.b16 %v1391
        %v3440 = vunpack.c.l.b16 %v1392
        %v3441 = vunpack.c.l.b16 %v1393
        %v3442 = vunpack.c.l.b16 %v1394
        %v3443 = vunpack.c.l.b16 %v1395
        %v3444 = vunpack.c.l.b16 %v1396
        %v3445 = vunpack.c.l.b16 %v1397
        %v3446 = vunpack.c.l.b16 %v1398
        %v3447 = vunpack.c.l.b16 %v1399
        %v3448 = vunpack.c.l.b16 %v1400
        %v3449 = vunpack.c.l.b16 %v1401
        %v3450 = vunpack.c.l.b16 %v1402
        %v3451 = vunpack.c.l.b16 %v1403
        %v3452 = vunpack.c.l.b16 %v1404
        %v3453 = vunpack.c.l.b16 %v1405
        %v3454 = vunpack.c.l.b16 %v1406
        %v3455 = vunpack.c.l.b16 %v1407
        %v3456 = vunpack.c.l.b16 %v1408
        %v3457 = vunpack.c.l.b16 %v1409
        %v3458 = vunpack.c.l.b16 %v1410
        %v3459 = vunpack.c.l.b16 %v1411
        %v3460 = vunpack.c.l.b16 %v1412
        %v3461 = vunpack.c.l.b16 %v1413
        %v3462 = vunpack.c.l.b16 %v1414
        %v3463 = vunpack.c.l.b16 %v1415
        %v3464 = vunpack.c.l.b16 %v1416
        %v3465 = vunpack.c.l.b16 %v1417
        %v3466 = vunpack.c.l.b16 %v1418
        %v3467 = vunpack.c.l.b16 %v1419
        %v3468 = vunpack.c.l.b16 %v1420
        %v3469 = vunpack.c.l.b16 %v1421
        %v3470 = vunpack.c.l.b16 %v1422
        %v3471 = vunpack.c.l.b16 %v1423
        %v3472 = vunpack.c.l.b16 %v1424
        %v3473 = vunpack.c.l.b16 %v1425
        %v3474 = vunpack.c.l.b16 %v1426
        %v3475 = vunpack.c.l.b16 %v1427
        %v3476 = vunpack.c.l.b16 %v1428
        %v3477 = vunpack.c.l.b16 %v1429
        %v3478 = vunpack.c.l.b16 %v1430
        %v3479 = vunpack.c.l.b16 %v1431
        %v3480 = vunpack.c.l.b16 %v1432
        %v3481 = vunpack.c.l.b16 %v1433
        %v3482 = vunpack.c.l.b16 %v1434
        %v3483 = vunpack.c.l.b16 %v1435
        %v3484 = vunpack.c.l.b16 %v1436
        %v3485 = vunpack.c.l.b16 %v1437
        %v3486 = vunpack.c.l.b16 %v1438
        %v3487 = vunpack.c.l.b16 %v1439
        %v3488 = vunpack.c.l.b16 %v1440
        %v3489 = vunpack.c.l.b16 %v1441
        %v3490 = vunpack.c.l.b16 %v1442
        %v3491 = vunpack.c.l.b16 %v1443
        %v3492 = vunpack.c.l.b16 %v1444
        %v3493 = vunpack.c.l.b16 %v1445
        %v3494 = vunpack.c.l.b16 %v1446
        %v3495 = vunpack.c.l.b16 %v1447
        %v3496 = vunpack.c.l.b16 %v1448
        %v3497 = vunpack.c.l.b16 %v1449
        %v3498 = vunpack.c.l.b16 %v1450
        %v3499 = vunpack.c.l.b16 %v1451
        %v3500 = vunpack.c.l.b16 %v1452
        %v3501 = vunpack.c.l.b16 %v1453
        %v3502 = vunpack.c.l.b16 %v1454
        %v3503 = vunpack.c.l.b16 %v1455
        %v3504 = vunpack.c.l.b16 %v1456
        %v3505 = vunpack.c.l.b16 %v1457
        %v3506 = vunpack.c.l.b16 %v1458
        %v3507 = vunpack.c.l.b16 %v1459
        %v3508 = vunpack.c.l.b16 %v1460
        %v3509 = vunpack.c.l.b16 %v1461
        %v3510 = vunpack.c.l.b16 %v1462
        %v3511 = vunpack.c.l.b16 %v1463
        %v3512 = vunpack.c.l.b16 %v1464
        %v3513 = vunpack.c.l.b16 %v1465
        %v3514 = vunpack.c.l.b16 %v1466
        %v3515 = vunpack.c.l.b16 %v1467
        %v3516 = vunpack.c.l.b16 %v1468
        %v3517 = vunpack.c.l.b16 %v1469
        %v3518 = vunpack.c.l.b16 %v1470
        %v3519 = vunpack.c.l.b16 %v1471
        %v3520 = vunpack.c.l.b16 %v1472
        %v3521 = vunpack.c.l.b16 %v1473
        %v3522 = vunpack.c.l.b16 %v1474
        %v3523 = vunpack.c.l.b16 %v1475
        %v3524 = vunpack.c.l.b16 %v1476
        %v3525 = vunpack.c.l.b16 %v1477
        %v3526 = vunpack.c.l.b16 %v1478
        %v3527 = vunpack.c.l.b16 %v1479
        %v3528 = vunpack.c.l.b16 %v1480
        %v3529 = vunpack.c.l.b16 %v1481
        %v3530 = vunpack.c.l.b16 %v1482
        %v3531 = vunpack.c.l.b16 %v1483
        %v3532 = vunpack.c.l.b16 %v1484
        %v3533 = vunpack.c.l.b16 %v1485
        %v3534 = vunpack.c.l.b16 %v1486
        %v3535 = vunpack.c.l.b16 %v1487
        %v3536 = vunpack.c.l.b16 %v1488
        %v3537 = vunpack.c.l.b16 %v1489
        %v3538 = vunpack.c.l.b16 %v1490
        %v3539 = vunpack.c.l.b16 %v1491
        %v3540 = vunpack.c.l.b16 %v1492
        %v3541 = vunpack.c.l.b16 %v1493
        %v3542 = vunpack.c.l.b16 %v1494
        %v3543 = vunpack.c.l.b16 %v1495
        %v3544 = vunpack.c.l.b16 %v1496
        %v3545 = vunpack.c.l.b16 %v1497
        %v3546 = vunpack.c.l.b16 %v1498
        %v3547 = vunpack.c.l.b16 %v1499
        %v3548 = vunpack.c.l.b16 %v1500
        %v3549 = vunpack.c.l.b16 %v1501
        %v3550 = vunpack.c.l.b16 %v1502
        %v3551 = vunpack.c.l.b16 %v1503
        %v3552 = vunpack.c.l.b16 %v1504
        %v3553 = vunpack.c.l.b16 %v1505
        %v3554 = vunpack.c.l.b16 %v1506
        %v3555 = vunpack.c.l.b16 %v1507
        %v3556 = vunpack.c.l.b16 %v1508
        %v3557 = vunpack.c.l.b16 %v1509
        %v3558 = vunpack.c.l.b16 %v1510
        %v3559 = vunpack.c.l.b16 %v1511
        %v3560 = vunpack.c.l.b16 %v1512
        %v3561 = vunpack.c.l.b16 %v1513
        %v3562 = vunpack.c.l.b16 %v1514
        %v3563 = vunpack.c.l.b16 %v1515
        %v3564 = vunpack.c.l.b16 %v1516
        %v3565 = vunpack.c.l.b16 %v1517
        %v3566 = vunpack.c.l.b16 %v1518
        %v3567 = vunpack.c.l.b16 %v1519
        %v3568 = vunpack.c.l.b16 %v1520
        %v3569 = vunpack.c.l.b16 %v1521
        %v3570 = vunpack.c.l.b16 %v1522
        %v3571 = vunpack.c.l.b16 %v1523
        %v3572 = vunpack.c.l.b16 %v1524
        %v3573 = vunpack.c.l.b16 %v1525
        %v3574 = vunpack.c.l.b16 %v1526
        %v3575 = vunpack.c.l.b16 %v1527
        %v3576 = vunpack.c.l.b16 %v1528
        %v3577 = vunpack.c.l.b16 %v1529
        %v3578 = vunpack.c.l.b16 %v1530
        %v3579 = vunpack.c.l.b16 %v1531
        %v3580 = vunpack.c.l.b16 %v1532
        %v3581 = vunpack.c.l.b16 %v1533
        %v3582 = vunpack.c.l.b16 %v1534
        %v3583 = vunpack.c.l.b16 %v1535
        %v3584 = vunpack.c.l.b16 %v1536
        %v3585 = vunpack.c.l.b16 %v1537
        %v3586 = vunpack.c.l.b16 %v1538
        %v3587 = vunpack.c.l.b16 %v1539
        %v3588 = vunpack.c.l.b16 %v1540
        %v3589 = vunpack.c.l.b16 %v1541
        %v3590 = vunpack.c.l.b16 %v1542
        %v3591 = vunpack.c.l.b16 %v1543
        %v3592 = vunpack.c.l.b16 %v1544
        %v3593 = vunpack.c.l.b16 %v1545
        %v3594 = vunpack.c.l.b16 %v1546
        %v3595 = vunpack.c.l.b16 %v1547
        %v3596 = vunpack.c.l.b16 %v1548
        %v3597 = vunpack.c.l.b16 %v1549
        %v3598 = vunpack.c.l.b16 %v1550
        %v3599 = vunpack.c.l.b16 %v1551
        %v3600 = vunpack.c.l.b16 %v1552
        %v3601 = vunpack.c.l.b16 %v1553
        %v3602 = vunpack.c.l.b16 %v1554
        %v3603 = vunpack.c.l.b16 %v1555
        %v3604 = vunpack.c.l.b16 %v1556
        %v3605 = vunpack.c.l.b16 %v1557
        %v3606 = vunpack.c.l.b16 %v1558
        %v3607 = vunpack.c.l.b16 %v1559
        %v3608 = vunpack.c.l.b16 %v1560
        %v3609 = vunpack.c.l.b16 %v1561
        %v3610 = vunpack.c.l.b16 %v1562
        %v3611 = vunpack.c.l.b16 %v1563
        %v3612 = vunpack.c.l.b16 %v1564
        %v3613 = vunpack.c.l.b16 %v1565
        %v3614 = vunpack.c.l.b16 %v1566
        %v3615 = vunpack.c.l.b16 %v1567
        %v3616 = vunpack.c.l.b16 %v1568
        %v3617 = vunpack.c.l.b16 %v1569
        %v3618 = vunpack.c.l.b16 %v1570
        %v3619 = vunpack.c.l.b16 %v1571
        %v3620 = vunpack.c.l.b16 %v1572
        %v3621 = vunpack.c.l.b16 %v1573
        %v3622 = vunpack.c.l.b16 %v1574
        %v3623 = vunpack.c.l.b16 %v1575
        %v3624 = vunpack.c.l.b16 %v1576
        %v3625 = vunpack.c.l.b16 %v1577
        %v3626 = vunpack.c.l.b16 %v1578
        %v3627 = vunpack.c.l.b16 %v1579
        %v3628 = vunpack.c.l.b16 %v1580
        %v3629 = vunpack.c.l.b16 %v1581
        %v3630 = vunpack.c.l.b16 %v1582
        %v3631 = vunpack.c.l.b16 %v1583
        %v3632 = vunpack.c.l.b16 %v1584
        %v3633 = vunpack.c.l.b16 %v1585
        %v3634 = vunpack.c.l.b16 %v1586
        %v3635 = vunpack.c.l.b16 %v1587
        %v3636 = vunpack.c.l.b16 %v1588
        %v3637 = vunpack.c.l.b16 %v1589
        %v3638 = vunpack.c.l.b16 %v1590
        %v3639 = vunpack.c.l.b16 %v1591
        %v3640 = vunpack.c.l.b16 %v1592
        %v3641 = vunpack.c.l.b16 %v1593
        %v3642 = vunpack.c.l.b16 %v1594
        %v3643 = vunpack.c.l.b16 %v1595
        %v3644 = vunpack.c.l.b16 %v1596
        %v3645 = vunpack.c.l.b16 %v1597
        %v3646 = vunpack.c.l.b16 %v1598
        %v3647 = vunpack.c.l.b16 %v1599
        %v3648 = vunpack.c.l.b16 %v1600
        %v3649 = vunpack.c.l.b16 %v1601
        %v3650 = vunpack.c.l.b16 %v1602
        %v3651 = vunpack.c.l.b16 %v1603
        %v3652 = vunpack.c.l.b16 %v1604
        %v3653 = vunpack.c.l.b16 %v1605
        %v3654 = vunpack.c.l.b16 %v1606
        %v3655 = vunpack.c.l.b16 %v1607
        %v3656 = vunpack.c.l.b16 %v1608
        %v3657 = vunpack.c.l.b16 %v1609
        %v3658 = vunpack.c.l.b16 %v1610
        %v3659 = vunpack.c.l.b16 %v1611
        %v3660 = vunpack.c.l.b16 %v1612
        %v3661 = vunpack.c.l.b16 %v1613
        %v3662 = vunpack.c.l.b16 %v1614
        %v3663 = vunpack.c.l.b16 %v1615
        %v3664 = vunpack.c.l.b16 %v1616
        %v3665 = vunpack.c.l.b16 %v1617
        %v3666 = vunpack.c.l.b16 %v1618
        %v3667 = vunpack.c.l.b16 %v1619
        %v3668 = vunpack.c.l.b16 %v1620
        %v3669 = vunpack.c.l.b16 %v1621
        %v3670 = vunpack.c.l.b16 %v1622
        %v3671 = vunpack.c.l.b16 %v1623
        %v3672 = vunpack.c.l.b16 %v1624
        %v3673 = vunpack.c.l.b16 %v1625
        %v3674 = vunpack.c.l.b16 %v1626
        %v3675 = vunpack.c.l.b16 %v1627
        %v3676 = vunpack.c.l.b16 %v1628
        %v3677 = vunpack.c.l.b16 %v1629
        %v3678 = vunpack.c.l.b16 %v1630
        %v3679 = vunpack.c.l.b16 %v1631
        %v3680 = vunpack.c.l.b16 %v1632
        %v3681 = vunpack.c.l.b16 %v1633
        %v3682 = vunpack.c.l.b16 %v1634
        %v3683 = vunpack.c.l.b16 %v1635
        %v3684 = vunpack.c.l.b16 %v1636
        %v3685 = vunpack.c.l.b16 %v1637
        %v3686 = vunpack.c.l.b16 %v1638
        %v3687 = vunpack.c.l.b16 %v1639
        %v3688 = vunpack.c.l.b16 %v1640
        %v3689 = vunpack.c.l.b16 %v1641
        %v3690 = vunpack.c.l.b16 %v1642
        %v3691 = vunpack.c.l.b16 %v1643
        %v3692 = vunpack.c.l.b16 %v1644
        %v3693 = vunpack.c.l.b16 %v1645
        %v3694 = vunpack.c.l.b16 %v1646
        %v3695 = vunpack.c.l.b16 %v1647
        %v3696 = vunpack.c.l.b16 %v1648
        %v3697 = vunpack.c.l.b16 %v1649
        %v3698 = vunpack.c.l.b16 %v1650
        %v3699 = vunpack.c.l.b16 %v1651
        %v3700 = vunpack.c.l.b16 %v1652
        %v3701 = vunpack.c.l.b16 %v1653
        %v3702 = vunpack.c.l.b16 %v1654
        %v3703 = vunpack.c.l.b16 %v1655
        %v3704 = vunpack.c.l.b16 %v1656
        %v3705 = vunpack.c.l.b16 %v1657
        %v3706 = vunpack.c.l.b16 %v1658
        %v3707 = vunpack.c.l.b16 %v1659
        %v3708 = vunpack.c.l.b16 %v1660
        %v3709 = vunpack.c.l.b16 %v1661
        %v3710 = vunpack.c.l.b16 %v1662
        %v3711 = vunpack.c.l.b16 %v1663
        %v3712 = vunpack.c.l.b16 %v1664
        %v3713 = vunpack.c.l.b16 %v1665
        %v3714 = vunpack.c.l.b16 %v1666
        %v3715 = vunpack.c.l.b16 %v1667
        %v3716 = vunpack.c.l.b16 %v1668
        %v3717 = vunpack.c.l.b16 %v1669
        %v3718 = vunpack.c.l.b16 %v1670
        %v3719 = vunpack.c.l.b16 %v1671
        %v3720 = vunpack.c.l.b16 %v1672
        %v3721 = vunpack.c.l.b16 %v1673
        %v3722 = vunpack.c.l.b16 %v1674
        %v3723 = vunpack.c.l.b16 %v1675
        %v3724 = vunpack.c.l.b16 %v1676
        %v3725 = vunpack.c.l.b16 %v1677
        %v3726 = vunpack.c.l.b16 %v1678
        %v3727 = vunpack.c.l.b16 %v1679
        %v3728 = vunpack.c.l.b16 %v1680
        %v3729 = vunpack.c.l.b16 %v1681
        %v3730 = vunpack.c.l.b16 %v1682
        %v3731 = vunpack.c.l.b16 %v1683
        %v3732 = vunpack.c.l.b16 %v1684
        %v3733 = vunpack.c.l.b16 %v1685
        %v3734 = vunpack.c.l.b16 %v1686
        %v3735 = vunpack.c.l.b16 %v1687
        %v3736 = vunpack.c.l.b16 %v1688
        %v3737 = vunpack.c.l.b16 %v1689
        %v3738 = vunpack.c.l.b16 %v1690
        %v3739 = vunpack.c.l.b16 %v1691
        %v3740 = vunpack.c.l.b16 %v1692
        %v3741 = vunpack.c.l.b16 %v1693
        %v3742 = vunpack.c.l.b16 %v1694
        %v3743 = vunpack.c.l.b16 %v1695
        %v3744 = vunpack.c.l.b16 %v1696
        %v3745 = vunpack.c.l.b16 %v1697
        %v3746 = vunpack.c.l.b16 %v1698
        %v3747 = vunpack.c.l.b16 %v1699
        %v3748 = vunpack.c.l.b16 %v1700
        %v3749 = vunpack.c.l.b16 %v1701
        %v3750 = vunpack.c.l.b16 %v1702
        %v3751 = vunpack.c.l.b16 %v1703
        %v3752 = vunpack.c.l.b16 %v1704
        %v3753 = vunpack.c.l.b16 %v1705
        %v3754 = vunpack.c.l.b16 %v1706
        %v3755 = vunpack.c.l.b16 %v1707
        %v3756 = vunpack.c.l.b16 %v1708
        %v3757 = vunpack.c.l.b16 %v1709
        %v3758 = vunpack.c.l.b16 %v1710
        %v3759 = vunpack.c.l.b16 %v1711
        %v3760 = vunpack.c.l.b16 %v1712
        %v3761 = vunpack.c.l.b16 %v1713
        %v3762 = vunpack.c.l.b16 %v1714
        %v3763 = vunpack.c.l.b16 %v1715
        %v3764 = vunpack.c.l.b16 %v1716
        %v3765 = vunpack.c.l.b16 %v1717
        %v3766 = vunpack.c.l.b16 %v1718
        %v3767 = vunpack.c.l.b16 %v1719
        %v3768 = vunpack.c.l.b16 %v1720
        %v3769 = vunpack.c.l.b16 %v1721
        %v3770 = vunpack.c.l.b16 %v1722
        %v3771 = vunpack.c.l.b16 %v1723
        %v3772 = vunpack.c.l.b16 %v1724
        %v3773 = vunpack.c.l.b16 %v1725
        %v3774 = vunpack.c.l.b16 %v1726
        %v3775 = vunpack.c.l.b16 %v1727
        %v3776 = vunpack.c.l.b16 %v1728
        %v3777 = vunpack.c.l.b16 %v1729
        %v3778 = vunpack.c.l.b16 %v1730
        %v3779 = vunpack.c.l.b16 %v1731
        %v3780 = vunpack.c.l.b16 %v1732
        %v3781 = vunpack.c.l.b16 %v1733
        %v3782 = vunpack.c.l.b16 %v1734
        %v3783 = vunpack.c.l.b16 %v1735
        %v3784 = vunpack.c.l.b16 %v1736
        %v3785 = vunpack.c.l.b16 %v1737
        %v3786 = vunpack.c.l.b16 %v1738
        %v3787 = vunpack.c.l.b16 %v1739
        %v3788 = vunpack.c.l.b16 %v1740
        %v3789 = vunpack.c.l.b16 %v1741
        %v3790 = vunpack.c.l.b16 %v1742
        %v3791 = vunpack.c.l.b16 %v1743
        %v3792 = vunpack.c.l.b16 %v1744
        %v3793 = vunpack.c.l.b16 %v1745
        %v3794 = vunpack.c.l.b16 %v1746
        %v3795 = vunpack.c.l.b16 %v1747
        %v3796 = vunpack.c.l.b16 %v1748
        %v3797 = vunpack.c.l.b16 %v1749
        %v3798 = vunpack.c.l.b16 %v1750
        %v3799 = vunpack.c.l.b16 %v1751
        %v3800 = vunpack.c.l.b16 %v1752
        %v3801 = vunpack.c.l.b16 %v1753
        %v3802 = vunpack.c.l.b16 %v1754
        %v3803 = vunpack.c.l.b16 %v1755
        %v3804 = vunpack.c.l.b16 %v1756
        %v3805 = vunpack.c.l.b16 %v1757
        %v3806 = vunpack.c.l.b16 %v1758
        %v3807 = vunpack.c.l.b16 %v1759
        %v3808 = vunpack.c.l.b16 %v1760
        %v3809 = vunpack.c.l.b16 %v1761
        %v3810 = vunpack.c.l.b16 %v1762
        %v3811 = vunpack.c.l.b16 %v1763
        %v3812 = vunpack.c.l.b16 %v1764
        %v3813 = vunpack.c.l.b16 %v1765
        %v3814 = vunpack.c.l.b16 %v1766
        %v3815 = vunpack.c.l.b16 %v1767
        %v3816 = vunpack.c.l.b16 %v1768
        %v3817 = vunpack.c.l.b16 %v1769
        %v3818 = vunpack.c.l.b16 %v1770
        %v3819 = vunpack.c.l.b16 %v1771
        %v3820 = vunpack.c.l.b16 %v1772
        %v3821 = vunpack.c.l.b16 %v1773
        %v3822 = vunpack.c.l.b16 %v1774
        %v3823 = vunpack.c.l.b16 %v1775
        %v3824 = vunpack.c.l.b16 %v1776
        %v3825 = vunpack.c.l.b16 %v1777
        %v3826 = vunpack.c.l.b16 %v1778
        %v3827 = vunpack.c.l.b16 %v1779
        %v3828 = vunpack.c.l.b16 %v1780
        %v3829 = vunpack.c.l.b16 %v1781
        %v3830 = vunpack.c.l.b16 %v1782
        %v3831 = vunpack.c.l.b16 %v1783
        %v3832 = vunpack.c.l.b16 %v1784
        %v3833 = vunpack.c.l.b16 %v1785
        %v3834 = vunpack.c.l.b16 %v1786
        %v3835 = vunpack.c.l.b16 %v1787
        %v3836 = vunpack.c.l.b16 %v1788
        %v3837 = vunpack.c.l.b16 %v1789
        %v3838 = vunpack.c.l.b16 %v1790
        %v3839 = vunpack.c.l.b16 %v1791
        %v3840 = vunpack.c.l.b16 %v1792
        %v3841 = vunpack.c.l.b16 %v1793
        %v3842 = vunpack.c.l.b16 %v1794
        %v3843 = vunpack.c.l.b16 %v1795
        %v3844 = vunpack.c.l.b16 %v1796
        %v3845 = vunpack.c.l.b16 %v1797
        %v3846 = vunpack.c.l.b16 %v1798
        %v3847 = vunpack.c.l.b16 %v1799
        %v3848 = vunpack.c.l.b16 %v1800
        %v3849 = vunpack.c.l.b16 %v1801
        %v3850 = vunpack.c.l.b16 %v1802
        %v3851 = vunpack.c.l.b16 %v1803
        %v3852 = vunpack.c.l.b16 %v1804
        %v3853 = vunpack.c.l.b16 %v1805
        %v3854 = vunpack.c.l.b16 %v1806
        %v3855 = vunpack.c.l.b16 %v1807
        %v3856 = vunpack.c.l.b16 %v1808
        %v3857 = vunpack.c.l.b16 %v1809
        %v3858 = vunpack.c.l.b16 %v1810
        %v3859 = vunpack.c.l.b16 %v1811
        %v3860 = vunpack.c.l.b16 %v1812
        %v3861 = vunpack.c.l.b16 %v1813
        %v3862 = vunpack.c.l.b16 %v1814
        %v3863 = vunpack.c.l.b16 %v1815
        %v3864 = vunpack.c.l.b16 %v1816
        %v3865 = vunpack.c.l.b16 %v1817
        %v3866 = vunpack.c.l.b16 %v1818
        %v3867 = vunpack.c.l.b16 %v1819
        %v3868 = vunpack.c.l.b16 %v1820
        %v3869 = vunpack.c.l.b16 %v1821
        %v3870 = vunpack.c.l.b16 %v1822
        %v3871 = vunpack.c.l.b16 %v1823
        %v3872 = vunpack.c.l.b16 %v1824
        %v3873 = vunpack.c.l.b16 %v1825
        %v3874 = vunpack.c.l.b16 %v1826
        %v3875 = vunpack.c.l.b16 %v1827
        %v3876 = vunpack.c.l.b16 %v1828
        %v3877 = vunpack.c.l.b16 %v1829
        %v3878 = vunpack.c.l.b16 %v1830
        %v3879 = vunpack.c.l.b16 %v1831
        %v3880 = vunpack.c.l.b16 %v1832
        %v3881 = vunpack.c.l.b16 %v1833
        %v3882 = vunpack.c.l.b16 %v1834
        %v3883 = vunpack.c.l.b16 %v1835
        %v3884 = vunpack.c.l.b16 %v1836
        %v3885 = vunpack.c.l.b16 %v1837
        %v3886 = vunpack.c.l.b16 %v1838
        %v3887 = vunpack.c.l.b16 %v1839
        %v3888 = vunpack.c.l.b16 %v1840
        %v3889 = vunpack.c.l.b16 %v1841
        %v3890 = vunpack.c.l.b16 %v1842
        %v3891 = vunpack.c.l.b16 %v1843
        %v3892 = vunpack.c.l.b16 %v1844
        %v3893 = vunpack.c.l.b16 %v1845
        %v3894 = vunpack.c.l.b16 %v1846
        %v3895 = vunpack.c.l.b16 %v1847
        %v3896 = vunpack.c.l.b16 %v1848
        %v3897 = vunpack.c.l.b16 %v1849
        %v3898 = vunpack.c.l.b16 %v1850
        %v3899 = vunpack.c.l.b16 %v1851
        %v3900 = vunpack.c.l.b16 %v1852
        %v3901 = vunpack.c.l.b16 %v1853
        %v3902 = vunpack.c.l.b16 %v1854
        %v3903 = vunpack.c.l.b16 %v1855
        %v3904 = vunpack.c.l.b16 %v1856
        %v3905 = vunpack.c.l.b16 %v1857
        %v3906 = vunpack.c.l.b16 %v1858
        %v3907 = vunpack.c.l.b16 %v1859
        %v3908 = vunpack.c.l.b16 %v1860
        %v3909 = vunpack.c.l.b16 %v1861
        %v3910 = vunpack.c.l.b16 %v1862
        %v3911 = vunpack.c.l.b16 %v1863
        %v3912 = vunpack.c.l.b16 %v1864
        %v3913 = vunpack.c.l.b16 %v1865
        %v3914 = vunpack.c.l.b16 %v1866
        %v3915 = vunpack.c.l.b16 %v1867
        %v3916 = vunpack.c.l.b16 %v1868
        %v3917 = vunpack.c.l.b16 %v1869
        %v3918 = vunpack.c.l.b16 %v1870
        %v3919 = vunpack.c.l.b16 %v1871
        %v3920 = vunpack.c.l.b16 %v1872
        %v3921 = vunpack.c.l.b16 %v1873
        %v3922 = vunpack.c.l.b16 %v1874
        %v3923 = vunpack.c.l.b16 %v1875
        %v3924 = vunpack.c.l.b16 %v1876
        %v3925 = vunpack.c.l.b16 %v1877
        %v3926 = vunpack.c.l.b16 %v1878
        %v3927 = vunpack.c.l.b16 %v1879
        %v3928 = vunpack.c.l.b16 %v1880
        %v3929 = vunpack.c.l.b16 %v1881
        %v3930 = vunpack.c.l.b16 %v1882
        %v3931 = vunpack.c.l.b16 %v1883
        %v3932 = vunpack.c.l.b16 %v1884
        %v3933 = vunpack.c.l.b16 %v1885
        %v3934 = vunpack.c.l.b16 %v1886
        %v3935 = vunpack.c.l.b16 %v1887
        %v3936 = vunpack.c.l.b16 %v1888
        %v3937 = vunpack.c.l.b16 %v1889
        %v3938 = vunpack.c.l.b16 %v1890
        %v3939 = vunpack.c.l.b16 %v1891
        %v3940 = vunpack.c.l.b16 %v1892
        %v3941 = vunpack.c.l.b16 %v1893
        %v3942 = vunpack.c.l.b16 %v1894
        %v3943 = vunpack.c.l.b16 %v1895
        %v3944 = vunpack.c.l.b16 %v1896
        %v3945 = vunpack.c.l.b16 %v1897
        %v3946 = vunpack.c.l.b16 %v1898
        %v3947 = vunpack.c.l.b16 %v1899
        %v3948 = vunpack.c.l.b16 %v1900
        %v3949 = vunpack.c.l.b16 %v1901
        %v3950 = vunpack.c.l.b16 %v1902
        %v3951 = vunpack.c.l.b16 %v1903
        %v3952 = vunpack.c.l.b16 %v1904
        %v3953 = vunpack.c.l.b16 %v1905
        %v3954 = vunpack.c.l.b16 %v1906
        %v3955 = vunpack.c.l.b16 %v1907
        %v3956 = vunpack.c.l.b16 %v1908
        %v3957 = vunpack.c.l.b16 %v1909
        %v3958 = vunpack.c.l.b16 %v1910
        %v3959 = vunpack.c.l.b16 %v1911
        %v3960 = vunpack.c.l.b16 %v1912
        %v3961 = vunpack.c.l.b16 %v1913
        %v3962 = vunpack.c.l.b16 %v1914
        %v3963 = vunpack.c.l.b16 %v1915
        %v3964 = vunpack.c.l.b16 %v1916
        %v3965 = vunpack.c.l.b16 %v1917
        %v3966 = vunpack.c.l.b16 %v1918
        %v3967 = vunpack.c.l.b16 %v1919
        %v3968 = vunpack.c.l.b16 %v1920
        %v3969 = vunpack.c.l.b16 %v1921
        %v3970 = vunpack.c.l.b16 %v1922
        %v3971 = vunpack.c.l.b16 %v1923
        %v3972 = vunpack.c.l.b16 %v1924
        %v3973 = vunpack.c.l.b16 %v1925
        %v3974 = vunpack.c.l.b16 %v1926
        %v3975 = vunpack.c.l.b16 %v1927
        %v3976 = vunpack.c.l.b16 %v1928
        %v3977 = vunpack.c.l.b16 %v1929
        %v3978 = vunpack.c.l.b16 %v1930
        %v3979 = vunpack.c.l.b16 %v1931
        %v3980 = vunpack.c.l.b16 %v1932
        %v3981 = vunpack.c.l.b16 %v1933
        %v3982 = vunpack.c.l.b16 %v1934
        %v3983 = vunpack.c.l.b16 %v1935
        %v3984 = vunpack.c.l.b16 %v1936
        %v3985 = vunpack.c.l.b16 %v1937
        %v3986 = vunpack.c.l.b16 %v1938
        %v3987 = vunpack.c.l.b16 %v1939
        %v3988 = vunpack.c.l.b16 %v1940
        %v3989 = vunpack.c.l.b16 %v1941
        %v3990 = vunpack.c.l.b16 %v1942
        %v3991 = vunpack.c.l.b16 %v1943
        %v3992 = vunpack.c.l.b16 %v1944
        %v3993 = vunpack.c.l.b16 %v1945
        %v3994 = vunpack.c.l.b16 %v1946
        %v3995 = vunpack.c.l.b16 %v1947
        %v3996 = vunpack.c.l.b16 %v1948
        %v3997 = vunpack.c.l.b16 %v1949
        %v3998 = vunpack.c.l.b16 %v1950
        %v3999 = vunpack.c.l.b16 %v1951
        %v4000 = vunpack.c.l.b16 %v1952
        %v4001 = vunpack.c.l.b16 %v1953
        %v4002 = vunpack.c.l.b16 %v1954
        %v4003 = vunpack.c.l.b16 %v1955
        %v4004 = vunpack.c.l.b16 %v1956
        %v4005 = vunpack.c.l.b16 %v1957
        %v4006 = vunpack.c.l.b16 %v1958
        %v4007 = vunpack.c.l.b16 %v1959
        %v4008 = vunpack.c.l.b16 %v1960
        %v4009 = vunpack.c.l.b16 %v1961
        %v4010 = vunpack.c.l.b16 %v1962
        %v4011 = vunpack.c.l.b16 %v1963
        %v4012 = vunpack.c.l.b16 %v1964
        %v4013 = vunpack.c.l.b16 %v1965
        %v4014 = vunpack.c.l.b16 %v1966
        %v4015 = vunpack.c.l.b16 %v1967
        %v4016 = vunpack.c.l.b16 %v1968
        %v4017 = vunpack.c.l.b16 %v1969
        %v4018 = vunpack.c.l.b16 %v1970
        %v4019 = vunpack.c.l.b16 %v1971
        %v4020 = vunpack.c.l.b16 %v1972
        %v4021 = vunpack.c.l.b16 %v1973
        %v4022 = vunpack.c.l.b16 %v1974
        %v4023 = vunpack.c.l.b16 %v1975
        %v4024 = vunpack.c.l.b16 %v1976
        %v4025 = vunpack.c.l.b16 %v1977
        %v4026 = vunpack.c.l.b16 %v1978
        %v4027 = vunpack.c.l.b16 %v1979
        %v4028 = vunpack.c.l.b16 %v1980
        %v4029 = vunpack.c.l.b16 %v1981
        %v4030 = vunpack.c.l.b16 %v1982
        %v4031 = vunpack.c.l.b16 %v1983
        %v4032 = vunpack.c.l.b16 %v1984
        %v4033 = vunpack.c.l.b16 %v1985
        %v4034 = vunpack.c.l.b16 %v1986
        %v4035 = vunpack.c.l.b16 %v1987
        %v4036 = vunpack.c.l.b16 %v1988
        %v4037 = vunpack.c.l.b16 %v1989
        %v4038 = vunpack.c.l.b16 %v1990
        %v4039 = vunpack.c.l.b16 %v1991
        %v4040 = vunpack.c.l.b16 %v1992
        %v4041 = vunpack.c.l.b16 %v1993
        %v4042 = vunpack.c.l.b16 %v1994
        %v4043 = vunpack.c.l.b16 %v1995
        %v4044 = vunpack.c.l.b16 %v1996
        %v4045 = vunpack.c.l.b16 %v1997
        %v4046 = vunpack.c.l.b16 %v1998
        %v4047 = vunpack.c.l.b16 %v1999
        %v4048 = vunpack.c.l.b16 %v2000
        %v4049 = vunpack.c.l.b16 %v2001
        %v4050 = vunpack.c.l.b16 %v2002
        %v4051 = vunpack.c.l.b16 %v2003
        %v4052 = vunpack.c.l.b16 %v2004
        %v4053 = vunpack.c.l.b16 %v2005
        %v4054 = vunpack.c.l.b16 %v2006
        %v4055 = vunpack.c.l.b16 %v2007
        %v4056 = vunpack.c.l.b16 %v2008
        %v4057 = vunpack.c.l.b16 %v2009
        %v4058 = vunpack.c.l.b16 %v2010
        %v4059 = vunpack.c.l.b16 %v2011
        %v4060 = vunpack.c.l.b16 %v2012
        %v4061 = vunpack.c.l.b16 %v2013
        %v4062 = vunpack.c.l.b16 %v2014
        %v4063 = vunpack.c.l.b16 %v2015
        %v4064 = vunpack.c.l.b16 %v2016
        %v4065 = vunpack.c.l.b16 %v2017
        %v4066 = vunpack.c.l.b16 %v2018
        %v4067 = vunpack.c.l.b16 %v2019
        %v4068 = vunpack.c.l.b16 %v2020
        %v4069 = vunpack.c.l.b16 %v2021
        %v4070 = vunpack.c.l.b16 %v2022
        %v4071 = vunpack.c.l.b16 %v2023
        %v4072 = vunpack.c.l.b16 %v2024
        %v4073 = vunpack.c.l.b16 %v2025
        %v4074 = vunpack.c.l.b16 %v2026
        %v4075 = vunpack.c.l.b16 %v2027
        %v4076 = vunpack.c.l.b16 %v2028
        %v4077 = vunpack.c.l.b16 %v2029
        %v4078 = vunpack.c.l.b16 %v2030
        %v4079 = vunpack.c.l.b16 %v2031
        %v4080 = vunpack.c.l.b16 %v2032
        %v4081 = vunpack.c.l.b16 %v2033
        %v4082 = vunpack.c.l.b16 %v2034
        %v4083 = vunpack.c.l.b16 %v2035
        %v4084 = vunpack.c.l.b16 %v2036
        %v4085 = vunpack.c.l.b16 %v2037
        %v4086 = vunpack.c.l.b16 %v2038
        %v4087 = vunpack.c.l.b16 %v2039
        %v4088 = vunpack.c.l.b16 %v2040
        %v4089 = vunpack.c.l.b16 %v2041
        %v4090 = vunpack.c.l.b16 %v2042
        %v4091 = vunpack.c.l.b16 %v2043
        %v4092 = vunpack.c.l.b16 %v2044
        %v4093 = vunpack.c.l.b16 %v2045
        %v4094 = vunpack.c.l.b16 %v2046
        %v4095 = vunpack.c.l.b16 %v2047
        %v4096 = vunpack.c.l.b16 %v2048
        %v4097 = vunpack.c.l.b16 %v2049
        %v4098 = vunpack.c.l.b16 %v2050
        %v4099 = vunpack.c.l.b16 %v2051
        %v4100 = vunpack.c.l.b16 %v2052
        %v4101 = vunpack.c.l.b16 %v2053
        %v4102 = vunpack.c.l.b16 %v2054
        %v4103 = vunpack.c.l.b16 %v2055
        %v4104 = vunpack.c.l.b16 %v2056
        %v4105 = vunpack.c.l.b16 %v2057
        %v4106 = vunpack.c.l.b16 %v2058
        %v4107 = vunpack.c.l.b16 %v2059
        %v4108 = vunpack.c.l.b16 %v2060
        %v4109 = vunpack.c.l.b16 %v2061
        %v4110 = vunpack.c.l.b16 %v2062
        %v4111 = vunpack.c.l.b16 %v2063
        %v4112 = vunpack.c.l.b16 %v2064
        %v4113 = vunpack.c.l.b16 %v2065
        %v4114 = vunpack.c.l.b16 %v2066
        %v4115 = vunpack.c.l.b16 %v2067
        %v4116 = vunpack.c.l.b16 %v2068
        %v4117 = vunpack.c.l.b16 %v2069
        %v4118 = vunpack.c.l.b16 %v2070
        %v4119 = vunpack.c.l.b16 %v2071
        %v4120 = vunpack.c.l.b16 %v2072
        %v4121 = vunpack.c.l.b16 %v2073
        %v4122 = vunpack.c.l.b16 %v2074
        %v4123 = vunpack.c.l.b16 %v2075
        %v4124 = vunpack.c.l.b16 %v2076
        %v4125 = vpack.c.b16 %v3102, %v3101
        %v4126 = vpack.c.b16 %v3104, %v3103
        %v4127 = vpack.c.b16 %v3106, %v3105
        %v4128 = vpack.c.b16 %v3108, %v3107
        %v4129 = vpack.c.b16 %v3110, %v3109
        %v4130 = vpack.c.b16 %v3112, %v3111
        %v4131 = vpack.c.b16 %v3114, %v3113
        %v4132 = vpack.c.b16 %v3116, %v3115
        %v4133 = vpack.c.b16 %v3118, %v3117
        %v4134 = vpack.c.b16 %v3120, %v3119
        %v4135 = vpack.c.b16 %v3122, %v3121
        %v4136 = vpack.c.b16 %v3124, %v3123
        %v4137 = vpack.c.b16 %v3126, %v3125
        %v4138 = vpack.c.b16 %v3128, %v3127
        %v4139 = vpack.c.b16 %v3130, %v3129
        %v4140 = vpack.c.b16 %v3132, %v3131
        %v4141 = vpack.c.b16 %v3134, %v3133
        %v4142 = vpack.c.b16 %v3136, %v3135
        %v4143 = vpack.c.b16 %v3138, %v3137
        %v4144 = vpack.c.b16 %v3140, %v3139
        %v4145 = vpack.c.b16 %v3142, %v3141
        %v4146 = vpack.c.b16 %v3144, %v3143
        %v4147 = vpack.c.b16 %v3146, %v3145
        %v4148 = vpack.c.b16 %v3148, %v3147
        %v4149 = vpack.c.b16 %v3150, %v3149
        %v4150 = vpack.c.b16 %v3152, %v3151
        %v4151 = vpack.c.b16 %v3154, %v3153
        %v4152 = vpack.c.b16 %v3156, %v3155
        %v4153 = vpack.c.b16 %v3158, %v3157
        %v4154 = vpack.c.b16 %v3160, %v3159
        %v4155 = vpack.c.b16 %v3162, %v3161
        %v4156 = vpack.c.b16 %v3164, %v3163
        %v4157 = vpack.c.b16 %v3166, %v3165
        %v4158 = vpack.c.b16 %v3168, %v3167
        %v4159 = vpack.c.b16 %v3170, %v3169
        %v4160 = vpack.c.b16 %v3172, %v3171
        %v4161 = vpack.c.b16 %v3174, %v3173
        %v4162 = vpack.c.b16 %v3176, %v3175
        %v4163 = vpack.c.b16 %v3178, %v3177
        %v4164 = vpack.c.b16 %v3180, %v3179
        %v4165 = vpack.c.b16 %v3182, %v3181
        %v4166 = vpack.c.b16 %v3184, %v3183
        %v4167 = vpack.c.b16 %v3186, %v3185
        %v4168 = vpack.c.b16 %v3188, %v3187
        %v4169 = vpack.c.b16 %v3190, %v3189
        %v4170 = vpack.c.b16 %v3192, %v3191
        %v4171 = vpack.c.b16 %v3194, %v3193
        %v4172 = vpack.c.b16 %v3196, %v3195
        %v4173 = vpack.c.b16 %v3198, %v3197
        %v4174 = vpack.c.b16 %v3200, %v3199
        %v4175 = vpack.c.b16 %v3202, %v3201
        %v4176 = vpack.c.b16 %v3204, %v3203
        %v4177 = vpack.c.b16 %v3206, %v3205
        %v4178 = vpack.c.b16 %v3208, %v3207
        %v4179 = vpack.c.b16 %v3210, %v3209
        %v4180 = vpack.c.b16 %v3212, %v3211
        %v4181 = vpack.c.b16 %v3214, %v3213
        %v4182 = vpack.c.b16 %v3216, %v3215
        %v4183 = vpack.c.b16 %v3218, %v3217
        %v4184 = vpack.c.b16 %v3220, %v3219
        %v4185 = vpack.c.b16 %v3222, %v3221
        %v4186 = vpack.c.b16 %v3224, %v3223
        %v4187 = vpack.c.b16 %v3226, %v3225
        %v4188 = vpack.c.b16 %v3228, %v3227
        %v4189 = vpack.c.b16 %v3230, %v3229
        %v4190 = vpack.c.b16 %v3232, %v3231
        %v4191 = vpack.c.b16 %v3234, %v3233
        %v4192 = vpack.c.b16 %v3236, %v3235
        %v4193 = vpack.c.b16 %v3238, %v3237
        %v4194 = vpack.c.b16 %v3240, %v3239
        %v4195 = vpack.c.b16 %v3242, %v3241
        %v4196 = vpack.c.b16 %v3244, %v3243
        %v4197 = vpack.c.b16 %v3246, %v3245
        %v4198 = vpack.c.b16 %v3248, %v3247
        %v4199 = vpack.c.b16 %v3250, %v3249
        %v4200 = vpack.c.b16 %v3252, %v3251
        %v4201 = vpack.c.b16 %v3254, %v3253
        %v4202 = vpack.c.b16 %v3256, %v3255
        %v4203 = vpack.c.b16 %v3258, %v3257
        %v4204 = vpack.c.b16 %v3260, %v3259
        %v4205 = vpack.c.b16 %v3262, %v3261
        %v4206 = vpack.c.b16 %v3264, %v3263
        %v4207 = vpack.c.b16 %v3266, %v3265
        %v4208 = vpack.c.b16 %v3268, %v3267
        %v4209 = vpack.c.b16 %v3270, %v3269
        %v4210 = vpack.c.b16 %v3272, %v3271
        %v4211 = vpack.c.b16 %v3274, %v3273
        %v4212 = vpack.c.b16 %v3276, %v3275
        %v4213 = vpack.c.b16 %v3278, %v3277
        %v4214 = vpack.c.b16 %v3280, %v3279
        %v4215 = vpack.c.b16 %v3282, %v3281
        %v4216 = vpack.c.b16 %v3284, %v3283
        %v4217 = vpack.c.b16 %v3286, %v3285
        %v4218 = vpack.c.b16 %v3288, %v3287
        %v4219 = vpack.c.b16 %v3290, %v3289
        %v4220 = vpack.c.b16 %v3292, %v3291
        %v4221 = vpack.c.b16 %v3294, %v3293
        %v4222 = vpack.c.b16 %v3296, %v3295
        %v4223 = vpack.c.b16 %v3298, %v3297
        %v4224 = vpack.c.b16 %v3300, %v3299
        %v4225 = vpack.c.b16 %v3302, %v3301
        %v4226 = vpack.c.b16 %v3304, %v3303
        %v4227 = vpack.c.b16 %v3306, %v3305
        %v4228 = vpack.c.b16 %v3308, %v3307
        %v4229 = vpack.c.b16 %v3310, %v3309
        %v4230 = vpack.c.b16 %v3312, %v3311
        %v4231 = vpack.c.b16 %v3314, %v3313
        %v4232 = vpack.c.b16 %v3316, %v3315
        %v4233 = vpack.c.b16 %v3318, %v3317
        %v4234 = vpack.c.b16 %v3320, %v3319
        %v4235 = vpack.c.b16 %v3322, %v3321
        %v4236 = vpack.c.b16 %v3324, %v3323
        %v4237 = vpack.c.b16 %v3326, %v3325
        %v4238 = vpack.c.b16 %v3328, %v3327
        %v4239 = vpack.c.b16 %v3330, %v3329
        %v4240 = vpack.c.b16 %v3332, %v3331
        %v4241 = vpack.c.b16 %v3334, %v3333
        %v4242 = vpack.c.b16 %v3336, %v3335
        %v4243 = vpack.c.b16 %v3338, %v3337
        %v4244 = vpack.c.b16 %v3340, %v3339
        %v4245 = vpack.c.b16 %v3342, %v3341
        %v4246 = vpack.c.b16 %v3344, %v3343
        %v4247 = vpack.c.b16 %v3346, %v3345
        %v4248 = vpack.c.b16 %v3348, %v3347
        %v4249 = vpack.c.b16 %v3350, %v3349
        %v4250 = vpack.c.b16 %v3352, %v3351
        %v4251 = vpack.c.b16 %v3354, %v3353
        %v4252 = vpack.c.b16 %v3356, %v3355
        %v4253 = vpack.c.b16 %v3358, %v3357
        %v4254 = vpack.c.b16 %v3360, %v3359
        %v4255 = vpack.c.b16 %v3362, %v3361
        %v4256 = vpack.c.b16 %v3364, %v3363
        %v4257 = vpack.c.b16 %v3366, %v3365
        %v4258 = vpack.c.b16 %v3368, %v3367
        %v4259 = vpack.c.b16 %v3370, %v3369
        %v4260 = vpack.c.b16 %v3372, %v3371
        %v4261 = vpack.c.b16 %v3374, %v3373
        %v4262 = vpack.c.b16 %v3376, %v3375
        %v4263 = vpack.c.b16 %v3378, %v3377
        %v4264 = vpack.c.b16 %v3380, %v3379
        %v4265 = vpack.c.b16 %v3382, %v3381
        %v4266 = vpack.c.b16 %v3384, %v3383
        %v4267 = vpack.c.b16 %v3386, %v3385
        %v4268 = vpack.c.b16 %v3388, %v3387
        %v4269 = vpack.c.b16 %v3390, %v3389
        %v4270 = vpack.c.b16 %v3392, %v3391
        %v4271 = vpack.c.b16 %v3394, %v3393
        %v4272 = vpack.c.b16 %v3396, %v3395
        %v4273 = vpack.c.b16 %v3398, %v3397
        %v4274 = vpack.c.b16 %v3400, %v3399
        %v4275 = vpack.c.b16 %v3402, %v3401
        %v4276 = vpack.c.b16 %v3404, %v3403
        %v4277 = vpack.c.b16 %v3406, %v3405
        %v4278 = vpack.c.b16 %v3408, %v3407
        %v4279 = vpack.c.b16 %v3410, %v3409
        %v4280 = vpack.c.b16 %v3412, %v3411
        %v4281 = vpack.c.b16 %v3414, %v3413
        %v4282 = vpack.c.b16 %v3416, %v3415
        %v4283 = vpack.c.b16 %v3418, %v3417
        %v4284 = vpack.c.b16 %v3420, %v3419
        %v4285 = vpack.c.b16 %v3422, %v3421
        %v4286 = vpack.c.b16 %v3424, %v3423
        %v4287 = vpack.c.b16 %v3426, %v3425
        %v4288 = vpack.c.b16 %v3428, %v3427
        %v4289 = vpack.c.b16 %v3430, %v3429
        %v4290 = vpack.c.b16 %v3432, %v3431
        %v4291 = vpack.c.b16 %v3434, %v3433
        %v4292 = vpack.c.b16 %v3436, %v3435
        %v4293 = vpack.c.b16 %v3438, %v3437
        %v4294 = vpack.c.b16 %v3440, %v3439
        %v4295 = vpack.c.b16 %v3442, %v3441
        %v4296 = vpack.c.b16 %v3444, %v3443
        %v4297 = vpack.c.b16 %v3446, %v3445
        %v4298 = vpack.c.b16 %v3448, %v3447
        %v4299 = vpack.c.b16 %v3450, %v3449
        %v4300 = vpack.c.b16 %v3452, %v3451
        %v4301 = vpack.c.b16 %v3454, %v3453
        %v4302 = vpack.c.b16 %v3456, %v3455
        %v4303 = vpack.c.b16 %v3458, %v3457
        %v4304 = vpack.c.b16 %v3460, %v3459
        %v4305 = vpack.c.b16 %v3462, %v3461
        %v4306 = vpack.c.b16 %v3464, %v3463
        %v4307 = vpack.c.b16 %v3466, %v3465
        %v4308 = vpack.c.b16 %v3468, %v3467
        %v4309 = vpack.c.b16 %v3470, %v3469
        %v4310 = vpack.c.b16 %v3472, %v3471
        %v4311 = vpack.c.b16 %v3474, %v3473
        %v4312 = vpack.c.b16 %v3476, %v3475
        %v4313 = vpack.c.b16 %v3478, %v3477
        %v4314 = vpack.c.b16 %v3480, %v3479
        %v4315 = vpack.c.b16 %v3482, %v3481
        %v4316 = vpack.c.b16 %v3484, %v3483
        %v4317 = vpack.c.b16 %v3486, %v3485
        %v4318 = vpack.c.b16 %v3488, %v3487
        %v4319 = vpack.c.b16 %v3490, %v3489
        %v4320 = vpack.c.b16 %v3492, %v3491
        %v4321 = vpack.c.b16 %v3494, %v3493
        %v4322 = vpack.c.b16 %v3496, %v3495
        %v4323 = vpack.c.b16 %v3498, %v3497
        %v4324 = vpack.c.b16 %v3500, %v3499
        %v4325 = vpack.c.b16 %v3502, %v3501
        %v4326 = vpack.c.b16 %v3504, %v3503
        %v4327 = vpack.c.b16 %v3506, %v3505
        %v4328 = vpack.c.b16 %v3508, %v3507
        %v4329 = vpack.c.b16 %v3510, %v3509
        %v4330 = vpack.c.b16 %v3512, %v3511
        %v4331 = vpack.c.b16 %v3514, %v3513
        %v4332 = vpack.c.b16 %v3516, %v3515
        %v4333 = vpack.c.b16 %v3518, %v3517
        %v4334 = vpack.c.b16 %v3520, %v3519
        %v4335 = vpack.c.b16 %v3522, %v3521
        %v4336 = vpack.c.b16 %v3524, %v3523
        %v4337 = vpack.c.b16 %v3526, %v3525
        %v4338 = vpack.c.b16 %v3528, %v3527
        %v4339 = vpack.c.b16 %v3530, %v3529
        %v4340 = vpack.c.b16 %v3532, %v3531
        %v4341 = vpack.c.b16 %v3534, %v3533
        %v4342 = vpack.c.b16 %v3536, %v3535
        %v4343 = vpack.c.b16 %v3538, %v3537
        %v4344 = vpack.c.b16 %v3540, %v3539
        %v4345 = vpack.c.b16 %v3542, %v3541
        %v4346 = vpack.c.b16 %v3544, %v3543
        %v4347 = vpack.c.b16 %v3546, %v3545
        %v4348 = vpack.c.b16 %v3548, %v3547
        %v4349 = vpack.c.b16 %v3550, %v3549
        %v4350 = vpack.c.b16 %v3552, %v3551
        %v4351 = vpack.c.b16 %v3554, %v3553
        %v4352 = vpack.c.b16 %v3556, %v3555
        %v4353 = vpack.c.b16 %v3558, %v3557
        %v4354 = vpack.c.b16 %v3560, %v3559
        %v4355 = vpack.c.b16 %v3562, %v3561
        %v4356 = vpack.c.b16 %v3564, %v3563
        %v4357 = vpack.c.b16 %v3566, %v3565
        %v4358 = vpack.c.b16 %v3568, %v3567
        %v4359 = vpack.c.b16 %v3570, %v3569
        %v4360 = vpack.c.b16 %v3572, %v3571
        %v4361 = vpack.c.b16 %v3574, %v3573
        %v4362 = vpack.c.b16 %v3576, %v3575
        %v4363 = vpack.c.b16 %v3578, %v3577
        %v4364 = vpack.c.b16 %v3580, %v3579
        %v4365 = vpack.c.b16 %v3582, %v3581
        %v4366 = vpack.c.b16 %v3584, %v3583
        %v4367 = vpack.c.b16 %v3586, %v3585
        %v4368 = vpack.c.b16 %v3588, %v3587
        %v4369 = vpack.c.b16 %v3590, %v3589
        %v4370 = vpack.c.b16 %v3592, %v3591
        %v4371 = vpack.c.b16 %v3594, %v3593
        %v4372 = vpack.c.b16 %v3596, %v3595
        %v4373 = vpack.c.b16 %v3598, %v3597
        %v4374 = vpack.c.b16 %v3600, %v3599
        %v4375 = vpack.c.b16 %v3602, %v3601
        %v4376 = vpack.c.b16 %v3604, %v3603
        %v4377 = vpack.c.b16 %v3606, %v3605
        %v4378 = vpack.c.b16 %v3608, %v3607
        %v4379 = vpack.c.b16 %v3610, %v3609
        %v4380 = vpack.c.b16 %v3612, %v3611
        %v4381 = vpack.c.b16 %v3614, %v3613
        %v4382 = vpack.c.b16 %v3616, %v3615
        %v4383 = vpack.c.b16 %v3618, %v3617
        %v4384 = vpack.c.b16 %v3620, %v3619
        %v4385 = vpack.c.b16 %v3622, %v3621
        %v4386 = vpack.c.b16 %v3624, %v3623
        %v4387 = vpack.c.b16 %v3626, %v3625
        %v4388 = vpack.c.b16 %v3628, %v3627
        %v4389 = vpack.c.b16 %v3630, %v3629
        %v4390 = vpack.c.b16 %v3632, %v3631
        %v4391 = vpack.c.b16 %v3634, %v3633
        %v4392 = vpack.c.b16 %v3636, %v3635
        %v4393 = vpack.c.b16 %v3638, %v3637
        %v4394 = vpack.c.b16 %v3640, %v3639
        %v4395 = vpack.c.b16 %v3642, %v3641
        %v4396 = vpack.c.b16 %v3644, %v3643
        %v4397 = vpack.c.b16 %v3646, %v3645
        %v4398 = vpack.c.b16 %v3648, %v3647
        %v4399 = vpack.c.b16 %v3650, %v3649
        %v4400 = vpack.c.b16 %v3652, %v3651
        %v4401 = vpack.c.b16 %v3654, %v3653
        %v4402 = vpack.c.b16 %v3656, %v3655
        %v4403 = vpack.c.b16 %v3658, %v3657
        %v4404 = vpack.c.b16 %v3660, %v3659
        %v4405 = vpack.c.b16 %v3662, %v3661
        %v4406 = vpack.c.b16 %v3664, %v3663
        %v4407 = vpack.c.b16 %v3666, %v3665
        %v4408 = vpack.c.b16 %v3668, %v3667
        %v4409 = vpack.c.b16 %v3670, %v3669
        %v4410 = vpack.c.b16 %v3672, %v3671
        %v4411 = vpack.c.b16 %v3674, %v3673
        %v4412 = vpack.c.b16 %v3676, %v3675
        %v4413 = vpack.c.b16 %v3678, %v3677
        %v4414 = vpack.c.b16 %v3680, %v3679
        %v4415 = vpack.c.b16 %v3682, %v3681
        %v4416 = vpack.c.b16 %v3684, %v3683
        %v4417 = vpack.c.b16 %v3686, %v3685
        %v4418 = vpack.c.b16 %v3688, %v3687
        %v4419 = vpack.c.b16 %v3690, %v3689
        %v4420 = vpack.c.b16 %v3692, %v3691
        %v4421 = vpack.c.b16 %v3694, %v3693
        %v4422 = vpack.c.b16 %v3696, %v3695
        %v4423 = vpack.c.b16 %v3698, %v3697
        %v4424 = vpack.c.b16 %v3700, %v3699
        %v4425 = vpack.c.b16 %v3702, %v3701
        %v4426 = vpack.c.b16 %v3704, %v3703
        %v4427 = vpack.c.b16 %v3706, %v3705
        %v4428 = vpack.c.b16 %v3708, %v3707
        %v4429 = vpack.c.b16 %v3710, %v3709
        %v4430 = vpack.c.b16 %v3712, %v3711
        %v4431 = vpack.c.b16 %v3714, %v3713
        %v4432 = vpack.c.b16 %v3716, %v3715
        %v4433 = vpack.c.b16 %v3718, %v3717
        %v4434 = vpack.c.b16 %v3720, %v3719
        %v4435 = vpack.c.b16 %v3722, %v3721
        %v4436 = vpack.c.b16 %v3724, %v3723
        %v4437 = vpack.c.b16 %v3726, %v3725
        %v4438 = vpack.c.b16 %v3728, %v3727
        %v4439 = vpack.c.b16 %v3730, %v3729
        %v4440 = vpack.c.b16 %v3732, %v3731
        %v4441 = vpack.c.b16 %v3734, %v3733
        %v4442 = vpack.c.b16 %v3736, %v3735
        %v4443 = vpack.c.b16 %v3738, %v3737
        %v4444 = vpack.c.b16 %v3740, %v3739
        %v4445 = vpack.c.b16 %v3742, %v3741
        %v4446 = vpack.c.b16 %v3744, %v3743
        %v4447 = vpack.c.b16 %v3746, %v3745
        %v4448 = vpack.c.b16 %v3748, %v3747
        %v4449 = vpack.c.b16 %v3750, %v3749
        %v4450 = vpack.c.b16 %v3752, %v3751
        %v4451 = vpack.c.b16 %v3754, %v3753
        %v4452 = vpack.c.b16 %v3756, %v3755
        %v4453 = vpack.c.b16 %v3758, %v3757
        %v4454 = vpack.c.b16 %v3760, %v3759
        %v4455 = vpack.c.b16 %v3762, %v3761
        %v4456 = vpack.c.b16 %v3764, %v3763
        %v4457 = vpack.c.b16 %v3766, %v3765
        %v4458 = vpack.c.b16 %v3768, %v3767
        %v4459 = vpack.c.b16 %v3770, %v3769
        %v4460 = vpack.c.b16 %v3772, %v3771
        %v4461 = vpack.c.b16 %v3774, %v3773
        %v4462 = vpack.c.b16 %v3776, %v3775
        %v4463 = vpack.c.b16 %v3778, %v3777
        %v4464 = vpack.c.b16 %v3780, %v3779
        %v4465 = vpack.c.b16 %v3782, %v3781
        %v4466 = vpack.c.b16 %v3784, %v3783
        %v4467 = vpack.c.b16 %v3786, %v3785
        %v4468 = vpack.c.b16 %v3788, %v3787
        %v4469 = vpack.c.b16 %v3790, %v3789
        %v4470 = vpack.c.b16 %v3792, %v3791
        %v4471 = vpack.c.b16 %v3794, %v3793
        %v4472 = vpack.c.b16 %v3796, %v3795
        %v4473 = vpack.c.b16 %v3798, %v3797
        %v4474 = vpack.c.b16 %v3800, %v3799
        %v4475 = vpack.c.b16 %v3802, %v3801
        %v4476 = vpack.c.b16 %v3804, %v3803
        %v4477 = vpack.c.b16 %v3806, %v3805
        %v4478 = vpack.c.b16 %v3808, %v3807
        %v4479 = vpack.c.b16 %v3810, %v3809
        %v4480 = vpack.c.b16 %v3812, %v3811
        %v4481 = vpack.c.b16 %v3814, %v3813
        %v4482 = vpack.c.b16 %v3816, %v3815
        %v4483 = vpack.c.b16 %v3818, %v3817
        %v4484 = vpack.c.b16 %v3820, %v3819
        %v4485 = vpack.c.b16 %v3822, %v3821
        %v4486 = vpack.c.b16 %v3824, %v3823
        %v4487 = vpack.c.b16 %v3826, %v3825
        %v4488 = vpack.c.b16 %v3828, %v3827
        %v4489 = vpack.c.b16 %v3830, %v3829
        %v4490 = vpack.c.b16 %v3832, %v3831
        %v4491 = vpack.c.b16 %v3834, %v3833
        %v4492 = vpack.c.b16 %v3836, %v3835
        %v4493 = vpack.c.b16 %v3838, %v3837
        %v4494 = vpack.c.b16 %v3840, %v3839
        %v4495 = vpack.c.b16 %v3842, %v3841
        %v4496 = vpack.c.b16 %v3844, %v3843
        %v4497 = vpack.c.b16 %v3846, %v3845
        %v4498 = vpack.c.b16 %v3848, %v3847
        %v4499 = vpack.c.b16 %v3850, %v3849
        %v4500 = vpack.c.b16 %v3852, %v3851
        %v4501 = vpack.c.b16 %v3854, %v3853
        %v4502 = vpack.c.b16 %v3856, %v3855
        %v4503 = vpack.c.b16 %v3858, %v3857
        %v4504 = vpack.c.b16 %v3860, %v3859
        %v4505 = vpack.c.b16 %v3862, %v3861
        %v4506 = vpack.c.b16 %v3864, %v3863
        %v4507 = vpack.c.b16 %v3866, %v3865
        %v4508 = vpack.c.b16 %v3868, %v3867
        %v4509 = vpack.c.b16 %v3870, %v3869
        %v4510 = vpack.c.b16 %v3872, %v3871
        %v4511 = vpack.c.b16 %v3874, %v3873
        %v4512 = vpack.c.b16 %v3876, %v3875
        %v4513 = vpack.c.b16 %v3878, %v3877
        %v4514 = vpack.c.b16 %v3880, %v3879
        %v4515 = vpack.c.b16 %v3882, %v3881
        %v4516 = vpack.c.b16 %v3884, %v3883
        %v4517 = vpack.c.b16 %v3886, %v3885
        %v4518 = vpack.c.b16 %v3888, %v3887
        %v4519 = vpack.c.b16 %v3890, %v3889
        %v4520 = vpack.c.b16 %v3892, %v3891
        %v4521 = vpack.c.b16 %v3894, %v3893
        %v4522 = vpack.c.b16 %v3896, %v3895
        %v4523 = vpack.c.b16 %v3898, %v3897
        %v4524 = vpack.c.b16 %v3900, %v3899
        %v4525 = vpack.c.b16 %v3902, %v3901
        %v4526 = vpack.c.b16 %v3904, %v3903
        %v4527 = vpack.c.b16 %v3906, %v3905
        %v4528 = vpack.c.b16 %v3908, %v3907
        %v4529 = vpack.c.b16 %v3910, %v3909
        %v4530 = vpack.c.b16 %v3912, %v3911
        %v4531 = vpack.c.b16 %v3914, %v3913
        %v4532 = vpack.c.b16 %v3916, %v3915
        %v4533 = vpack.c.b16 %v3918, %v3917
        %v4534 = vpack.c.b16 %v3920, %v3919
        %v4535 = vpack.c.b16 %v3922, %v3921
        %v4536 = vpack.c.b16 %v3924, %v3923
        %v4537 = vpack.c.b16 %v3926, %v3925
        %v4538 = vpack.c.b16 %v3928, %v3927
        %v4539 = vpack.c.b16 %v3930, %v3929
        %v4540 = vpack.c.b16 %v3932, %v3931
        %v4541 = vpack.c.b16 %v3934, %v3933
        %v4542 = vpack.c.b16 %v3936, %v3935
        %v4543 = vpack.c.b16 %v3938, %v3937
        %v4544 = vpack.c.b16 %v3940, %v3939
        %v4545 = vpack.c.b16 %v3942, %v3941
        %v4546 = vpack.c.b16 %v3944, %v3943
        %v4547 = vpack.c.b16 %v3946, %v3945
        %v4548 = vpack.c.b16 %v3948, %v3947
        %v4549 = vpack.c.b16 %v3950, %v3949
        %v4550 = vpack.c.b16 %v3952, %v3951
        %v4551 = vpack.c.b16 %v3954, %v3953
        %v4552 = vpack.c.b16 %v3956, %v3955
        %v4553 = vpack.c.b16 %v3958, %v3957
        %v4554 = vpack.c.b16 %v3960, %v3959
        %v4555 = vpack.c.b16 %v3962, %v3961
        %v4556 = vpack.c.b16 %v3964, %v3963
        %v4557 = vpack.c.b16 %v3966, %v3965
        %v4558 = vpack.c.b16 %v3968, %v3967
        %v4559 = vpack.c.b16 %v3970, %v3969
        %v4560 = vpack.c.b16 %v3972, %v3971
        %v4561 = vpack.c.b16 %v3974, %v3973
        %v4562 = vpack.c.b16 %v3976, %v3975
        %v4563 = vpack.c.b16 %v3978, %v3977
        %v4564 = vpack.c.b16 %v3980, %v3979
        %v4565 = vpack.c.b16 %v3982, %v3981
        %v4566 = vpack.c.b16 %v3984, %v3983
        %v4567 = vpack.c.b16 %v3986, %v3985
        %v4568 = vpack.c.b16 %v3988, %v3987
        %v4569 = vpack.c.b16 %v3990, %v3989
        %v4570 = vpack.c.b16 %v3992, %v3991
        %v4571 = vpack.c.b16 %v3994, %v3993
        %v4572 = vpack.c.b16 %v3996, %v3995
        %v4573 = vpack.c.b16 %v3998, %v3997
        %v4574 = vpack.c.b16 %v4000, %v3999
        %v4575 = vpack.c.b16 %v4002, %v4001
        %v4576 = vpack.c.b16 %v4004, %v4003
        %v4577 = vpack.c.b16 %v4006, %v4005
        %v4578 = vpack.c.b16 %v4008, %v4007
        %v4579 = vpack.c.b16 %v4010, %v4009
        %v4580 = vpack.c.b16 %v4012, %v4011
        %v4581 = vpack.c.b16 %v4014, %v4013
        %v4582 = vpack.c.b16 %v4016, %v4015
        %v4583 = vpack.c.b16 %v4018, %v4017
        %v4584 = vpack.c.b16 %v4020, %v4019
        %v4585 = vpack.c.b16 %v4022, %v4021
        %v4586 = vpack.c.b16 %v4024, %v4023
        %v4587 = vpack.c.b16 %v4026, %v4025
        %v4588 = vpack.c.b16 %v4028, %v4027
        %v4589 = vpack.c.b16 %v4030, %v4029
        %v4590 = vpack.c.b16 %v4032, %v4031
        %v4591 = vpack.c.b16 %v4034, %v4033
        %v4592 = vpack.c.b16 %v4036, %v4035
        %v4593 = vpack.c.b16 %v4038, %v4037
        %v4594 = vpack.c.b16 %v4040, %v4039
        %v4595 = vpack.c.b16 %v4042, %v4041
        %v4596 = vpack.c.b16 %v4044, %v4043
        %v4597 = vpack.c.b16 %v4046, %v4045
        %v4598 = vpack.c.b16 %v4048, %v4047
        %v4599 = vpack.c.b16 %v4050, %v4049
        %v4600 = vpack.c.b16 %v4052, %v4051
        %v4601 = vpack.c.b16 %v4054, %v4053
        %v4602 = vpack.c.b16 %v4056, %v4055
        %v4603 = vpack.c.b16 %v4058, %v4057
        %v4604 = vpack.c.b16 %v4060, %v4059
        %v4605 = vpack.c.b16 %v4062, %v4061
        %v4606 = vpack.c.b16 %v4064, %v4063
        %v4607 = vpack.c.b16 %v4066, %v4065
        %v4608 = vpack.c.b16 %v4068, %v4067
        %v4609 = vpack.c.b16 %v4070, %v4069
        %v4610 = vpack.c.b16 %v4072, %v4071
        %v4611 = vpack.c.b16 %v4074, %v4073
        %v4612 = vpack.c.b16 %v4076, %v4075
        %v4613 = vpack.c.b16 %v4078, %v4077
        %v4614 = vpack.c.b16 %v4080, %v4079
        %v4615 = vpack.c.b16 %v4082, %v4081
        %v4616 = vpack.c.b16 %v4084, %v4083
        %v4617 = vpack.c.b16 %v4086, %v4085
        %v4618 = vpack.c.b16 %v4088, %v4087
        %v4619 = vpack.c.b16 %v4090, %v4089
        %v4620 = vpack.c.b16 %v4092, %v4091
        %v4621 = vpack.c.b16 %v4094, %v4093
        %v4622 = vpack.c.b16 %v4096, %v4095
        %v4623 = vpack.c.b16 %v4098, %v4097
        %v4624 = vpack.c.b16 %v4100, %v4099
        %v4625 = vpack.c.b16 %v4102, %v4101
        %v4626 = vpack.c.b16 %v4104, %v4103
        %v4627 = vpack.c.b16 %v4106, %v4105
        %v4628 = vpack.c.b16 %v4108, %v4107
        %v4629 = vpack.c.b16 %v4110, %v4109
        %v4630 = vpack.c.b16 %v4112, %v4111
        %v4631 = vpack.c.b16 %v4114, %v4113
        %v4632 = vpack.c.b16 %v4116, %v4115
        %v4633 = vpack.c.b16 %v4118, %v4117
        %v4634 = vpack.c.b16 %v4120, %v4119
        %v4635 = vpack.c.b16 %v4122, %v4121
        %v4636 = vpack.c.b16 %v4124, %v4123
        %5149 = vmatprep.subr.bf16.mxu0 0
        %5150 = vmatpush1.bf16.msra.mxu0 %v4132
        %5151 = vmatprep.subr.bf16.mxu0 0
        %5152 = vmatpush1.bf16.msra.mxu0 %v4131
        %5153 = vmatprep.subr.bf16.mxu0 0
        %5154 = vmatpush1.bf16.msra.mxu0 %v4130
        %5155 = vmatprep.subr.bf16.mxu0 0
        %5156 = vmatpush1.bf16.msra.mxu0 %v4129
        %5157 = vmatprep.subr.bf16.mxu0 0
        %5158 = vmatpush1.bf16.msra.mxu0 %v4128
        %5159 = vmatprep.subr.bf16.mxu0 0
        %5160 = vmatpush1.bf16.msra.mxu0 %v4127
        %5161 = vmatprep.subr.bf16.mxu0 0
        %5162 = vmatpush1.bf16.msra.mxu0 %v4126
        %5163 = vmatprep.subr.bf16.mxu0 0
        %5164 = vmatpush1.bf16.msra.mxu0 %v4125
        %5165 = vmatprep.subr.bf16.mxu0 0
        %5166 = vmatpush2.bf16.msra.mxu0 %v4140
        %5167 = vmatprep.subr.bf16.mxu0 0
        %5168 = vmatpush2.bf16.msra.mxu0 %v4139
        %5169 = vmatprep.subr.bf16.mxu0 0
        %5170 = vmatpush2.bf16.msra.mxu0 %v4138
        %5171 = vmatprep.subr.bf16.mxu0 0
        %5172 = vmatpush2.bf16.msra.mxu0 %v4137
        %5173 = vmatprep.subr.bf16.mxu0 0
        %5174 = vmatpush2.bf16.msra.mxu0 %v4136
        %5175 = vmatprep.subr.bf16.mxu0 0
        %5176 = vmatpush2.bf16.msra.mxu0 %v4135
        %5177 = vmatprep.subr.bf16.mxu0 0
        %5178 = vmatpush2.bf16.msra.mxu0 %v4134
        %5179 = vmatprep.subr.bf16.mxu0 0
        %5180 = vmatpush2.bf16.msra.mxu0 %v4133
        %5181 = vmatprep.mubr.bf16.mxu0 %v990
        %5182 = vmatmul.mubr.bf16.gmra.mxu0 %v989
        %v5183 = vpop.f32.mrf.mxu0
        %v5184 = vadd.f32 0.0, %v5183
        %v5185 = vpop.f32.mrf.mxu0
        %v5186 = vpop.f32.mrf.mxu0
        %v5187 = vpop.f32.mrf.mxu0
        %5188 = vdwg.mxu0
        %5189 = vmatprep.subr.bf16.mxu0 0
        %5190 = vmatpush1.bf16.msra.mxu0 %v4148
        %5191 = vmatprep.subr.bf16.mxu0 0
        %5192 = vmatpush1.bf16.msra.mxu0 %v4147
        %5193 = vmatprep.subr.bf16.mxu0 0
        %5194 = vmatpush1.bf16.msra.mxu0 %v4146
        %5195 = vmatprep.subr.bf16.mxu0 0
        %5196 = vmatpush1.bf16.msra.mxu0 %v4145
        %5197 = vmatprep.subr.bf16.mxu0 0
        %5198 = vmatpush1.bf16.msra.mxu0 %v4144
        %5199 = vmatprep.subr.bf16.mxu0 0
        %5200 = vmatpush1.bf16.msra.mxu0 %v4143
        %5201 = vmatprep.subr.bf16.mxu0 0
        %5202 = vmatpush1.bf16.msra.mxu0 %v4142
        %5203 = vmatprep.subr.bf16.mxu0 0
        %5204 = vmatpush1.bf16.msra.mxu0 %v4141
        %5205 = vmatprep.subr.bf16.mxu0 0
        %5206 = vmatpush2.bf16.msra.mxu0 %v4156
        %5207 = vmatprep.subr.bf16.mxu0 0
        %5208 = vmatpush2.bf16.msra.mxu0 %v4155
        %5209 = vmatprep.subr.bf16.mxu0 0
        %5210 = vmatpush2.bf16.msra.mxu0 %v4154
        %5211 = vmatprep.subr.bf16.mxu0 0
        %5212 = vmatpush2.bf16.msra.mxu0 %v4153
        %5213 = vmatprep.subr.bf16.mxu0 0
        %5214 = vmatpush2.bf16.msra.mxu0 %v4152
        %5215 = vmatprep.subr.bf16.mxu0 0
        %5216 = vmatpush2.bf16.msra.mxu0 %v4151
        %5217 = vmatprep.subr.bf16.mxu0 0
        %5218 = vmatpush2.bf16.msra.mxu0 %v4150
        %5219 = vmatprep.subr.bf16.mxu0 0
        %5220 = vmatpush2.bf16.msra.mxu0 %v4149
        %5221 = vmatprep.mubr.bf16.mxu0 %v992
        %5222 = vmatmul.mubr.bf16.gmra.mxu0 %v991
        %v5223 = vpop.f32.mrf.mxu0
        %v5224 = vadd.f32 %v5184, %v5223
        %v5225 = vpop.f32.mrf.mxu0
        %v5226 = vpop.f32.mrf.mxu0
        %v5227 = vpop.f32.mrf.mxu0
        %5228 = vdwg.mxu0
        %5229 = vmatprep.subr.bf16.mxu0 0
        %5230 = vmatpush1.bf16.msra.mxu0 %v4164
        %5231 = vmatprep.subr.bf16.mxu0 0
        %5232 = vmatpush1.bf16.msra.mxu0 %v4163
        %5233 = vmatprep.subr.bf16.mxu0 0
        %5234 = vmatpush1.bf16.msra.mxu0 %v4162
        %5235 = vmatprep.subr.bf16.mxu0 0
        %5236 = vmatpush1.bf16.msra.mxu0 %v4161
        %5237 = vmatprep.subr.bf16.mxu0 0
        %5238 = vmatpush1.bf16.msra.mxu0 %v4160
        %5239 = vmatprep.subr.bf16.mxu0 0
        %5240 = vmatpush1.bf16.msra.mxu0 %v4159
        %5241 = vmatprep.subr.bf16.mxu0 0
        %5242 = vmatpush1.bf16.msra.mxu0 %v4158
        %5243 = vmatprep.subr.bf16.mxu0 0
        %5244 = vmatpush1.bf16.msra.mxu0 %v4157
        %5245 = vmatprep.subr.bf16.mxu0 0
        %5246 = vmatpush2.bf16.msra.mxu0 %v4172
        %5247 = vmatprep.subr.bf16.mxu0 0
        %5248 = vmatpush2.bf16.msra.mxu0 %v4171
        %5249 = vmatprep.subr.bf16.mxu0 0
        %5250 = vmatpush2.bf16.msra.mxu0 %v4170
        %5251 = vmatprep.subr.bf16.mxu0 0
        %5252 = vmatpush2.bf16.msra.mxu0 %v4169
        %5253 = vmatprep.subr.bf16.mxu0 0
        %5254 = vmatpush2.bf16.msra.mxu0 %v4168
        %5255 = vmatprep.subr.bf16.mxu0 0
        %5256 = vmatpush2.bf16.msra.mxu0 %v4167
        %5257 = vmatprep.subr.bf16.mxu0 0
        %5258 = vmatpush2.bf16.msra.mxu0 %v4166
        %5259 = vmatprep.subr.bf16.mxu0 0
        %5260 = vmatpush2.bf16.msra.mxu0 %v4165
        %5261 = vmatprep.mubr.bf16.mxu0 %v994
        %5262 = vmatmul.mubr.bf16.gmra.mxu0 %v993
        %v5263 = vpop.f32.mrf.mxu0
        %v5264 = vadd.f32 %v5224, %v5263
        %v5265 = vpop.f32.mrf.mxu0
        %v5266 = vpop.f32.mrf.mxu0
        %v5267 = vpop.f32.mrf.mxu0
        %5268 = vdwg.mxu0
        %5269 = vmatprep.subr.bf16.mxu0 0
        %5270 = vmatpush1.bf16.msra.mxu0 %v4180
        %5271 = vmatprep.subr.bf16.mxu0 0
        %5272 = vmatpush1.bf16.msra.mxu0 %v4179
        %5273 = vmatprep.subr.bf16.mxu0 0
        %5274 = vmatpush1.bf16.msra.mxu0 %v4178
        %5275 = vmatprep.subr.bf16.mxu0 0
        %5276 = vmatpush1.bf16.msra.mxu0 %v4177
        %5277 = vmatprep.subr.bf16.mxu0 0
        %5278 = vmatpush1.bf16.msra.mxu0 %v4176
        %5279 = vmatprep.subr.bf16.mxu0 0
        %5280 = vmatpush1.bf16.msra.mxu0 %v4175
        %5281 = vmatprep.subr.bf16.mxu0 0
        %5282 = vmatpush1.bf16.msra.mxu0 %v4174
        %5283 = vmatprep.subr.bf16.mxu0 0
        %5284 = vmatpush1.bf16.msra.mxu0 %v4173
        %5285 = vmatprep.subr.bf16.mxu0 0
        %5286 = vmatpush2.bf16.msra.mxu0 %v4188
        %5287 = vmatprep.subr.bf16.mxu0 0
        %5288 = vmatpush2.bf16.msra.mxu0 %v4187
        %5289 = vmatprep.subr.bf16.mxu0 0
        %5290 = vmatpush2.bf16.msra.mxu0 %v4186
        %5291 = vmatprep.subr.bf16.mxu0 0
        %5292 = vmatpush2.bf16.msra.mxu0 %v4185
        %5293 = vmatprep.subr.bf16.mxu0 0
        %5294 = vmatpush2.bf16.msra.mxu0 %v4184
        %5295 = vmatprep.subr.bf16.mxu0 0
        %5296 = vmatpush2.bf16.msra.mxu0 %v4183
        %5297 = vmatprep.subr.bf16.mxu0 0
        %5298 = vmatpush2.bf16.msra.mxu0 %v4182
        %5299 = vmatprep.subr.bf16.mxu0 0
        %5300 = vmatpush2.bf16.msra.mxu0 %v4181
        %5301 = vmatprep.mubr.bf16.mxu0 %v996
        %5302 = vmatmul.mubr.bf16.gmra.mxu0 %v995
        %v5303 = vpop.f32.mrf.mxu0
        %v5304 = vadd.f32 %v5264, %v5303
        %v5305 = vpop.f32.mrf.mxu0
        %v5306 = vpop.f32.mrf.mxu0
        %v5307 = vpop.f32.mrf.mxu0
        %5308 = vdwg.mxu0
        %5309 = vmatprep.subr.bf16.mxu0 0
        %5310 = vmatpush1.bf16.msra.mxu0 %v4196
        %5311 = vmatprep.subr.bf16.mxu0 0
        %5312 = vmatpush1.bf16.msra.mxu0 %v4195
        %5313 = vmatprep.subr.bf16.mxu0 0
        %5314 = vmatpush1.bf16.msra.mxu0 %v4194
        %5315 = vmatprep.subr.bf16.mxu0 0
        %5316 = vmatpush1.bf16.msra.mxu0 %v4193
        %5317 = vmatprep.subr.bf16.mxu0 0
        %5318 = vmatpush1.bf16.msra.mxu0 %v4192
        %5319 = vmatprep.subr.bf16.mxu0 0
        %5320 = vmatpush1.bf16.msra.mxu0 %v4191
        %5321 = vmatprep.subr.bf16.mxu0 0
        %5322 = vmatpush1.bf16.msra.mxu0 %v4190
        %5323 = vmatprep.subr.bf16.mxu0 0
        %5324 = vmatpush1.bf16.msra.mxu0 %v4189
        %5325 = vmatprep.subr.bf16.mxu0 0
        %5326 = vmatpush2.bf16.msra.mxu0 %v4204
        %5327 = vmatprep.subr.bf16.mxu0 0
        %5328 = vmatpush2.bf16.msra.mxu0 %v4203
        %5329 = vmatprep.subr.bf16.mxu0 0
        %5330 = vmatpush2.bf16.msra.mxu0 %v4202
        %5331 = vmatprep.subr.bf16.mxu0 0
        %5332 = vmatpush2.bf16.msra.mxu0 %v4201
        %5333 = vmatprep.subr.bf16.mxu0 0
        %5334 = vmatpush2.bf16.msra.mxu0 %v4200
        %5335 = vmatprep.subr.bf16.mxu0 0
        %5336 = vmatpush2.bf16.msra.mxu0 %v4199
        %5337 = vmatprep.subr.bf16.mxu0 0
        %5338 = vmatpush2.bf16.msra.mxu0 %v4198
        %5339 = vmatprep.subr.bf16.mxu0 0
        %5340 = vmatpush2.bf16.msra.mxu0 %v4197
        %5341 = vmatprep.mubr.bf16.mxu0 %v998
        %5342 = vmatmul.mubr.bf16.gmra.mxu0 %v997
        %v5343 = vpop.f32.mrf.mxu0
        %v5344 = vadd.f32 %v5304, %v5343
        %v5345 = vpop.f32.mrf.mxu0
        %v5346 = vpop.f32.mrf.mxu0
        %v5347 = vpop.f32.mrf.mxu0
        %5348 = vdwg.mxu0
        %5349 = vmatprep.subr.bf16.mxu0 0
        %5350 = vmatpush1.bf16.msra.mxu0 %v4212
        %5351 = vmatprep.subr.bf16.mxu0 0
        %5352 = vmatpush1.bf16.msra.mxu0 %v4211
        %5353 = vmatprep.subr.bf16.mxu0 0
        %5354 = vmatpush1.bf16.msra.mxu0 %v4210
        %5355 = vmatprep.subr.bf16.mxu0 0
        %5356 = vmatpush1.bf16.msra.mxu0 %v4209
        %5357 = vmatprep.subr.bf16.mxu0 0
        %5358 = vmatpush1.bf16.msra.mxu0 %v4208
        %5359 = vmatprep.subr.bf16.mxu0 0
        %5360 = vmatpush1.bf16.msra.mxu0 %v4207
        %5361 = vmatprep.subr.bf16.mxu0 0
        %5362 = vmatpush1.bf16.msra.mxu0 %v4206
        %5363 = vmatprep.subr.bf16.mxu0 0
        %5364 = vmatpush1.bf16.msra.mxu0 %v4205
        %5365 = vmatprep.subr.bf16.mxu0 0
        %5366 = vmatpush2.bf16.msra.mxu0 %v4220
        %5367 = vmatprep.subr.bf16.mxu0 0
        %5368 = vmatpush2.bf16.msra.mxu0 %v4219
        %5369 = vmatprep.subr.bf16.mxu0 0
        %5370 = vmatpush2.bf16.msra.mxu0 %v4218
        %5371 = vmatprep.subr.bf16.mxu0 0
        %5372 = vmatpush2.bf16.msra.mxu0 %v4217
        %5373 = vmatprep.subr.bf16.mxu0 0
        %5374 = vmatpush2.bf16.msra.mxu0 %v4216
        %5375 = vmatprep.subr.bf16.mxu0 0
        %5376 = vmatpush2.bf16.msra.mxu0 %v4215
        %5377 = vmatprep.subr.bf16.mxu0 0
        %5378 = vmatpush2.bf16.msra.mxu0 %v4214
        %5379 = vmatprep.subr.bf16.mxu0 0
        %5380 = vmatpush2.bf16.msra.mxu0 %v4213
        %5381 = vmatprep.mubr.bf16.mxu0 %v1000
        %5382 = vmatmul.mubr.bf16.gmra.mxu0 %v999
        %v5383 = vpop.f32.mrf.mxu0
        %v5384 = vadd.f32 %v5344, %v5383
        %v5385 = vpop.f32.mrf.mxu0
        %v5386 = vpop.f32.mrf.mxu0
        %v5387 = vpop.f32.mrf.mxu0
        %5388 = vdwg.mxu0
        %5389 = vmatprep.subr.bf16.mxu0 0
        %5390 = vmatpush1.bf16.msra.mxu0 %v4228
        %5391 = vmatprep.subr.bf16.mxu0 0
        %5392 = vmatpush1.bf16.msra.mxu0 %v4227
        %5393 = vmatprep.subr.bf16.mxu0 0
        %5394 = vmatpush1.bf16.msra.mxu0 %v4226
        %5395 = vmatprep.subr.bf16.mxu0 0
        %5396 = vmatpush1.bf16.msra.mxu0 %v4225
        %5397 = vmatprep.subr.bf16.mxu0 0
        %5398 = vmatpush1.bf16.msra.mxu0 %v4224
        %5399 = vmatprep.subr.bf16.mxu0 0
        %5400 = vmatpush1.bf16.msra.mxu0 %v4223
        %5401 = vmatprep.subr.bf16.mxu0 0
        %5402 = vmatpush1.bf16.msra.mxu0 %v4222
        %5403 = vmatprep.subr.bf16.mxu0 0
        %5404 = vmatpush1.bf16.msra.mxu0 %v4221
        %5405 = vmatprep.subr.bf16.mxu0 0
        %5406 = vmatpush2.bf16.msra.mxu0 %v4236
        %5407 = vmatprep.subr.bf16.mxu0 0
        %5408 = vmatpush2.bf16.msra.mxu0 %v4235
        %5409 = vmatprep.subr.bf16.mxu0 0
        %5410 = vmatpush2.bf16.msra.mxu0 %v4234
        %5411 = vmatprep.subr.bf16.mxu0 0
        %5412 = vmatpush2.bf16.msra.mxu0 %v4233
        %5413 = vmatprep.subr.bf16.mxu0 0
        %5414 = vmatpush2.bf16.msra.mxu0 %v4232
        %5415 = vmatprep.subr.bf16.mxu0 0
        %5416 = vmatpush2.bf16.msra.mxu0 %v4231
        %5417 = vmatprep.subr.bf16.mxu0 0
        %5418 = vmatpush2.bf16.msra.mxu0 %v4230
        %5419 = vmatprep.subr.bf16.mxu0 0
        %5420 = vmatpush2.bf16.msra.mxu0 %v4229
        %5421 = vmatprep.mubr.bf16.mxu0 %v1002
        %5422 = vmatmul.mubr.bf16.gmra.mxu0 %v1001
        %v5423 = vpop.f32.mrf.mxu0
        %v5424 = vadd.f32 %v5384, %v5423
        %v5425 = vpop.f32.mrf.mxu0
        %v5426 = vpop.f32.mrf.mxu0
        %v5427 = vpop.f32.mrf.mxu0
        %5428 = vdwg.mxu0
        %5429 = vmatprep.subr.bf16.mxu0 0
        %5430 = vmatpush1.bf16.msra.mxu0 %v4244
        %5431 = vmatprep.subr.bf16.mxu0 0
        %5432 = vmatpush1.bf16.msra.mxu0 %v4243
        %5433 = vmatprep.subr.bf16.mxu0 0
        %5434 = vmatpush1.bf16.msra.mxu0 %v4242
        %5435 = vmatprep.subr.bf16.mxu0 0
        %5436 = vmatpush1.bf16.msra.mxu0 %v4241
        %5437 = vmatprep.subr.bf16.mxu0 0
        %5438 = vmatpush1.bf16.msra.mxu0 %v4240
        %5439 = vmatprep.subr.bf16.mxu0 0
        %5440 = vmatpush1.bf16.msra.mxu0 %v4239
        %5441 = vmatprep.subr.bf16.mxu0 0
        %5442 = vmatpush1.bf16.msra.mxu0 %v4238
        %5443 = vmatprep.subr.bf16.mxu0 0
        %5444 = vmatpush1.bf16.msra.mxu0 %v4237
        %5445 = vmatprep.subr.bf16.mxu0 0
        %5446 = vmatpush2.bf16.msra.mxu0 %v4252
        %5447 = vmatprep.subr.bf16.mxu0 0
        %5448 = vmatpush2.bf16.msra.mxu0 %v4251
        %5449 = vmatprep.subr.bf16.mxu0 0
        %5450 = vmatpush2.bf16.msra.mxu0 %v4250
        %5451 = vmatprep.subr.bf16.mxu0 0
        %5452 = vmatpush2.bf16.msra.mxu0 %v4249
        %5453 = vmatprep.subr.bf16.mxu0 0
        %5454 = vmatpush2.bf16.msra.mxu0 %v4248
        %5455 = vmatprep.subr.bf16.mxu0 0
        %5456 = vmatpush2.bf16.msra.mxu0 %v4247
        %5457 = vmatprep.subr.bf16.mxu0 0
        %5458 = vmatpush2.bf16.msra.mxu0 %v4246
        %5459 = vmatprep.subr.bf16.mxu0 0
        %5460 = vmatpush2.bf16.msra.mxu0 %v4245
        %5461 = vmatprep.mubr.bf16.mxu0 %v1004
        %5462 = vmatmul.mubr.bf16.gmra.mxu0 %v1003
        %v5463 = vpop.f32.mrf.mxu0
        %v5464 = vadd.f32 %v5424, %v5463
        %v5465 = vpop.f32.mrf.mxu0
        %v5466 = vpop.f32.mrf.mxu0
        %v5467 = vpop.f32.mrf.mxu0
        %5468 = vdwg.mxu0
        %5469 = vmatprep.subr.bf16.mxu0 0
        %5470 = vmatpush1.bf16.msra.mxu0 %v4260
        %5471 = vmatprep.subr.bf16.mxu0 0
        %5472 = vmatpush1.bf16.msra.mxu0 %v4259
        %5473 = vmatprep.subr.bf16.mxu0 0
        %5474 = vmatpush1.bf16.msra.mxu0 %v4258
        %5475 = vmatprep.subr.bf16.mxu0 0
        %5476 = vmatpush1.bf16.msra.mxu0 %v4257
        %5477 = vmatprep.subr.bf16.mxu0 0
        %5478 = vmatpush1.bf16.msra.mxu0 %v4256
        %5479 = vmatprep.subr.bf16.mxu0 0
        %5480 = vmatpush1.bf16.msra.mxu0 %v4255
        %5481 = vmatprep.subr.bf16.mxu0 0
        %5482 = vmatpush1.bf16.msra.mxu0 %v4254
        %5483 = vmatprep.subr.bf16.mxu0 0
        %5484 = vmatpush1.bf16.msra.mxu0 %v4253
        %5485 = vmatprep.subr.bf16.mxu0 0
        %5486 = vmatpush2.bf16.msra.mxu0 %v4268
        %5487 = vmatprep.subr.bf16.mxu0 0
        %5488 = vmatpush2.bf16.msra.mxu0 %v4267
        %5489 = vmatprep.subr.bf16.mxu0 0
        %5490 = vmatpush2.bf16.msra.mxu0 %v4266
        %5491 = vmatprep.subr.bf16.mxu0 0
        %5492 = vmatpush2.bf16.msra.mxu0 %v4265
        %5493 = vmatprep.subr.bf16.mxu0 0
        %5494 = vmatpush2.bf16.msra.mxu0 %v4264
        %5495 = vmatprep.subr.bf16.mxu0 0
        %5496 = vmatpush2.bf16.msra.mxu0 %v4263
        %5497 = vmatprep.subr.bf16.mxu0 0
        %5498 = vmatpush2.bf16.msra.mxu0 %v4262
        %5499 = vmatprep.subr.bf16.mxu0 0
        %5500 = vmatpush2.bf16.msra.mxu0 %v4261
        %5501 = vmatprep.mubr.bf16.mxu0 %v1006
        %5502 = vmatmul.mubr.bf16.gmra.mxu0 %v1005
        %v5503 = vpop.f32.mrf.mxu0
        %v5504 = vadd.f32 %v5464, %v5503
        %v5505 = vpop.f32.mrf.mxu0
        %v5506 = vpop.f32.mrf.mxu0
        %v5507 = vpop.f32.mrf.mxu0
        %5508 = vdwg.mxu0
        %5509 = vmatprep.subr.bf16.mxu0 0
        %5510 = vmatpush1.bf16.msra.mxu0 %v4276
        %5511 = vmatprep.subr.bf16.mxu0 0
        %5512 = vmatpush1.bf16.msra.mxu0 %v4275
        %5513 = vmatprep.subr.bf16.mxu0 0
        %5514 = vmatpush1.bf16.msra.mxu0 %v4274
        %5515 = vmatprep.subr.bf16.mxu0 0
        %5516 = vmatpush1.bf16.msra.mxu0 %v4273
        %5517 = vmatprep.subr.bf16.mxu0 0
        %5518 = vmatpush1.bf16.msra.mxu0 %v4272
        %5519 = vmatprep.subr.bf16.mxu0 0
        %5520 = vmatpush1.bf16.msra.mxu0 %v4271
        %5521 = vmatprep.subr.bf16.mxu0 0
        %5522 = vmatpush1.bf16.msra.mxu0 %v4270
        %5523 = vmatprep.subr.bf16.mxu0 0
        %5524 = vmatpush1.bf16.msra.mxu0 %v4269
        %5525 = vmatprep.subr.bf16.mxu0 0
        %5526 = vmatpush2.bf16.msra.mxu0 %v4284
        %5527 = vmatprep.subr.bf16.mxu0 0
        %5528 = vmatpush2.bf16.msra.mxu0 %v4283
        %5529 = vmatprep.subr.bf16.mxu0 0
        %5530 = vmatpush2.bf16.msra.mxu0 %v4282
        %5531 = vmatprep.subr.bf16.mxu0 0
        %5532 = vmatpush2.bf16.msra.mxu0 %v4281
        %5533 = vmatprep.subr.bf16.mxu0 0
        %5534 = vmatpush2.bf16.msra.mxu0 %v4280
        %5535 = vmatprep.subr.bf16.mxu0 0
        %5536 = vmatpush2.bf16.msra.mxu0 %v4279
        %5537 = vmatprep.subr.bf16.mxu0 0
        %5538 = vmatpush2.bf16.msra.mxu0 %v4278
        %5539 = vmatprep.subr.bf16.mxu0 0
        %5540 = vmatpush2.bf16.msra.mxu0 %v4277
        %5541 = vmatprep.mubr.bf16.mxu0 %v1008
        %5542 = vmatmul.mubr.bf16.gmra.mxu0 %v1007
        %v5543 = vpop.f32.mrf.mxu0
        %v5544 = vadd.f32 %v5504, %v5543
        %v5545 = vpop.f32.mrf.mxu0
        %v5546 = vpop.f32.mrf.mxu0
        %v5547 = vpop.f32.mrf.mxu0
        %5548 = vdwg.mxu0
        %5549 = vmatprep.subr.bf16.mxu0 0
        %5550 = vmatpush1.bf16.msra.mxu0 %v4292
        %5551 = vmatprep.subr.bf16.mxu0 0
        %5552 = vmatpush1.bf16.msra.mxu0 %v4291
        %5553 = vmatprep.subr.bf16.mxu0 0
        %5554 = vmatpush1.bf16.msra.mxu0 %v4290
        %5555 = vmatprep.subr.bf16.mxu0 0
        %5556 = vmatpush1.bf16.msra.mxu0 %v4289
        %5557 = vmatprep.subr.bf16.mxu0 0
        %5558 = vmatpush1.bf16.msra.mxu0 %v4288
        %5559 = vmatprep.subr.bf16.mxu0 0
        %5560 = vmatpush1.bf16.msra.mxu0 %v4287
        %5561 = vmatprep.subr.bf16.mxu0 0
        %5562 = vmatpush1.bf16.msra.mxu0 %v4286
        %5563 = vmatprep.subr.bf16.mxu0 0
        %5564 = vmatpush1.bf16.msra.mxu0 %v4285
        %5565 = vmatprep.subr.bf16.mxu0 0
        %5566 = vmatpush2.bf16.msra.mxu0 %v4300
        %5567 = vmatprep.subr.bf16.mxu0 0
        %5568 = vmatpush2.bf16.msra.mxu0 %v4299
        %5569 = vmatprep.subr.bf16.mxu0 0
        %5570 = vmatpush2.bf16.msra.mxu0 %v4298
        %5571 = vmatprep.subr.bf16.mxu0 0
        %5572 = vmatpush2.bf16.msra.mxu0 %v4297
        %5573 = vmatprep.subr.bf16.mxu0 0
        %5574 = vmatpush2.bf16.msra.mxu0 %v4296
        %5575 = vmatprep.subr.bf16.mxu0 0
        %5576 = vmatpush2.bf16.msra.mxu0 %v4295
        %5577 = vmatprep.subr.bf16.mxu0 0
        %5578 = vmatpush2.bf16.msra.mxu0 %v4294
        %5579 = vmatprep.subr.bf16.mxu0 0
        %5580 = vmatpush2.bf16.msra.mxu0 %v4293
        %5581 = vmatprep.mubr.bf16.mxu0 %v1010
        %5582 = vmatmul.mubr.bf16.gmra.mxu0 %v1009
        %v5583 = vpop.f32.mrf.mxu0
        %v5584 = vadd.f32 %v5544, %v5583
        %v5585 = vpop.f32.mrf.mxu0
        %v5586 = vpop.f32.mrf.mxu0
        %v5587 = vpop.f32.mrf.mxu0
        %5588 = vdwg.mxu0
        %5589 = vmatprep.subr.bf16.mxu0 0
        %5590 = vmatpush1.bf16.msra.mxu0 %v4308
        %5591 = vmatprep.subr.bf16.mxu0 0
        %5592 = vmatpush1.bf16.msra.mxu0 %v4307
        %5593 = vmatprep.subr.bf16.mxu0 0
        %5594 = vmatpush1.bf16.msra.mxu0 %v4306
        %5595 = vmatprep.subr.bf16.mxu0 0
        %5596 = vmatpush1.bf16.msra.mxu0 %v4305
        %5597 = vmatprep.subr.bf16.mxu0 0
        %5598 = vmatpush1.bf16.msra.mxu0 %v4304
        %5599 = vmatprep.subr.bf16.mxu0 0
        %5600 = vmatpush1.bf16.msra.mxu0 %v4303
        %5601 = vmatprep.subr.bf16.mxu0 0
        %5602 = vmatpush1.bf16.msra.mxu0 %v4302
        %5603 = vmatprep.subr.bf16.mxu0 0
        %5604 = vmatpush1.bf16.msra.mxu0 %v4301
        %5605 = vmatprep.subr.bf16.mxu0 0
        %5606 = vmatpush2.bf16.msra.mxu0 %v4316
        %5607 = vmatprep.subr.bf16.mxu0 0
        %5608 = vmatpush2.bf16.msra.mxu0 %v4315
        %5609 = vmatprep.subr.bf16.mxu0 0
        %5610 = vmatpush2.bf16.msra.mxu0 %v4314
        %5611 = vmatprep.subr.bf16.mxu0 0
        %5612 = vmatpush2.bf16.msra.mxu0 %v4313
        %5613 = vmatprep.subr.bf16.mxu0 0
        %5614 = vmatpush2.bf16.msra.mxu0 %v4312
        %5615 = vmatprep.subr.bf16.mxu0 0
        %5616 = vmatpush2.bf16.msra.mxu0 %v4311
        %5617 = vmatprep.subr.bf16.mxu0 0
        %5618 = vmatpush2.bf16.msra.mxu0 %v4310
        %5619 = vmatprep.subr.bf16.mxu0 0
        %5620 = vmatpush2.bf16.msra.mxu0 %v4309
        %5621 = vmatprep.mubr.bf16.mxu0 %v1012
        %5622 = vmatmul.mubr.bf16.gmra.mxu0 %v1011
        %v5623 = vpop.f32.mrf.mxu0
        %v5624 = vadd.f32 %v5584, %v5623
        %v5625 = vpop.f32.mrf.mxu0
        %v5626 = vpop.f32.mrf.mxu0
        %v5627 = vpop.f32.mrf.mxu0
        %5628 = vdwg.mxu0
        %5629 = vmatprep.subr.bf16.mxu0 0
        %5630 = vmatpush1.bf16.msra.mxu0 %v4324
        %5631 = vmatprep.subr.bf16.mxu0 0
        %5632 = vmatpush1.bf16.msra.mxu0 %v4323
        %5633 = vmatprep.subr.bf16.mxu0 0
        %5634 = vmatpush1.bf16.msra.mxu0 %v4322
        %5635 = vmatprep.subr.bf16.mxu0 0
        %5636 = vmatpush1.bf16.msra.mxu0 %v4321
        %5637 = vmatprep.subr.bf16.mxu0 0
        %5638 = vmatpush1.bf16.msra.mxu0 %v4320
        %5639 = vmatprep.subr.bf16.mxu0 0
        %5640 = vmatpush1.bf16.msra.mxu0 %v4319
        %5641 = vmatprep.subr.bf16.mxu0 0
        %5642 = vmatpush1.bf16.msra.mxu0 %v4318
        %5643 = vmatprep.subr.bf16.mxu0 0
        %5644 = vmatpush1.bf16.msra.mxu0 %v4317
        %5645 = vmatprep.subr.bf16.mxu0 0
        %5646 = vmatpush2.bf16.msra.mxu0 %v4332
        %5647 = vmatprep.subr.bf16.mxu0 0
        %5648 = vmatpush2.bf16.msra.mxu0 %v4331
        %5649 = vmatprep.subr.bf16.mxu0 0
        %5650 = vmatpush2.bf16.msra.mxu0 %v4330
        %5651 = vmatprep.subr.bf16.mxu0 0
        %5652 = vmatpush2.bf16.msra.mxu0 %v4329
        %5653 = vmatprep.subr.bf16.mxu0 0
        %5654 = vmatpush2.bf16.msra.mxu0 %v4328
        %5655 = vmatprep.subr.bf16.mxu0 0
        %5656 = vmatpush2.bf16.msra.mxu0 %v4327
        %5657 = vmatprep.subr.bf16.mxu0 0
        %5658 = vmatpush2.bf16.msra.mxu0 %v4326
        %5659 = vmatprep.subr.bf16.mxu0 0
        %5660 = vmatpush2.bf16.msra.mxu0 %v4325
        %5661 = vmatprep.mubr.bf16.mxu0 %v1014
        %5662 = vmatmul.mubr.bf16.gmra.mxu0 %v1013
        %v5663 = vpop.f32.mrf.mxu0
        %v5664 = vadd.f32 %v5624, %v5663
        %v5665 = vpop.f32.mrf.mxu0
        %v5666 = vpop.f32.mrf.mxu0
        %v5667 = vpop.f32.mrf.mxu0
        %5668 = vdwg.mxu0
        %5669 = vmatprep.subr.bf16.mxu0 0
        %5670 = vmatpush1.bf16.msra.mxu0 %v4340
        %5671 = vmatprep.subr.bf16.mxu0 0
        %5672 = vmatpush1.bf16.msra.mxu0 %v4339
        %5673 = vmatprep.subr.bf16.mxu0 0
        %5674 = vmatpush1.bf16.msra.mxu0 %v4338
        %5675 = vmatprep.subr.bf16.mxu0 0
        %5676 = vmatpush1.bf16.msra.mxu0 %v4337
        %5677 = vmatprep.subr.bf16.mxu0 0
        %5678 = vmatpush1.bf16.msra.mxu0 %v4336
        %5679 = vmatprep.subr.bf16.mxu0 0
        %5680 = vmatpush1.bf16.msra.mxu0 %v4335
        %5681 = vmatprep.subr.bf16.mxu0 0
        %5682 = vmatpush1.bf16.msra.mxu0 %v4334
        %5683 = vmatprep.subr.bf16.mxu0 0
        %5684 = vmatpush1.bf16.msra.mxu0 %v4333
        %5685 = vmatprep.subr.bf16.mxu0 0
        %5686 = vmatpush2.bf16.msra.mxu0 %v4348
        %5687 = vmatprep.subr.bf16.mxu0 0
        %5688 = vmatpush2.bf16.msra.mxu0 %v4347
        %5689 = vmatprep.subr.bf16.mxu0 0
        %5690 = vmatpush2.bf16.msra.mxu0 %v4346
        %5691 = vmatprep.subr.bf16.mxu0 0
        %5692 = vmatpush2.bf16.msra.mxu0 %v4345
        %5693 = vmatprep.subr.bf16.mxu0 0
        %5694 = vmatpush2.bf16.msra.mxu0 %v4344
        %5695 = vmatprep.subr.bf16.mxu0 0
        %5696 = vmatpush2.bf16.msra.mxu0 %v4343
        %5697 = vmatprep.subr.bf16.mxu0 0
        %5698 = vmatpush2.bf16.msra.mxu0 %v4342
        %5699 = vmatprep.subr.bf16.mxu0 0
        %5700 = vmatpush2.bf16.msra.mxu0 %v4341
        %5701 = vmatprep.mubr.bf16.mxu0 %v1016
        %5702 = vmatmul.mubr.bf16.gmra.mxu0 %v1015
        %v5703 = vpop.f32.mrf.mxu0
        %v5704 = vadd.f32 %v5664, %v5703
        %v5705 = vpop.f32.mrf.mxu0
        %v5706 = vpop.f32.mrf.mxu0
        %v5707 = vpop.f32.mrf.mxu0
        %5708 = vdwg.mxu0
        %5709 = vmatprep.subr.bf16.mxu0 0
        %5710 = vmatpush1.bf16.msra.mxu0 %v4356
        %5711 = vmatprep.subr.bf16.mxu0 0
        %5712 = vmatpush1.bf16.msra.mxu0 %v4355
        %5713 = vmatprep.subr.bf16.mxu0 0
        %5714 = vmatpush1.bf16.msra.mxu0 %v4354
        %5715 = vmatprep.subr.bf16.mxu0 0
        %5716 = vmatpush1.bf16.msra.mxu0 %v4353
        %5717 = vmatprep.subr.bf16.mxu0 0
        %5718 = vmatpush1.bf16.msra.mxu0 %v4352
        %5719 = vmatprep.subr.bf16.mxu0 0
        %5720 = vmatpush1.bf16.msra.mxu0 %v4351
        %5721 = vmatprep.subr.bf16.mxu0 0
        %5722 = vmatpush1.bf16.msra.mxu0 %v4350
        %5723 = vmatprep.subr.bf16.mxu0 0
        %5724 = vmatpush1.bf16.msra.mxu0 %v4349
        %5725 = vmatprep.subr.bf16.mxu0 0
        %5726 = vmatpush2.bf16.msra.mxu0 %v4364
        %5727 = vmatprep.subr.bf16.mxu0 0
        %5728 = vmatpush2.bf16.msra.mxu0 %v4363
        %5729 = vmatprep.subr.bf16.mxu0 0
        %5730 = vmatpush2.bf16.msra.mxu0 %v4362
        %5731 = vmatprep.subr.bf16.mxu0 0
        %5732 = vmatpush2.bf16.msra.mxu0 %v4361
        %5733 = vmatprep.subr.bf16.mxu0 0
        %5734 = vmatpush2.bf16.msra.mxu0 %v4360
        %5735 = vmatprep.subr.bf16.mxu0 0
        %5736 = vmatpush2.bf16.msra.mxu0 %v4359
        %5737 = vmatprep.subr.bf16.mxu0 0
        %5738 = vmatpush2.bf16.msra.mxu0 %v4358
        %5739 = vmatprep.subr.bf16.mxu0 0
        %5740 = vmatpush2.bf16.msra.mxu0 %v4357
        %5741 = vmatprep.mubr.bf16.mxu0 %v1018
        %5742 = vmatmul.mubr.bf16.gmra.mxu0 %v1017
        %v5743 = vpop.f32.mrf.mxu0
        %v5744 = vadd.f32 %v5704, %v5743
        %v5745 = vpop.f32.mrf.mxu0
        %v5746 = vpop.f32.mrf.mxu0
        %v5747 = vpop.f32.mrf.mxu0
        %5748 = vdwg.mxu0
        %5749 = vmatprep.subr.bf16.mxu0 0
        %5750 = vmatpush1.bf16.msra.mxu0 %v4372
        %5751 = vmatprep.subr.bf16.mxu0 0
        %5752 = vmatpush1.bf16.msra.mxu0 %v4371
        %5753 = vmatprep.subr.bf16.mxu0 0
        %5754 = vmatpush1.bf16.msra.mxu0 %v4370
        %5755 = vmatprep.subr.bf16.mxu0 0
        %5756 = vmatpush1.bf16.msra.mxu0 %v4369
        %5757 = vmatprep.subr.bf16.mxu0 0
        %5758 = vmatpush1.bf16.msra.mxu0 %v4368
        %5759 = vmatprep.subr.bf16.mxu0 0
        %5760 = vmatpush1.bf16.msra.mxu0 %v4367
        %5761 = vmatprep.subr.bf16.mxu0 0
        %5762 = vmatpush1.bf16.msra.mxu0 %v4366
        %5763 = vmatprep.subr.bf16.mxu0 0
        %5764 = vmatpush1.bf16.msra.mxu0 %v4365
        %5765 = vmatprep.subr.bf16.mxu0 0
        %5766 = vmatpush2.bf16.msra.mxu0 %v4380
        %5767 = vmatprep.subr.bf16.mxu0 0
        %5768 = vmatpush2.bf16.msra.mxu0 %v4379
        %5769 = vmatprep.subr.bf16.mxu0 0
        %5770 = vmatpush2.bf16.msra.mxu0 %v4378
        %5771 = vmatprep.subr.bf16.mxu0 0
        %5772 = vmatpush2.bf16.msra.mxu0 %v4377
        %5773 = vmatprep.subr.bf16.mxu0 0
        %5774 = vmatpush2.bf16.msra.mxu0 %v4376
        %5775 = vmatprep.subr.bf16.mxu0 0
        %5776 = vmatpush2.bf16.msra.mxu0 %v4375
        %5777 = vmatprep.subr.bf16.mxu0 0
        %5778 = vmatpush2.bf16.msra.mxu0 %v4374
        %5779 = vmatprep.subr.bf16.mxu0 0
        %5780 = vmatpush2.bf16.msra.mxu0 %v4373
        %5781 = vmatprep.mubr.bf16.mxu0 %v1020
        %5782 = vmatmul.mubr.bf16.gmra.mxu0 %v1019
        %v5783 = vpop.f32.mrf.mxu0
        %v5784 = vadd.f32 %v5744, %v5783
        %v5785 = vpop.f32.mrf.mxu0
        %v5786 = vpop.f32.mrf.mxu0
        %v5787 = vpop.f32.mrf.mxu0
        %5788 = vdwg.mxu0
        %5789 = vmatprep.subr.bf16.mxu0 0
        %5790 = vmatpush1.bf16.msra.mxu0 %v4388
        %5791 = vmatprep.subr.bf16.mxu0 0
        %5792 = vmatpush1.bf16.msra.mxu0 %v4387
        %5793 = vmatprep.subr.bf16.mxu0 0
        %5794 = vmatpush1.bf16.msra.mxu0 %v4386
        %5795 = vmatprep.subr.bf16.mxu0 0
        %5796 = vmatpush1.bf16.msra.mxu0 %v4385
        %5797 = vmatprep.subr.bf16.mxu0 0
        %5798 = vmatpush1.bf16.msra.mxu0 %v4384
        %5799 = vmatprep.subr.bf16.mxu0 0
        %5800 = vmatpush1.bf16.msra.mxu0 %v4383
        %5801 = vmatprep.subr.bf16.mxu0 0
        %5802 = vmatpush1.bf16.msra.mxu0 %v4382
        %5803 = vmatprep.subr.bf16.mxu0 0
        %5804 = vmatpush1.bf16.msra.mxu0 %v4381
        %5805 = vmatprep.subr.bf16.mxu0 0
        %5806 = vmatpush2.bf16.msra.mxu0 %v4396
        %5807 = vmatprep.subr.bf16.mxu0 0
        %5808 = vmatpush2.bf16.msra.mxu0 %v4395
        %5809 = vmatprep.subr.bf16.mxu0 0
        %5810 = vmatpush2.bf16.msra.mxu0 %v4394
        %5811 = vmatprep.subr.bf16.mxu0 0
        %5812 = vmatpush2.bf16.msra.mxu0 %v4393
        %5813 = vmatprep.subr.bf16.mxu0 0
        %5814 = vmatpush2.bf16.msra.mxu0 %v4392
        %5815 = vmatprep.subr.bf16.mxu0 0
        %5816 = vmatpush2.bf16.msra.mxu0 %v4391
        %5817 = vmatprep.subr.bf16.mxu0 0
        %5818 = vmatpush2.bf16.msra.mxu0 %v4390
        %5819 = vmatprep.subr.bf16.mxu0 0
        %5820 = vmatpush2.bf16.msra.mxu0 %v4389
        %5821 = vmatprep.mubr.bf16.mxu0 %v1022
        %5822 = vmatmul.mubr.bf16.gmra.mxu0 %v1021
        %v5823 = vpop.f32.mrf.mxu0
        %v5824 = vadd.f32 %v5784, %v5823
        %v5825 = vpop.f32.mrf.mxu0
        %v5826 = vpop.f32.mrf.mxu0
        %v5827 = vpop.f32.mrf.mxu0
        %5828 = vdwg.mxu0
        %5829 = vmatprep.subr.bf16.mxu0 0
        %5830 = vmatpush1.bf16.msra.mxu0 %v4404
        %5831 = vmatprep.subr.bf16.mxu0 0
        %5832 = vmatpush1.bf16.msra.mxu0 %v4403
        %5833 = vmatprep.subr.bf16.mxu0 0
        %5834 = vmatpush1.bf16.msra.mxu0 %v4402
        %5835 = vmatprep.subr.bf16.mxu0 0
        %5836 = vmatpush1.bf16.msra.mxu0 %v4401
        %5837 = vmatprep.subr.bf16.mxu0 0
        %5838 = vmatpush1.bf16.msra.mxu0 %v4400
        %5839 = vmatprep.subr.bf16.mxu0 0
        %5840 = vmatpush1.bf16.msra.mxu0 %v4399
        %5841 = vmatprep.subr.bf16.mxu0 0
        %5842 = vmatpush1.bf16.msra.mxu0 %v4398
        %5843 = vmatprep.subr.bf16.mxu0 0
        %5844 = vmatpush1.bf16.msra.mxu0 %v4397
        %5845 = vmatprep.subr.bf16.mxu0 0
        %5846 = vmatpush2.bf16.msra.mxu0 %v4412
        %5847 = vmatprep.subr.bf16.mxu0 0
        %5848 = vmatpush2.bf16.msra.mxu0 %v4411
        %5849 = vmatprep.subr.bf16.mxu0 0
        %5850 = vmatpush2.bf16.msra.mxu0 %v4410
        %5851 = vmatprep.subr.bf16.mxu0 0
        %5852 = vmatpush2.bf16.msra.mxu0 %v4409
        %5853 = vmatprep.subr.bf16.mxu0 0
        %5854 = vmatpush2.bf16.msra.mxu0 %v4408
        %5855 = vmatprep.subr.bf16.mxu0 0
        %5856 = vmatpush2.bf16.msra.mxu0 %v4407
        %5857 = vmatprep.subr.bf16.mxu0 0
        %5858 = vmatpush2.bf16.msra.mxu0 %v4406
        %5859 = vmatprep.subr.bf16.mxu0 0
        %5860 = vmatpush2.bf16.msra.mxu0 %v4405
        %5861 = vmatprep.mubr.bf16.mxu0 %v1024
        %5862 = vmatmul.mubr.bf16.gmra.mxu0 %v1023
        %v5863 = vpop.f32.mrf.mxu0
        %v5864 = vadd.f32 %v5824, %v5863
        %v5865 = vpop.f32.mrf.mxu0
        %v5866 = vpop.f32.mrf.mxu0
        %v5867 = vpop.f32.mrf.mxu0
        %5868 = vdwg.mxu0
        %5869 = vmatprep.subr.bf16.mxu0 0
        %5870 = vmatpush1.bf16.msra.mxu0 %v4420
        %5871 = vmatprep.subr.bf16.mxu0 0
        %5872 = vmatpush1.bf16.msra.mxu0 %v4419
        %5873 = vmatprep.subr.bf16.mxu0 0
        %5874 = vmatpush1.bf16.msra.mxu0 %v4418
        %5875 = vmatprep.subr.bf16.mxu0 0
        %5876 = vmatpush1.bf16.msra.mxu0 %v4417
        %5877 = vmatprep.subr.bf16.mxu0 0
        %5878 = vmatpush1.bf16.msra.mxu0 %v4416
        %5879 = vmatprep.subr.bf16.mxu0 0
        %5880 = vmatpush1.bf16.msra.mxu0 %v4415
        %5881 = vmatprep.subr.bf16.mxu0 0
        %5882 = vmatpush1.bf16.msra.mxu0 %v4414
        %5883 = vmatprep.subr.bf16.mxu0 0
        %5884 = vmatpush1.bf16.msra.mxu0 %v4413
        %5885 = vmatprep.subr.bf16.mxu0 0
        %5886 = vmatpush2.bf16.msra.mxu0 %v4428
        %5887 = vmatprep.subr.bf16.mxu0 0
        %5888 = vmatpush2.bf16.msra.mxu0 %v4427
        %5889 = vmatprep.subr.bf16.mxu0 0
        %5890 = vmatpush2.bf16.msra.mxu0 %v4426
        %5891 = vmatprep.subr.bf16.mxu0 0
        %5892 = vmatpush2.bf16.msra.mxu0 %v4425
        %5893 = vmatprep.subr.bf16.mxu0 0
        %5894 = vmatpush2.bf16.msra.mxu0 %v4424
        %5895 = vmatprep.subr.bf16.mxu0 0
        %5896 = vmatpush2.bf16.msra.mxu0 %v4423
        %5897 = vmatprep.subr.bf16.mxu0 0
        %5898 = vmatpush2.bf16.msra.mxu0 %v4422
        %5899 = vmatprep.subr.bf16.mxu0 0
        %5900 = vmatpush2.bf16.msra.mxu0 %v4421
        %5901 = vmatprep.mubr.bf16.mxu0 %v1026
        %5902 = vmatmul.mubr.bf16.gmra.mxu0 %v1025
        %v5903 = vpop.f32.mrf.mxu0
        %v5904 = vadd.f32 %v5864, %v5903
        %v5905 = vpop.f32.mrf.mxu0
        %v5906 = vpop.f32.mrf.mxu0
        %v5907 = vpop.f32.mrf.mxu0
        %5908 = vdwg.mxu0
        %5909 = vmatprep.subr.bf16.mxu0 0
        %5910 = vmatpush1.bf16.msra.mxu0 %v4436
        %5911 = vmatprep.subr.bf16.mxu0 0
        %5912 = vmatpush1.bf16.msra.mxu0 %v4435
        %5913 = vmatprep.subr.bf16.mxu0 0
        %5914 = vmatpush1.bf16.msra.mxu0 %v4434
        %5915 = vmatprep.subr.bf16.mxu0 0
        %5916 = vmatpush1.bf16.msra.mxu0 %v4433
        %5917 = vmatprep.subr.bf16.mxu0 0
        %5918 = vmatpush1.bf16.msra.mxu0 %v4432
        %5919 = vmatprep.subr.bf16.mxu0 0
        %5920 = vmatpush1.bf16.msra.mxu0 %v4431
        %5921 = vmatprep.subr.bf16.mxu0 0
        %5922 = vmatpush1.bf16.msra.mxu0 %v4430
        %5923 = vmatprep.subr.bf16.mxu0 0
        %5924 = vmatpush1.bf16.msra.mxu0 %v4429
        %5925 = vmatprep.subr.bf16.mxu0 0
        %5926 = vmatpush2.bf16.msra.mxu0 %v4444
        %5927 = vmatprep.subr.bf16.mxu0 0
        %5928 = vmatpush2.bf16.msra.mxu0 %v4443
        %5929 = vmatprep.subr.bf16.mxu0 0
        %5930 = vmatpush2.bf16.msra.mxu0 %v4442
        %5931 = vmatprep.subr.bf16.mxu0 0
        %5932 = vmatpush2.bf16.msra.mxu0 %v4441
        %5933 = vmatprep.subr.bf16.mxu0 0
        %5934 = vmatpush2.bf16.msra.mxu0 %v4440
        %5935 = vmatprep.subr.bf16.mxu0 0
        %5936 = vmatpush2.bf16.msra.mxu0 %v4439
        %5937 = vmatprep.subr.bf16.mxu0 0
        %5938 = vmatpush2.bf16.msra.mxu0 %v4438
        %5939 = vmatprep.subr.bf16.mxu0 0
        %5940 = vmatpush2.bf16.msra.mxu0 %v4437
        %5941 = vmatprep.mubr.bf16.mxu0 %v1028
        %5942 = vmatmul.mubr.bf16.gmra.mxu0 %v1027
        %v5943 = vpop.f32.mrf.mxu0
        %v5944 = vadd.f32 %v5904, %v5943
        %v5945 = vpop.f32.mrf.mxu0
        %v5946 = vpop.f32.mrf.mxu0
        %v5947 = vpop.f32.mrf.mxu0
        %5948 = vdwg.mxu0
        %5949 = vmatprep.subr.bf16.mxu0 0
        %5950 = vmatpush1.bf16.msra.mxu0 %v4452
        %5951 = vmatprep.subr.bf16.mxu0 0
        %5952 = vmatpush1.bf16.msra.mxu0 %v4451
        %5953 = vmatprep.subr.bf16.mxu0 0
        %5954 = vmatpush1.bf16.msra.mxu0 %v4450
        %5955 = vmatprep.subr.bf16.mxu0 0
        %5956 = vmatpush1.bf16.msra.mxu0 %v4449
        %5957 = vmatprep.subr.bf16.mxu0 0
        %5958 = vmatpush1.bf16.msra.mxu0 %v4448
        %5959 = vmatprep.subr.bf16.mxu0 0
        %5960 = vmatpush1.bf16.msra.mxu0 %v4447
        %5961 = vmatprep.subr.bf16.mxu0 0
        %5962 = vmatpush1.bf16.msra.mxu0 %v4446
        %5963 = vmatprep.subr.bf16.mxu0 0
        %5964 = vmatpush1.bf16.msra.mxu0 %v4445
        %5965 = vmatprep.subr.bf16.mxu0 0
        %5966 = vmatpush2.bf16.msra.mxu0 %v4460
        %5967 = vmatprep.subr.bf16.mxu0 0
        %5968 = vmatpush2.bf16.msra.mxu0 %v4459
        %5969 = vmatprep.subr.bf16.mxu0 0
        %5970 = vmatpush2.bf16.msra.mxu0 %v4458
        %5971 = vmatprep.subr.bf16.mxu0 0
        %5972 = vmatpush2.bf16.msra.mxu0 %v4457
        %5973 = vmatprep.subr.bf16.mxu0 0
        %5974 = vmatpush2.bf16.msra.mxu0 %v4456
        %5975 = vmatprep.subr.bf16.mxu0 0
        %5976 = vmatpush2.bf16.msra.mxu0 %v4455
        %5977 = vmatprep.subr.bf16.mxu0 0
        %5978 = vmatpush2.bf16.msra.mxu0 %v4454
        %5979 = vmatprep.subr.bf16.mxu0 0
        %5980 = vmatpush2.bf16.msra.mxu0 %v4453
        %5981 = vmatprep.mubr.bf16.mxu0 %v1030
        %5982 = vmatmul.mubr.bf16.gmra.mxu0 %v1029
        %v5983 = vpop.f32.mrf.mxu0
        %v5984 = vadd.f32 %v5944, %v5983
        %v5985 = vpop.f32.mrf.mxu0
        %v5986 = vpop.f32.mrf.mxu0
        %v5987 = vpop.f32.mrf.mxu0
        %5988 = vdwg.mxu0
        %5989 = vmatprep.subr.bf16.mxu0 0
        %5990 = vmatpush1.bf16.msra.mxu0 %v4468
        %5991 = vmatprep.subr.bf16.mxu0 0
        %5992 = vmatpush1.bf16.msra.mxu0 %v4467
        %5993 = vmatprep.subr.bf16.mxu0 0
        %5994 = vmatpush1.bf16.msra.mxu0 %v4466
        %5995 = vmatprep.subr.bf16.mxu0 0
        %5996 = vmatpush1.bf16.msra.mxu0 %v4465
        %5997 = vmatprep.subr.bf16.mxu0 0
        %5998 = vmatpush1.bf16.msra.mxu0 %v4464
        %5999 = vmatprep.subr.bf16.mxu0 0
        %6000 = vmatpush1.bf16.msra.mxu0 %v4463
        %6001 = vmatprep.subr.bf16.mxu0 0
        %6002 = vmatpush1.bf16.msra.mxu0 %v4462
        %6003 = vmatprep.subr.bf16.mxu0 0
        %6004 = vmatpush1.bf16.msra.mxu0 %v4461
        %6005 = vmatprep.subr.bf16.mxu0 0
        %6006 = vmatpush2.bf16.msra.mxu0 %v4476
        %6007 = vmatprep.subr.bf16.mxu0 0
        %6008 = vmatpush2.bf16.msra.mxu0 %v4475
        %6009 = vmatprep.subr.bf16.mxu0 0
        %6010 = vmatpush2.bf16.msra.mxu0 %v4474
        %6011 = vmatprep.subr.bf16.mxu0 0
        %6012 = vmatpush2.bf16.msra.mxu0 %v4473
        %6013 = vmatprep.subr.bf16.mxu0 0
        %6014 = vmatpush2.bf16.msra.mxu0 %v4472
        %6015 = vmatprep.subr.bf16.mxu0 0
        %6016 = vmatpush2.bf16.msra.mxu0 %v4471
        %6017 = vmatprep.subr.bf16.mxu0 0
        %6018 = vmatpush2.bf16.msra.mxu0 %v4470
        %6019 = vmatprep.subr.bf16.mxu0 0
        %6020 = vmatpush2.bf16.msra.mxu0 %v4469
        %6021 = vmatprep.mubr.bf16.mxu0 %v1032
        %6022 = vmatmul.mubr.bf16.gmra.mxu0 %v1031
        %v6023 = vpop.f32.mrf.mxu0
        %v6024 = vadd.f32 %v5984, %v6023
        %v6025 = vpop.f32.mrf.mxu0
        %v6026 = vpop.f32.mrf.mxu0
        %v6027 = vpop.f32.mrf.mxu0
        %6028 = vdwg.mxu0
        %6029 = vmatprep.subr.bf16.mxu0 0
        %6030 = vmatpush1.bf16.msra.mxu0 %v4484
        %6031 = vmatprep.subr.bf16.mxu0 0
        %6032 = vmatpush1.bf16.msra.mxu0 %v4483
        %6033 = vmatprep.subr.bf16.mxu0 0
        %6034 = vmatpush1.bf16.msra.mxu0 %v4482
        %6035 = vmatprep.subr.bf16.mxu0 0
        %6036 = vmatpush1.bf16.msra.mxu0 %v4481
        %6037 = vmatprep.subr.bf16.mxu0 0
        %6038 = vmatpush1.bf16.msra.mxu0 %v4480
        %6039 = vmatprep.subr.bf16.mxu0 0
        %6040 = vmatpush1.bf16.msra.mxu0 %v4479
        %6041 = vmatprep.subr.bf16.mxu0 0
        %6042 = vmatpush1.bf16.msra.mxu0 %v4478
        %6043 = vmatprep.subr.bf16.mxu0 0
        %6044 = vmatpush1.bf16.msra.mxu0 %v4477
        %6045 = vmatprep.subr.bf16.mxu0 0
        %6046 = vmatpush2.bf16.msra.mxu0 %v4492
        %6047 = vmatprep.subr.bf16.mxu0 0
        %6048 = vmatpush2.bf16.msra.mxu0 %v4491
        %6049 = vmatprep.subr.bf16.mxu0 0
        %6050 = vmatpush2.bf16.msra.mxu0 %v4490
        %6051 = vmatprep.subr.bf16.mxu0 0
        %6052 = vmatpush2.bf16.msra.mxu0 %v4489
        %6053 = vmatprep.subr.bf16.mxu0 0
        %6054 = vmatpush2.bf16.msra.mxu0 %v4488
        %6055 = vmatprep.subr.bf16.mxu0 0
        %6056 = vmatpush2.bf16.msra.mxu0 %v4487
        %6057 = vmatprep.subr.bf16.mxu0 0
        %6058 = vmatpush2.bf16.msra.mxu0 %v4486
        %6059 = vmatprep.subr.bf16.mxu0 0
        %6060 = vmatpush2.bf16.msra.mxu0 %v4485
        %6061 = vmatprep.mubr.bf16.mxu0 %v1034
        %6062 = vmatmul.mubr.bf16.gmra.mxu0 %v1033
        %v6063 = vpop.f32.mrf.mxu0
        %v6064 = vadd.f32 %v6024, %v6063
        %v6065 = vpop.f32.mrf.mxu0
        %v6066 = vpop.f32.mrf.mxu0
        %v6067 = vpop.f32.mrf.mxu0
        %6068 = vdwg.mxu0
        %6069 = vmatprep.subr.bf16.mxu0 0
        %6070 = vmatpush1.bf16.msra.mxu0 %v4500
        %6071 = vmatprep.subr.bf16.mxu0 0
        %6072 = vmatpush1.bf16.msra.mxu0 %v4499
        %6073 = vmatprep.subr.bf16.mxu0 0
        %6074 = vmatpush1.bf16.msra.mxu0 %v4498
        %6075 = vmatprep.subr.bf16.mxu0 0
        %6076 = vmatpush1.bf16.msra.mxu0 %v4497
        %6077 = vmatprep.subr.bf16.mxu0 0
        %6078 = vmatpush1.bf16.msra.mxu0 %v4496
        %6079 = vmatprep.subr.bf16.mxu0 0
        %6080 = vmatpush1.bf16.msra.mxu0 %v4495
        %6081 = vmatprep.subr.bf16.mxu0 0
        %6082 = vmatpush1.bf16.msra.mxu0 %v4494
        %6083 = vmatprep.subr.bf16.mxu0 0
        %6084 = vmatpush1.bf16.msra.mxu0 %v4493
        %6085 = vmatprep.subr.bf16.mxu0 0
        %6086 = vmatpush2.bf16.msra.mxu0 %v4508
        %6087 = vmatprep.subr.bf16.mxu0 0
        %6088 = vmatpush2.bf16.msra.mxu0 %v4507
        %6089 = vmatprep.subr.bf16.mxu0 0
        %6090 = vmatpush2.bf16.msra.mxu0 %v4506
        %6091 = vmatprep.subr.bf16.mxu0 0
        %6092 = vmatpush2.bf16.msra.mxu0 %v4505
        %6093 = vmatprep.subr.bf16.mxu0 0
        %6094 = vmatpush2.bf16.msra.mxu0 %v4504
        %6095 = vmatprep.subr.bf16.mxu0 0
        %6096 = vmatpush2.bf16.msra.mxu0 %v4503
        %6097 = vmatprep.subr.bf16.mxu0 0
        %6098 = vmatpush2.bf16.msra.mxu0 %v4502
        %6099 = vmatprep.subr.bf16.mxu0 0
        %6100 = vmatpush2.bf16.msra.mxu0 %v4501
        %6101 = vmatprep.mubr.bf16.mxu0 %v1036
        %6102 = vmatmul.mubr.bf16.gmra.mxu0 %v1035
        %v6103 = vpop.f32.mrf.mxu0
        %v6104 = vadd.f32 %v6064, %v6103
        %v6105 = vpop.f32.mrf.mxu0
        %v6106 = vpop.f32.mrf.mxu0
        %v6107 = vpop.f32.mrf.mxu0
        %6108 = vdwg.mxu0
        %6109 = vmatprep.subr.bf16.mxu0 0
        %6110 = vmatpush1.bf16.msra.mxu0 %v4516
        %6111 = vmatprep.subr.bf16.mxu0 0
        %6112 = vmatpush1.bf16.msra.mxu0 %v4515
        %6113 = vmatprep.subr.bf16.mxu0 0
        %6114 = vmatpush1.bf16.msra.mxu0 %v4514
        %6115 = vmatprep.subr.bf16.mxu0 0
        %6116 = vmatpush1.bf16.msra.mxu0 %v4513
        %6117 = vmatprep.subr.bf16.mxu0 0
        %6118 = vmatpush1.bf16.msra.mxu0 %v4512
        %6119 = vmatprep.subr.bf16.mxu0 0
        %6120 = vmatpush1.bf16.msra.mxu0 %v4511
        %6121 = vmatprep.subr.bf16.mxu0 0
        %6122 = vmatpush1.bf16.msra.mxu0 %v4510
        %6123 = vmatprep.subr.bf16.mxu0 0
        %6124 = vmatpush1.bf16.msra.mxu0 %v4509
        %6125 = vmatprep.subr.bf16.mxu0 0
        %6126 = vmatpush2.bf16.msra.mxu0 %v4524
        %6127 = vmatprep.subr.bf16.mxu0 0
        %6128 = vmatpush2.bf16.msra.mxu0 %v4523
        %6129 = vmatprep.subr.bf16.mxu0 0
        %6130 = vmatpush2.bf16.msra.mxu0 %v4522
        %6131 = vmatprep.subr.bf16.mxu0 0
        %6132 = vmatpush2.bf16.msra.mxu0 %v4521
        %6133 = vmatprep.subr.bf16.mxu0 0
        %6134 = vmatpush2.bf16.msra.mxu0 %v4520
        %6135 = vmatprep.subr.bf16.mxu0 0
        %6136 = vmatpush2.bf16.msra.mxu0 %v4519
        %6137 = vmatprep.subr.bf16.mxu0 0
        %6138 = vmatpush2.bf16.msra.mxu0 %v4518
        %6139 = vmatprep.subr.bf16.mxu0 0
        %6140 = vmatpush2.bf16.msra.mxu0 %v4517
        %6141 = vmatprep.mubr.bf16.mxu0 %v1038
        %6142 = vmatmul.mubr.bf16.gmra.mxu0 %v1037
        %v6143 = vpop.f32.mrf.mxu0
        %v6144 = vadd.f32 %v6104, %v6143
        %v6145 = vpop.f32.mrf.mxu0
        %v6146 = vpop.f32.mrf.mxu0
        %v6147 = vpop.f32.mrf.mxu0
        %6148 = vdwg.mxu0
        %6149 = vmatprep.subr.bf16.mxu0 0
        %6150 = vmatpush1.bf16.msra.mxu0 %v4532
        %6151 = vmatprep.subr.bf16.mxu0 0
        %6152 = vmatpush1.bf16.msra.mxu0 %v4531
        %6153 = vmatprep.subr.bf16.mxu0 0
        %6154 = vmatpush1.bf16.msra.mxu0 %v4530
        %6155 = vmatprep.subr.bf16.mxu0 0
        %6156 = vmatpush1.bf16.msra.mxu0 %v4529
        %6157 = vmatprep.subr.bf16.mxu0 0
        %6158 = vmatpush1.bf16.msra.mxu0 %v4528
        %6159 = vmatprep.subr.bf16.mxu0 0
        %6160 = vmatpush1.bf16.msra.mxu0 %v4527
        %6161 = vmatprep.subr.bf16.mxu0 0
        %6162 = vmatpush1.bf16.msra.mxu0 %v4526
        %6163 = vmatprep.subr.bf16.mxu0 0
        %6164 = vmatpush1.bf16.msra.mxu0 %v4525
        %6165 = vmatprep.subr.bf16.mxu0 0
        %6166 = vmatpush2.bf16.msra.mxu0 %v4540
        %6167 = vmatprep.subr.bf16.mxu0 0
        %6168 = vmatpush2.bf16.msra.mxu0 %v4539
        %6169 = vmatprep.subr.bf16.mxu0 0
        %6170 = vmatpush2.bf16.msra.mxu0 %v4538
        %6171 = vmatprep.subr.bf16.mxu0 0
        %6172 = vmatpush2.bf16.msra.mxu0 %v4537
        %6173 = vmatprep.subr.bf16.mxu0 0
        %6174 = vmatpush2.bf16.msra.mxu0 %v4536
        %6175 = vmatprep.subr.bf16.mxu0 0
        %6176 = vmatpush2.bf16.msra.mxu0 %v4535
        %6177 = vmatprep.subr.bf16.mxu0 0
        %6178 = vmatpush2.bf16.msra.mxu0 %v4534
        %6179 = vmatprep.subr.bf16.mxu0 0
        %6180 = vmatpush2.bf16.msra.mxu0 %v4533
        %6181 = vmatprep.mubr.bf16.mxu0 %v1040
        %6182 = vmatmul.mubr.bf16.gmra.mxu0 %v1039
        %v6183 = vpop.f32.mrf.mxu0
        %v6184 = vadd.f32 %v6144, %v6183
        %v6185 = vpop.f32.mrf.mxu0
        %v6186 = vpop.f32.mrf.mxu0
        %v6187 = vpop.f32.mrf.mxu0
        %6188 = vdwg.mxu0
        %6189 = vmatprep.subr.bf16.mxu0 0
        %6190 = vmatpush1.bf16.msra.mxu0 %v4548
        %6191 = vmatprep.subr.bf16.mxu0 0
        %6192 = vmatpush1.bf16.msra.mxu0 %v4547
        %6193 = vmatprep.subr.bf16.mxu0 0
        %6194 = vmatpush1.bf16.msra.mxu0 %v4546
        %6195 = vmatprep.subr.bf16.mxu0 0
        %6196 = vmatpush1.bf16.msra.mxu0 %v4545
        %6197 = vmatprep.subr.bf16.mxu0 0
        %6198 = vmatpush1.bf16.msra.mxu0 %v4544
        %6199 = vmatprep.subr.bf16.mxu0 0
        %6200 = vmatpush1.bf16.msra.mxu0 %v4543
        %6201 = vmatprep.subr.bf16.mxu0 0
        %6202 = vmatpush1.bf16.msra.mxu0 %v4542
        %6203 = vmatprep.subr.bf16.mxu0 0
        %6204 = vmatpush1.bf16.msra.mxu0 %v4541
        %6205 = vmatprep.subr.bf16.mxu0 0
        %6206 = vmatpush2.bf16.msra.mxu0 %v4556
        %6207 = vmatprep.subr.bf16.mxu0 0
        %6208 = vmatpush2.bf16.msra.mxu0 %v4555
        %6209 = vmatprep.subr.bf16.mxu0 0
        %6210 = vmatpush2.bf16.msra.mxu0 %v4554
        %6211 = vmatprep.subr.bf16.mxu0 0
        %6212 = vmatpush2.bf16.msra.mxu0 %v4553
        %6213 = vmatprep.subr.bf16.mxu0 0
        %6214 = vmatpush2.bf16.msra.mxu0 %v4552
        %6215 = vmatprep.subr.bf16.mxu0 0
        %6216 = vmatpush2.bf16.msra.mxu0 %v4551
        %6217 = vmatprep.subr.bf16.mxu0 0
        %6218 = vmatpush2.bf16.msra.mxu0 %v4550
        %6219 = vmatprep.subr.bf16.mxu0 0
        %6220 = vmatpush2.bf16.msra.mxu0 %v4549
        %6221 = vmatprep.mubr.bf16.mxu0 %v1042
        %6222 = vmatmul.mubr.bf16.gmra.mxu0 %v1041
        %v6223 = vpop.f32.mrf.mxu0
        %v6224 = vadd.f32 %v6184, %v6223
        %v6225 = vpop.f32.mrf.mxu0
        %v6226 = vpop.f32.mrf.mxu0
        %v6227 = vpop.f32.mrf.mxu0
        %6228 = vdwg.mxu0
        %6229 = vmatprep.subr.bf16.mxu0 0
        %6230 = vmatpush1.bf16.msra.mxu0 %v4564
        %6231 = vmatprep.subr.bf16.mxu0 0
        %6232 = vmatpush1.bf16.msra.mxu0 %v4563
        %6233 = vmatprep.subr.bf16.mxu0 0
        %6234 = vmatpush1.bf16.msra.mxu0 %v4562
        %6235 = vmatprep.subr.bf16.mxu0 0
        %6236 = vmatpush1.bf16.msra.mxu0 %v4561
        %6237 = vmatprep.subr.bf16.mxu0 0
        %6238 = vmatpush1.bf16.msra.mxu0 %v4560
        %6239 = vmatprep.subr.bf16.mxu0 0
        %6240 = vmatpush1.bf16.msra.mxu0 %v4559
        %6241 = vmatprep.subr.bf16.mxu0 0
        %6242 = vmatpush1.bf16.msra.mxu0 %v4558
        %6243 = vmatprep.subr.bf16.mxu0 0
        %6244 = vmatpush1.bf16.msra.mxu0 %v4557
        %6245 = vmatprep.subr.bf16.mxu0 0
        %6246 = vmatpush2.bf16.msra.mxu0 %v4572
        %6247 = vmatprep.subr.bf16.mxu0 0
        %6248 = vmatpush2.bf16.msra.mxu0 %v4571
        %6249 = vmatprep.subr.bf16.mxu0 0
        %6250 = vmatpush2.bf16.msra.mxu0 %v4570
        %6251 = vmatprep.subr.bf16.mxu0 0
        %6252 = vmatpush2.bf16.msra.mxu0 %v4569
        %6253 = vmatprep.subr.bf16.mxu0 0
        %6254 = vmatpush2.bf16.msra.mxu0 %v4568
        %6255 = vmatprep.subr.bf16.mxu0 0
        %6256 = vmatpush2.bf16.msra.mxu0 %v4567
        %6257 = vmatprep.subr.bf16.mxu0 0
        %6258 = vmatpush2.bf16.msra.mxu0 %v4566
        %6259 = vmatprep.subr.bf16.mxu0 0
        %6260 = vmatpush2.bf16.msra.mxu0 %v4565
        %6261 = vmatprep.mubr.bf16.mxu0 %v1044
        %6262 = vmatmul.mubr.bf16.gmra.mxu0 %v1043
        %v6263 = vpop.f32.mrf.mxu0
        %v6264 = vadd.f32 %v6224, %v6263
        %v6265 = vpop.f32.mrf.mxu0
        %v6266 = vpop.f32.mrf.mxu0
        %v6267 = vpop.f32.mrf.mxu0
        %6268 = vdwg.mxu0
        %6269 = vmatprep.subr.bf16.mxu0 0
        %6270 = vmatpush1.bf16.msra.mxu0 %v4580
        %6271 = vmatprep.subr.bf16.mxu0 0
        %6272 = vmatpush1.bf16.msra.mxu0 %v4579
        %6273 = vmatprep.subr.bf16.mxu0 0
        %6274 = vmatpush1.bf16.msra.mxu0 %v4578
        %6275 = vmatprep.subr.bf16.mxu0 0
        %6276 = vmatpush1.bf16.msra.mxu0 %v4577
        %6277 = vmatprep.subr.bf16.mxu0 0
        %6278 = vmatpush1.bf16.msra.mxu0 %v4576
        %6279 = vmatprep.subr.bf16.mxu0 0
        %6280 = vmatpush1.bf16.msra.mxu0 %v4575
        %6281 = vmatprep.subr.bf16.mxu0 0
        %6282 = vmatpush1.bf16.msra.mxu0 %v4574
        %6283 = vmatprep.subr.bf16.mxu0 0
        %6284 = vmatpush1.bf16.msra.mxu0 %v4573
        %6285 = vmatprep.subr.bf16.mxu0 0
        %6286 = vmatpush2.bf16.msra.mxu0 %v4588
        %6287 = vmatprep.subr.bf16.mxu0 0
        %6288 = vmatpush2.bf16.msra.mxu0 %v4587
        %6289 = vmatprep.subr.bf16.mxu0 0
        %6290 = vmatpush2.bf16.msra.mxu0 %v4586
        %6291 = vmatprep.subr.bf16.mxu0 0
        %6292 = vmatpush2.bf16.msra.mxu0 %v4585
        %6293 = vmatprep.subr.bf16.mxu0 0
        %6294 = vmatpush2.bf16.msra.mxu0 %v4584
        %6295 = vmatprep.subr.bf16.mxu0 0
        %6296 = vmatpush2.bf16.msra.mxu0 %v4583
        %6297 = vmatprep.subr.bf16.mxu0 0
        %6298 = vmatpush2.bf16.msra.mxu0 %v4582
        %6299 = vmatprep.subr.bf16.mxu0 0
        %6300 = vmatpush2.bf16.msra.mxu0 %v4581
        %6301 = vmatprep.mubr.bf16.mxu0 %v1046
        %6302 = vmatmul.mubr.bf16.gmra.mxu0 %v1045
        %v6303 = vpop.f32.mrf.mxu0
        %v6304 = vadd.f32 %v6264, %v6303
        %v6305 = vpop.f32.mrf.mxu0
        %v6306 = vpop.f32.mrf.mxu0
        %v6307 = vpop.f32.mrf.mxu0
        %6308 = vdwg.mxu0
        %6309 = vmatprep.subr.bf16.mxu0 0
        %6310 = vmatpush1.bf16.msra.mxu0 %v4596
        %6311 = vmatprep.subr.bf16.mxu0 0
        %6312 = vmatpush1.bf16.msra.mxu0 %v4595
        %6313 = vmatprep.subr.bf16.mxu0 0
        %6314 = vmatpush1.bf16.msra.mxu0 %v4594
        %6315 = vmatprep.subr.bf16.mxu0 0
        %6316 = vmatpush1.bf16.msra.mxu0 %v4593
        %6317 = vmatprep.subr.bf16.mxu0 0
        %6318 = vmatpush1.bf16.msra.mxu0 %v4592
        %6319 = vmatprep.subr.bf16.mxu0 0
        %6320 = vmatpush1.bf16.msra.mxu0 %v4591
        %6321 = vmatprep.subr.bf16.mxu0 0
        %6322 = vmatpush1.bf16.msra.mxu0 %v4590
        %6323 = vmatprep.subr.bf16.mxu0 0
        %6324 = vmatpush1.bf16.msra.mxu0 %v4589
        %6325 = vmatprep.subr.bf16.mxu0 0
        %6326 = vmatpush2.bf16.msra.mxu0 %v4604
        %6327 = vmatprep.subr.bf16.mxu0 0
        %6328 = vmatpush2.bf16.msra.mxu0 %v4603
        %6329 = vmatprep.subr.bf16.mxu0 0
        %6330 = vmatpush2.bf16.msra.mxu0 %v4602
        %6331 = vmatprep.subr.bf16.mxu0 0
        %6332 = vmatpush2.bf16.msra.mxu0 %v4601
        %6333 = vmatprep.subr.bf16.mxu0 0
        %6334 = vmatpush2.bf16.msra.mxu0 %v4600
        %6335 = vmatprep.subr.bf16.mxu0 0
        %6336 = vmatpush2.bf16.msra.mxu0 %v4599
        %6337 = vmatprep.subr.bf16.mxu0 0
        %6338 = vmatpush2.bf16.msra.mxu0 %v4598
        %6339 = vmatprep.subr.bf16.mxu0 0
        %6340 = vmatpush2.bf16.msra.mxu0 %v4597
        %6341 = vmatprep.mubr.bf16.mxu0 %v1048
        %6342 = vmatmul.mubr.bf16.gmra.mxu0 %v1047
        %v6343 = vpop.f32.mrf.mxu0
        %v6344 = vadd.f32 %v6304, %v6343
        %v6345 = vpop.f32.mrf.mxu0
        %v6346 = vpop.f32.mrf.mxu0
        %v6347 = vpop.f32.mrf.mxu0
        %6348 = vdwg.mxu0
        %6349 = vmatprep.subr.bf16.mxu0 0
        %6350 = vmatpush1.bf16.msra.mxu0 %v4612
        %6351 = vmatprep.subr.bf16.mxu0 0
        %6352 = vmatpush1.bf16.msra.mxu0 %v4611
        %6353 = vmatprep.subr.bf16.mxu0 0
        %6354 = vmatpush1.bf16.msra.mxu0 %v4610
        %6355 = vmatprep.subr.bf16.mxu0 0
        %6356 = vmatpush1.bf16.msra.mxu0 %v4609
        %6357 = vmatprep.subr.bf16.mxu0 0
        %6358 = vmatpush1.bf16.msra.mxu0 %v4608
        %6359 = vmatprep.subr.bf16.mxu0 0
        %6360 = vmatpush1.bf16.msra.mxu0 %v4607
        %6361 = vmatprep.subr.bf16.mxu0 0
        %6362 = vmatpush1.bf16.msra.mxu0 %v4606
        %6363 = vmatprep.subr.bf16.mxu0 0
        %6364 = vmatpush1.bf16.msra.mxu0 %v4605
        %6365 = vmatprep.subr.bf16.mxu0 0
        %6366 = vmatpush2.bf16.msra.mxu0 %v4620
        %6367 = vmatprep.subr.bf16.mxu0 0
        %6368 = vmatpush2.bf16.msra.mxu0 %v4619
        %6369 = vmatprep.subr.bf16.mxu0 0
        %6370 = vmatpush2.bf16.msra.mxu0 %v4618
        %6371 = vmatprep.subr.bf16.mxu0 0
        %6372 = vmatpush2.bf16.msra.mxu0 %v4617
        %6373 = vmatprep.subr.bf16.mxu0 0
        %6374 = vmatpush2.bf16.msra.mxu0 %v4616
        %6375 = vmatprep.subr.bf16.mxu0 0
        %6376 = vmatpush2.bf16.msra.mxu0 %v4615
        %6377 = vmatprep.subr.bf16.mxu0 0
        %6378 = vmatpush2.bf16.msra.mxu0 %v4614
        %6379 = vmatprep.subr.bf16.mxu0 0
        %6380 = vmatpush2.bf16.msra.mxu0 %v4613
        %6381 = vmatprep.mubr.bf16.mxu0 %v1050
        %6382 = vmatmul.mubr.bf16.gmra.mxu0 %v1049
        %v6383 = vpop.f32.mrf.mxu0
        %v6384 = vadd.f32 %v6344, %v6383
        %v6385 = vpop.f32.mrf.mxu0
        %v6386 = vpop.f32.mrf.mxu0
        %v6387 = vpop.f32.mrf.mxu0
        %6388 = vdwg.mxu0
        %6389 = vmatprep.subr.bf16.mxu0 0
        %6390 = vmatpush1.bf16.msra.mxu0 %v4628
        %6391 = vmatprep.subr.bf16.mxu0 0
        %6392 = vmatpush1.bf16.msra.mxu0 %v4627
        %6393 = vmatprep.subr.bf16.mxu0 0
        %6394 = vmatpush1.bf16.msra.mxu0 %v4626
        %6395 = vmatprep.subr.bf16.mxu0 0
        %6396 = vmatpush1.bf16.msra.mxu0 %v4625
        %6397 = vmatprep.subr.bf16.mxu0 0
        %6398 = vmatpush1.bf16.msra.mxu0 %v4624
        %6399 = vmatprep.subr.bf16.mxu0 0
        %6400 = vmatpush1.bf16.msra.mxu0 %v4623
        %6401 = vmatprep.subr.bf16.mxu0 0
        %6402 = vmatpush1.bf16.msra.mxu0 %v4622
        %6403 = vmatprep.subr.bf16.mxu0 0
        %6404 = vmatpush1.bf16.msra.mxu0 %v4621
        %6405 = vmatprep.subr.bf16.mxu0 0
        %6406 = vmatpush2.bf16.msra.mxu0 %v4636
        %6407 = vmatprep.subr.bf16.mxu0 0
        %6408 = vmatpush2.bf16.msra.mxu0 %v4635
        %6409 = vmatprep.subr.bf16.mxu0 0
        %6410 = vmatpush2.bf16.msra.mxu0 %v4634
        %6411 = vmatprep.subr.bf16.mxu0 0
        %6412 = vmatpush2.bf16.msra.mxu0 %v4633
        %6413 = vmatprep.subr.bf16.mxu0 0
        %6414 = vmatpush2.bf16.msra.mxu0 %v4632
        %6415 = vmatprep.subr.bf16.mxu0 0
        %6416 = vmatpush2.bf16.msra.mxu0 %v4631
        %6417 = vmatprep.subr.bf16.mxu0 0
        %6418 = vmatpush2.bf16.msra.mxu0 %v4630
        %6419 = vmatprep.subr.bf16.mxu0 0
        %6420 = vmatpush2.bf16.msra.mxu0 %v4629
        %6421 = vmatprep.mubr.bf16.mxu0 %v1052
        %6422 = vmatmul.mubr.bf16.gmra.mxu0 %v1051
        %v6423 = vpop.f32.mrf.mxu0
        %v6424 = vadd.f32 %v6384, %v6423
        %v6425 = vpop.f32.mrf.mxu0
        %v6426 = vpop.f32.mrf.mxu0
        %v6427 = vpop.f32.mrf.mxu0
        %6428 = vdwg.mxu0
        %v6429 = vadd.f32 %v620, %v6424
        %vm6430 = vcmask 812032
        %6431 = vst.msk [vmem:[#allocation2] sm:$0x3] %vm6430, %v6429
        %p6432 = scmp.eq.s32.totalorder %s31, 3
        // Predicated region
        $region101: #{tpu_custom_call.1} parent=95 // pred_check
          %p6433 = pneg %p6432
        $region102: #{tpu_custom_call.1} parent=95 // pred_check_branch
          %6435 = sbr.rel (%p6433) target = $region104
        $region103: #{tpu_custom_call.1} parent=95 // pred_region
          %v6436 = vld [vmem:[#allocation2] sm:$0x3]
          %v6437 = vld [vmem:[%s2] sm:$0x1]
          %v6439 = vlaneseq
          %v6440 = vshrl.u32 %v6439, 7
          %v6441 = vsub.s32 0, %v6440
          %v6442 = vrot.slane %v6437, %v6441
          %v6444 = vadd.f32 %v6436, %v6442
          %v6445 = vmax.f32 %v6444, 0.0
          %v6446 = vld [vmem:[%s3] sm:$0xff]
          %v6447 = vld [vmem:[%s3 + $0x8] sm:$0xff]
          %v6448 = vld [vmem:[%s3 + $0x10] sm:$0xff]
          %v6449 = vld [vmem:[%s3 + $0x18] sm:$0xff]
          %v6450 = vld [vmem:[%s3 + $0x20] sm:$0xff]
          %v6451 = vld [vmem:[%s3 + $0x28] sm:$0xff]
          %v6452 = vld [vmem:[%s3 + $0x30] sm:$0xff]
          %v6453 = vld [vmem:[%s3 + $0x38] sm:$0xff]
          %v6454 = vld [vmem:[%s3 + $0x40] sm:$0xff]
          %v6455 = vld [vmem:[%s3 + $0x48] sm:$0xff]
          %v6456 = vld [vmem:[%s3 + $0x50] sm:$0xff]
          %v6457 = vld [vmem:[%s3 + $0x58] sm:$0xff]
          %v6458 = vld [vmem:[%s3 + $0x60] sm:$0xf]
          %v6459 = vld [vmem:[%s4] sm:$0x1]
          %v6461 = vlaneseq
          %v6462 = vshrl.u32 %v6461, 7
          %v6463 = vsub.s32 0, %v6462
          %v6464 = vrot.slane %v6459, %v6463
          %vm6466 = vcmask 818176
          %v6468 = vsel %vm6466, %v6445, 0
          %vm6470 = vcmask 1043456
          %v6472 = vsel %vm6470, %v6458, 0
          %6474 = vmatprep.subr.mxu0 0.0
          %6475 = vmatpush1.msra.mxu0 0.0
          %6476 = vmatprep.subr.mxu0 0.0
          %6477 = vmatpush1.msra.mxu0 0.0
          %6478 = vmatprep.subr.mxu0 0.0
          %6479 = vmatpush1.msra.mxu0 0.0
          %6480 = vmatprep.subr.mxu0 0.0
          %6481 = vmatpush1.msra.mxu0 %v6472
          %6482 = vmatprep.subr.mxu0 0.0
          %6483 = vmatpush1.msra.mxu0 %v6457
          %6484 = vmatprep.subr.mxu0 0.0
          %6485 = vmatpush1.msra.mxu0 %v6456
          %6486 = vmatprep.subr.mxu0 0.0
          %6487 = vmatpush1.msra.mxu0 %v6455
          %6488 = vmatprep.subr.mxu0 0.0
          %6489 = vmatpush1.msra.mxu0 %v6454
          %6490 = vmatprep.subr.mxu0 0.0
          %6491 = vmatpush1.msra.mxu0 %v6453
          %6492 = vmatprep.subr.mxu0 0.0
          %6493 = vmatpush1.msra.mxu0 %v6452
          %6494 = vmatprep.subr.mxu0 0.0
          %6495 = vmatpush1.msra.mxu0 %v6451
          %6496 = vmatprep.subr.mxu0 0.0
          %6497 = vmatpush1.msra.mxu0 %v6450
          %6498 = vmatprep.subr.mxu0 0.0
          %6499 = vmatpush1.msra.mxu0 %v6449
          %6500 = vmatprep.subr.mxu0 0.0
          %6501 = vmatpush1.msra.mxu0 %v6448
          %6502 = vmatprep.subr.mxu0 0.0
          %6503 = vmatpush1.msra.mxu0 %v6447
          %6504 = vmatprep.subr.mxu0 0.0
          %6505 = vmatpush1.msra.mxu0 %v6446
          %6506 = vmatprep.subr.mxu0 0.0
          %6507 = vmatpush2.msra.mxu0 0.0
          %6508 = vmatprep.subr.mxu0 0.0
          %6509 = vmatpush2.msra.mxu0 0.0
          %6510 = vmatprep.subr.mxu0 0.0
          %6511 = vmatpush2.msra.mxu0 0.0
          %6512 = vmatprep.subr.mxu0 0.0
          %6513 = vmatpush2.msra.mxu0 0.0
          %6514 = vmatprep.subr.mxu0 0.0
          %6515 = vmatpush2.msra.mxu0 0.0
          %6516 = vmatprep.subr.mxu0 0.0
          %6517 = vmatpush2.msra.mxu0 0.0
          %6518 = vmatprep.subr.mxu0 0.0
          %6519 = vmatpush2.msra.mxu0 0.0
          %6520 = vmatprep.subr.mxu0 0.0
          %6521 = vmatpush2.msra.mxu0 0.0
          %6522 = vmatprep.subr.mxu0 0.0
          %6523 = vmatpush2.msra.mxu0 0.0
          %6524 = vmatprep.subr.mxu0 0.0
          %6525 = vmatpush2.msra.mxu0 0.0
          %6526 = vmatprep.subr.mxu0 0.0
          %6527 = vmatpush2.msra.mxu0 0.0
          %6528 = vmatprep.subr.mxu0 0.0
          %6529 = vmatpush2.msra.mxu0 0.0
          %6530 = vmatprep.subr.mxu0 0.0
          %6531 = vmatpush2.msra.mxu0 0.0
          %6532 = vmatprep.subr.mxu0 0.0
          %6533 = vmatpush2.msra.mxu0 0.0
          %6534 = vmatprep.subr.mxu0 0.0
          %6535 = vmatpush2.msra.mxu0 0.0
          %6536 = vmatprep.subr.mxu0 0.0
          %6537 = vmatpush2.msra.mxu0 0.0
          %6538 = vmatprep.mubr.f32.mxu0 0.0
          %6539 = vmatmul.mubr.f32.gmra.mxu0 %v6468
          %v6540 = vpop.f32.mrf.mxu0
          %v6541 = vadd.f32 %v6464, %v6540
          %v6542 = vpop.f32.mrf.mxu0
          %6543 = vdwg.mxu0
          %v6544 = vmax.f32 %v6541, 0.0
          %v6545 = vld [vmem:[%s5] sm:$0xff]
          %v6546 = vld [vmem:[%s5 + $0x8] sm:$0xff]
          %v6547 = vld [vmem:[%s5 + $0x10] sm:$0xff]
          %v6548 = vld [vmem:[%s5 + $0x18] sm:$0xff]
          %v6549 = vld [vmem:[%s5 + $0x20] sm:$0xff]
          %v6550 = vld [vmem:[%s5 + $0x28] sm:$0xff]
          %v6551 = vld [vmem:[%s5 + $0x30] sm:$0x1]
          %v6552 = vld [vmem:[%s6] sm:$0x1]
          %v6554 = vlaneseq
          %v6555 = vshrl.u32 %v6554, 7
          %v6556 = vsub.s32 0, %v6555
          %v6557 = vrot.slane %v6552, %v6556
          %vm6559 = vcmask 400384
          %v6561 = vsel %vm6559, %v6544, 0
          %vm6563 = vcmask 1040384
          %v6565 = vsel %vm6563, %v6551, 0
          %6567 = vmatprep.subr.mxu0 0.0
          %6568 = vmatpush1.msra.mxu0 0.0
          %6569 = vmatprep.subr.mxu0 0.0
          %6570 = vmatpush1.msra.mxu0 0.0
          %6571 = vmatprep.subr.mxu0 0.0
          %6572 = vmatpush1.msra.mxu0 0.0
          %6573 = vmatprep.subr.mxu0 0.0
          %6574 = vmatpush1.msra.mxu0 0.0
          %6575 = vmatprep.subr.mxu0 0.0
          %6576 = vmatpush1.msra.mxu0 0.0
          %6577 = vmatprep.subr.mxu0 0.0
          %6578 = vmatpush1.msra.mxu0 0.0
          %6579 = vmatprep.subr.mxu0 0.0
          %6580 = vmatpush1.msra.mxu0 0.0
          %6581 = vmatprep.subr.mxu0 0.0
          %6582 = vmatpush1.msra.mxu0 0.0
          %6583 = vmatprep.subr.mxu0 0.0
          %6584 = vmatpush1.msra.mxu0 0.0
          %6585 = vmatprep.subr.mxu0 0.0
          %6586 = vmatpush1.msra.mxu0 %v6565
          %6587 = vmatprep.subr.mxu0 0.0
          %6588 = vmatpush1.msra.mxu0 %v6550
          %6589 = vmatprep.subr.mxu0 0.0
          %6590 = vmatpush1.msra.mxu0 %v6549
          %6591 = vmatprep.subr.mxu0 0.0
          %6592 = vmatpush1.msra.mxu0 %v6548
          %6593 = vmatprep.subr.mxu0 0.0
          %6594 = vmatpush1.msra.mxu0 %v6547
          %6595 = vmatprep.subr.mxu0 0.0
          %6596 = vmatpush1.msra.mxu0 %v6546
          %6597 = vmatprep.subr.mxu0 0.0
          %6598 = vmatpush1.msra.mxu0 %v6545
          %6599 = vmatprep.subr.mxu0 0.0
          %6600 = vmatpush2.msra.mxu0 0.0
          %6601 = vmatprep.subr.mxu0 0.0
          %6602 = vmatpush2.msra.mxu0 0.0
          %6603 = vmatprep.subr.mxu0 0.0
          %6604 = vmatpush2.msra.mxu0 0.0
          %6605 = vmatprep.subr.mxu0 0.0
          %6606 = vmatpush2.msra.mxu0 0.0
          %6607 = vmatprep.subr.mxu0 0.0
          %6608 = vmatpush2.msra.mxu0 0.0
          %6609 = vmatprep.subr.mxu0 0.0
          %6610 = vmatpush2.msra.mxu0 0.0
          %6611 = vmatprep.subr.mxu0 0.0
          %6612 = vmatpush2.msra.mxu0 0.0
          %6613 = vmatprep.subr.mxu0 0.0
          %6614 = vmatpush2.msra.mxu0 0.0
          %6615 = vmatprep.subr.mxu0 0.0
          %6616 = vmatpush2.msra.mxu0 0.0
          %6617 = vmatprep.subr.mxu0 0.0
          %6618 = vmatpush2.msra.mxu0 0.0
          %6619 = vmatprep.subr.mxu0 0.0
          %6620 = vmatpush2.msra.mxu0 0.0
          %6621 = vmatprep.subr.mxu0 0.0
          %6622 = vmatpush2.msra.mxu0 0.0
          %6623 = vmatprep.subr.mxu0 0.0
          %6624 = vmatpush2.msra.mxu0 0.0
          %6625 = vmatprep.subr.mxu0 0.0
          %6626 = vmatpush2.msra.mxu0 0.0
          %6627 = vmatprep.subr.mxu0 0.0
          %6628 = vmatpush2.msra.mxu0 0.0
          %6629 = vmatprep.subr.mxu0 0.0
          %6630 = vmatpush2.msra.mxu0 0.0
          %6631 = vmatprep.mubr.f32.mxu0 0.0
          %6632 = vmatmul.mubr.f32.gmra.mxu0 %v6561
          %v6633 = vpop.f32.mrf.mxu0
          %v6634 = vadd.f32 %v6557, %v6633
          %v6635 = vpop.f32.mrf.mxu0
          %6636 = vdwg.mxu0
          %v6637 = vmax.f32 %v6634, 0.0
          %v6638 = vld [vmem:[%s7] sm:$0xff]
          %v6639 = vld [vmem:[%s7 + $0x8] sm:$0xff]
          %v6640 = vld [vmem:[%s7 + $0x10] sm:$0xff]
          %v6641 = vld [vmem:[%s7 + $0x18] sm:$0x1]
          %v6642 = vld [vmem:[%s8] sm:$0x1]
          %v6644 = vlaneseq
          %v6645 = vshrl.u32 %v6644, 7
          %v6646 = vsub.s32 0, %v6645
          %v6647 = vrot.slane %v6642, %v6646
          %vm6649 = vcmask 203776
          %v6651 = vsel %vm6649, %v6637, 0
          %v6654 = vsel %vm6563, %v6641, 0
          %6656 = vmatprep.subr.mxu0 0.0
          %6657 = vmatpush1.msra.mxu0 0.0
          %6658 = vmatprep.subr.mxu0 0.0
          %6659 = vmatpush1.msra.mxu0 0.0
          %6660 = vmatprep.subr.mxu0 0.0
          %6661 = vmatpush1.msra.mxu0 0.0
          %6662 = vmatprep.subr.mxu0 0.0
          %6663 = vmatpush1.msra.mxu0 0.0
          %6664 = vmatprep.subr.mxu0 0.0
          %6665 = vmatpush1.msra.mxu0 0.0
          %6666 = vmatprep.subr.mxu0 0.0
          %6667 = vmatpush1.msra.mxu0 0.0
          %6668 = vmatprep.subr.mxu0 0.0
          %6669 = vmatpush1.msra.mxu0 0.0
          %6670 = vmatprep.subr.mxu0 0.0
          %6671 = vmatpush1.msra.mxu0 0.0
          %6672 = vmatprep.subr.mxu0 0.0
          %6673 = vmatpush1.msra.mxu0 0.0
          %6674 = vmatprep.subr.mxu0 0.0
          %6675 = vmatpush1.msra.mxu0 0.0
          %6676 = vmatprep.subr.mxu0 0.0
          %6677 = vmatpush1.msra.mxu0 0.0
          %6678 = vmatprep.subr.mxu0 0.0
          %6679 = vmatpush1.msra.mxu0 0.0
          %6680 = vmatprep.subr.mxu0 0.0
          %6681 = vmatpush1.msra.mxu0 %v6654
          %6682 = vmatprep.subr.mxu0 0.0
          %6683 = vmatpush1.msra.mxu0 %v6640
          %6684 = vmatprep.subr.mxu0 0.0
          %6685 = vmatpush1.msra.mxu0 %v6639
          %6686 = vmatprep.subr.mxu0 0.0
          %6687 = vmatpush1.msra.mxu0 %v6638
          %6688 = vmatprep.subr.mxu0 0.0
          %6689 = vmatpush2.msra.mxu0 0.0
          %6690 = vmatprep.subr.mxu0 0.0
          %6691 = vmatpush2.msra.mxu0 0.0
          %6692 = vmatprep.subr.mxu0 0.0
          %6693 = vmatpush2.msra.mxu0 0.0
          %6694 = vmatprep.subr.mxu0 0.0
          %6695 = vmatpush2.msra.mxu0 0.0
          %6696 = vmatprep.subr.mxu0 0.0
          %6697 = vmatpush2.msra.mxu0 0.0
          %6698 = vmatprep.subr.mxu0 0.0
          %6699 = vmatpush2.msra.mxu0 0.0
          %6700 = vmatprep.subr.mxu0 0.0
          %6701 = vmatpush2.msra.mxu0 0.0
          %6702 = vmatprep.subr.mxu0 0.0
          %6703 = vmatpush2.msra.mxu0 0.0
          %6704 = vmatprep.subr.mxu0 0.0
          %6705 = vmatpush2.msra.mxu0 0.0
          %6706 = vmatprep.subr.mxu0 0.0
          %6707 = vmatpush2.msra.mxu0 0.0
          %6708 = vmatprep.subr.mxu0 0.0
          %6709 = vmatpush2.msra.mxu0 0.0
          %6710 = vmatprep.subr.mxu0 0.0
          %6711 = vmatpush2.msra.mxu0 0.0
          %6712 = vmatprep.subr.mxu0 0.0
          %6713 = vmatpush2.msra.mxu0 0.0
          %6714 = vmatprep.subr.mxu0 0.0
          %6715 = vmatpush2.msra.mxu0 0.0
          %6716 = vmatprep.subr.mxu0 0.0
          %6717 = vmatpush2.msra.mxu0 0.0
          %6718 = vmatprep.subr.mxu0 0.0
          %6719 = vmatpush2.msra.mxu0 0.0
          %6720 = vmatprep.mubr.f32.mxu0 0.0
          %6721 = vmatmul.mubr.f32.gmra.mxu0 %v6651
          %v6722 = vpop.f32.mrf.mxu0
          %v6723 = vadd.f32 %v6647, %v6722
          %v6724 = vpop.f32.mrf.mxu0
          %6725 = vdwg.mxu0
          %v6726 = vmax.f32 %v6723, 0.0
          %v6727 = vld [vmem:[%s9] sm:$0xff]
          %v6728 = vld [vmem:[%s9 + $0x8] sm:$0x1]
          %v6729 = vld [vmem:[%s10] sm:$0x1]
          %v6731 = vlaneseq
          %v6732 = vshrl.u32 %v6731, 7
          %v6733 = vsub.s32 0, %v6732
          %v6734 = vrot.slane %v6729, %v6733
          %vm6736 = vcmask 72704
          %v6738 = vsel %vm6736, %v6726, 0
          %v6741 = vsel %vm6563, %v6728, 0
          %6743 = vmatprep.subr.mxu0 0.0
          %6744 = vmatpush1.msra.mxu0 0.0
          %6745 = vmatprep.subr.mxu0 0.0
          %6746 = vmatpush1.msra.mxu0 0.0
          %6747 = vmatprep.subr.mxu0 0.0
          %6748 = vmatpush1.msra.mxu0 0.0
          %6749 = vmatprep.subr.mxu0 0.0
          %6750 = vmatpush1.msra.mxu0 0.0
          %6751 = vmatprep.subr.mxu0 0.0
          %6752 = vmatpush1.msra.mxu0 0.0
          %6753 = vmatprep.subr.mxu0 0.0
          %6754 = vmatpush1.msra.mxu0 0.0
          %6755 = vmatprep.subr.mxu0 0.0
          %6756 = vmatpush1.msra.mxu0 0.0
          %6757 = vmatprep.subr.mxu0 0.0
          %6758 = vmatpush1.msra.mxu0 0.0
          %6759 = vmatprep.subr.mxu0 0.0
          %6760 = vmatpush1.msra.mxu0 0.0
          %6761 = vmatprep.subr.mxu0 0.0
          %6762 = vmatpush1.msra.mxu0 0.0
          %6763 = vmatprep.subr.mxu0 0.0
          %6764 = vmatpush1.msra.mxu0 0.0
          %6765 = vmatprep.subr.mxu0 0.0
          %6766 = vmatpush1.msra.mxu0 0.0
          %6767 = vmatprep.subr.mxu0 0.0
          %6768 = vmatpush1.msra.mxu0 0.0
          %6769 = vmatprep.subr.mxu0 0.0
          %6770 = vmatpush1.msra.mxu0 0.0
          %6771 = vmatprep.subr.mxu0 0.0
          %6772 = vmatpush1.msra.mxu0 %v6741
          %6773 = vmatprep.subr.mxu0 0.0
          %6774 = vmatpush1.msra.mxu0 %v6727
          %6775 = vmatprep.subr.mxu0 0.0
          %6776 = vmatpush2.msra.mxu0 0.0
          %6777 = vmatprep.subr.mxu0 0.0
          %6778 = vmatpush2.msra.mxu0 0.0
          %6779 = vmatprep.subr.mxu0 0.0
          %6780 = vmatpush2.msra.mxu0 0.0
          %6781 = vmatprep.subr.mxu0 0.0
          %6782 = vmatpush2.msra.mxu0 0.0
          %6783 = vmatprep.subr.mxu0 0.0
          %6784 = vmatpush2.msra.mxu0 0.0
          %6785 = vmatprep.subr.mxu0 0.0
          %6786 = vmatpush2.msra.mxu0 0.0
          %6787 = vmatprep.subr.mxu0 0.0
          %6788 = vmatpush2.msra.mxu0 0.0
          %6789 = vmatprep.subr.mxu0 0.0
          %6790 = vmatpush2.msra.mxu0 0.0
          %6791 = vmatprep.subr.mxu0 0.0
          %6792 = vmatpush2.msra.mxu0 0.0
          %6793 = vmatprep.subr.mxu0 0.0
          %6794 = vmatpush2.msra.mxu0 0.0
          %6795 = vmatprep.subr.mxu0 0.0
          %6796 = vmatpush2.msra.mxu0 0.0
          %6797 = vmatprep.subr.mxu0 0.0
          %6798 = vmatpush2.msra.mxu0 0.0
          %6799 = vmatprep.subr.mxu0 0.0
          %6800 = vmatpush2.msra.mxu0 0.0
          %6801 = vmatprep.subr.mxu0 0.0
          %6802 = vmatpush2.msra.mxu0 0.0
          %6803 = vmatprep.subr.mxu0 0.0
          %6804 = vmatpush2.msra.mxu0 0.0
          %6805 = vmatprep.subr.mxu0 0.0
          %6806 = vmatpush2.msra.mxu0 0.0
          %6807 = vmatprep.mubr.f32.mxu0 0.0
          %6808 = vmatmul.mubr.f32.gmra.mxu0 %v6738
          %v6809 = vpop.f32.mrf.mxu0
          %v6810 = vadd.f32 %v6734, %v6809
          %v6811 = vpop.f32.mrf.mxu0
          %6812 = vdwg.mxu0
          %v6813 = vld [vmem:[%s11] sm:$0xf]
          %v6814 = vld [vmem:[%s12] sm:$0x1]
          %v6816 = vlaneseq
          %v6817 = vshrl.u32 %v6816, 7
          %v6818 = vsub.s32 0, %v6817
          %v6819 = vrot.slane %v6814, %v6818
          %vm6821 = vcmask 31744
          %v6823 = vsel %vm6821, %v6810, 0
          %v6826 = vsel %vm6470, %v6813, 0
          %6828 = vmatprep.subr.mxu0 0.0
          %6829 = vmatpush1.msra.mxu0 0.0
          %6830 = vmatprep.subr.mxu0 0.0
          %6831 = vmatpush1.msra.mxu0 0.0
          %6832 = vmatprep.subr.mxu0 0.0
          %6833 = vmatpush1.msra.mxu0 0.0
          %6834 = vmatprep.subr.mxu0 0.0
          %6835 = vmatpush1.msra.mxu0 0.0
          %6836 = vmatprep.subr.mxu0 0.0
          %6837 = vmatpush1.msra.mxu0 0.0
          %6838 = vmatprep.subr.mxu0 0.0
          %6839 = vmatpush1.msra.mxu0 0.0
          %6840 = vmatprep.subr.mxu0 0.0
          %6841 = vmatpush1.msra.mxu0 0.0
          %6842 = vmatprep.subr.mxu0 0.0
          %6843 = vmatpush1.msra.mxu0 0.0
          %6844 = vmatprep.subr.mxu0 0.0
          %6845 = vmatpush1.msra.mxu0 0.0
          %6846 = vmatprep.subr.mxu0 0.0
          %6847 = vmatpush1.msra.mxu0 0.0
          %6848 = vmatprep.subr.mxu0 0.0
          %6849 = vmatpush1.msra.mxu0 0.0
          %6850 = vmatprep.subr.mxu0 0.0
          %6851 = vmatpush1.msra.mxu0 0.0
          %6852 = vmatprep.subr.mxu0 0.0
          %6853 = vmatpush1.msra.mxu0 0.0
          %6854 = vmatprep.subr.mxu0 0.0
          %6855 = vmatpush1.msra.mxu0 0.0
          %6856 = vmatprep.subr.mxu0 0.0
          %6857 = vmatpush1.msra.mxu0 0.0
          %6858 = vmatprep.subr.mxu0 0.0
          %6859 = vmatpush1.msra.mxu0 %v6826
          %6860 = vmatprep.subr.mxu0 0.0
          %6861 = vmatpush2.msra.mxu0 0.0
          %6862 = vmatprep.subr.mxu0 0.0
          %6863 = vmatpush2.msra.mxu0 0.0
          %6864 = vmatprep.subr.mxu0 0.0
          %6865 = vmatpush2.msra.mxu0 0.0
          %6866 = vmatprep.subr.mxu0 0.0
          %6867 = vmatpush2.msra.mxu0 0.0
          %6868 = vmatprep.subr.mxu0 0.0
          %6869 = vmatpush2.msra.mxu0 0.0
          %6870 = vmatprep.subr.mxu0 0.0
          %6871 = vmatpush2.msra.mxu0 0.0
          %6872 = vmatprep.subr.mxu0 0.0
          %6873 = vmatpush2.msra.mxu0 0.0
          %6874 = vmatprep.subr.mxu0 0.0
          %6875 = vmatpush2.msra.mxu0 0.0
          %6876 = vmatprep.subr.mxu0 0.0
          %6877 = vmatpush2.msra.mxu0 0.0
          %6878 = vmatprep.subr.mxu0 0.0
          %6879 = vmatpush2.msra.mxu0 0.0
          %6880 = vmatprep.subr.mxu0 0.0
          %6881 = vmatpush2.msra.mxu0 0.0
          %6882 = vmatprep.subr.mxu0 0.0
          %6883 = vmatpush2.msra.mxu0 0.0
          %6884 = vmatprep.subr.mxu0 0.0
          %6885 = vmatpush2.msra.mxu0 0.0
          %6886 = vmatprep.subr.mxu0 0.0
          %6887 = vmatpush2.msra.mxu0 0.0
          %6888 = vmatprep.subr.mxu0 0.0
          %6889 = vmatpush2.msra.mxu0 0.0
          %6890 = vmatprep.subr.mxu0 0.0
          %6891 = vmatpush2.msra.mxu0 0.0
          %6892 = vmatprep.mubr.f32.mxu0 0.0
          %6893 = vmatmul.mubr.f32.gmra.mxu0 %v6823
          %v6894 = vpop.f32.mrf.mxu0
          %v6895 = vadd.f32 %v6819, %v6894
          %v6896 = vpop.f32.mrf.mxu0
          %6897 = vdwg.mxu0
          %v6898 = vmax.f32 %v6895, 0.0
          %v6899 = vld [vmem:[%s13] sm:$0xff]
          %v6900 = vld [vmem:[%s13 + $0x8] sm:$0x1]
          %v6901 = vld [vmem:[%s14] sm:$0x1]
          %v6903 = vlaneseq
          %v6904 = vshrl.u32 %v6903, 7
          %v6905 = vsub.s32 0, %v6904
          %v6906 = vrot.slane %v6901, %v6905
          %v6909 = vsel %vm6736, %v6898, 0
          %v6912 = vsel %vm6563, %v6900, 0
          %6914 = vmatprep.subr.mxu0 0.0
          %6915 = vmatpush1.msra.mxu0 0.0
          %6916 = vmatprep.subr.mxu0 0.0
          %6917 = vmatpush1.msra.mxu0 0.0
          %6918 = vmatprep.subr.mxu0 0.0
          %6919 = vmatpush1.msra.mxu0 0.0
          %6920 = vmatprep.subr.mxu0 0.0
          %6921 = vmatpush1.msra.mxu0 0.0
          %6922 = vmatprep.subr.mxu0 0.0
          %6923 = vmatpush1.msra.mxu0 0.0
          %6924 = vmatprep.subr.mxu0 0.0
          %6925 = vmatpush1.msra.mxu0 0.0
          %6926 = vmatprep.subr.mxu0 0.0
          %6927 = vmatpush1.msra.mxu0 0.0
          %6928 = vmatprep.subr.mxu0 0.0
          %6929 = vmatpush1.msra.mxu0 0.0
          %6930 = vmatprep.subr.mxu0 0.0
          %6931 = vmatpush1.msra.mxu0 0.0
          %6932 = vmatprep.subr.mxu0 0.0
          %6933 = vmatpush1.msra.mxu0 0.0
          %6934 = vmatprep.subr.mxu0 0.0
          %6935 = vmatpush1.msra.mxu0 0.0
          %6936 = vmatprep.subr.mxu0 0.0
          %6937 = vmatpush1.msra.mxu0 0.0
          %6938 = vmatprep.subr.mxu0 0.0
          %6939 = vmatpush1.msra.mxu0 0.0
          %6940 = vmatprep.subr.mxu0 0.0
          %6941 = vmatpush1.msra.mxu0 0.0
          %6942 = vmatprep.subr.mxu0 0.0
          %6943 = vmatpush1.msra.mxu0 %v6912
          %6944 = vmatprep.subr.mxu0 0.0
          %6945 = vmatpush1.msra.mxu0 %v6899
          %6946 = vmatprep.subr.mxu0 0.0
          %6947 = vmatpush2.msra.mxu0 0.0
          %6948 = vmatprep.subr.mxu0 0.0
          %6949 = vmatpush2.msra.mxu0 0.0
          %6950 = vmatprep.subr.mxu0 0.0
          %6951 = vmatpush2.msra.mxu0 0.0
          %6952 = vmatprep.subr.mxu0 0.0
          %6953 = vmatpush2.msra.mxu0 0.0
          %6954 = vmatprep.subr.mxu0 0.0
          %6955 = vmatpush2.msra.mxu0 0.0
          %6956 = vmatprep.subr.mxu0 0.0
          %6957 = vmatpush2.msra.mxu0 0.0
          %6958 = vmatprep.subr.mxu0 0.0
          %6959 = vmatpush2.msra.mxu0 0.0
          %6960 = vmatprep.subr.mxu0 0.0
          %6961 = vmatpush2.msra.mxu0 0.0
          %6962 = vmatprep.subr.mxu0 0.0
          %6963 = vmatpush2.msra.mxu0 0.0
          %6964 = vmatprep.subr.mxu0 0.0
          %6965 = vmatpush2.msra.mxu0 0.0
          %6966 = vmatprep.subr.mxu0 0.0
          %6967 = vmatpush2.msra.mxu0 0.0
          %6968 = vmatprep.subr.mxu0 0.0
          %6969 = vmatpush2.msra.mxu0 0.0
          %6970 = vmatprep.subr.mxu0 0.0
          %6971 = vmatpush2.msra.mxu0 0.0
          %6972 = vmatprep.subr.mxu0 0.0
          %6973 = vmatpush2.msra.mxu0 0.0
          %6974 = vmatprep.subr.mxu0 0.0
          %6975 = vmatpush2.msra.mxu0 0.0
          %6976 = vmatprep.subr.mxu0 0.0
          %6977 = vmatpush2.msra.mxu0 0.0
          %6978 = vmatprep.mubr.f32.mxu0 0.0
          %6979 = vmatmul.mubr.f32.gmra.mxu0 %v6909
          %v6980 = vpop.f32.mrf.mxu0
          %v6981 = vadd.f32 %v6906, %v6980
          %v6982 = vpop.f32.mrf.mxu0
          %6983 = vdwg.mxu0
          %v6984 = vmax.f32 %v6981, 0.0
          %v6985 = vld [vmem:[%s15] sm:$0xff]
          %v6986 = vld [vmem:[%s15 + $0x8] sm:$0xff]
          %v6987 = vld [vmem:[%s15 + $0x10] sm:$0xff]
          %v6988 = vld [vmem:[%s15 + $0x18] sm:$0x1]
          %v6989 = vld [vmem:[%s16] sm:$0x1]
          %v6991 = vlaneseq
          %v6992 = vshrl.u32 %v6991, 7
          %v6993 = vsub.s32 0, %v6992
          %v6994 = vrot.slane %v6989, %v6993
          %v6997 = vsel %vm6649, %v6984, 0
          %v7000 = vsel %vm6563, %v6988, 0
          %7002 = vmatprep.subr.mxu0 0.0
          %7003 = vmatpush1.msra.mxu0 0.0
          %7004 = vmatprep.subr.mxu0 0.0
          %7005 = vmatpush1.msra.mxu0 0.0
          %7006 = vmatprep.subr.mxu0 0.0
          %7007 = vmatpush1.msra.mxu0 0.0
          %7008 = vmatprep.subr.mxu0 0.0
          %7009 = vmatpush1.msra.mxu0 0.0
          %7010 = vmatprep.subr.mxu0 0.0
          %7011 = vmatpush1.msra.mxu0 0.0
          %7012 = vmatprep.subr.mxu0 0.0
          %7013 = vmatpush1.msra.mxu0 0.0
          %7014 = vmatprep.subr.mxu0 0.0
          %7015 = vmatpush1.msra.mxu0 0.0
          %7016 = vmatprep.subr.mxu0 0.0
          %7017 = vmatpush1.msra.mxu0 0.0
          %7018 = vmatprep.subr.mxu0 0.0
          %7019 = vmatpush1.msra.mxu0 0.0
          %7020 = vmatprep.subr.mxu0 0.0
          %7021 = vmatpush1.msra.mxu0 0.0
          %7022 = vmatprep.subr.mxu0 0.0
          %7023 = vmatpush1.msra.mxu0 0.0
          %7024 = vmatprep.subr.mxu0 0.0
          %7025 = vmatpush1.msra.mxu0 0.0
          %7026 = vmatprep.subr.mxu0 0.0
          %7027 = vmatpush1.msra.mxu0 %v7000
          %7028 = vmatprep.subr.mxu0 0.0
          %7029 = vmatpush1.msra.mxu0 %v6987
          %7030 = vmatprep.subr.mxu0 0.0
          %7031 = vmatpush1.msra.mxu0 %v6986
          %7032 = vmatprep.subr.mxu0 0.0
          %7033 = vmatpush1.msra.mxu0 %v6985
          %7034 = vmatprep.subr.mxu0 0.0
          %7035 = vmatpush2.msra.mxu0 0.0
          %7036 = vmatprep.subr.mxu0 0.0
          %7037 = vmatpush2.msra.mxu0 0.0
          %7038 = vmatprep.subr.mxu0 0.0
          %7039 = vmatpush2.msra.mxu0 0.0
          %7040 = vmatprep.subr.mxu0 0.0
          %7041 = vmatpush2.msra.mxu0 0.0
          %7042 = vmatprep.subr.mxu0 0.0
          %7043 = vmatpush2.msra.mxu0 0.0
          %7044 = vmatprep.subr.mxu0 0.0
          %7045 = vmatpush2.msra.mxu0 0.0
          %7046 = vmatprep.subr.mxu0 0.0
          %7047 = vmatpush2.msra.mxu0 0.0
          %7048 = vmatprep.subr.mxu0 0.0
          %7049 = vmatpush2.msra.mxu0 0.0
          %7050 = vmatprep.subr.mxu0 0.0
          %7051 = vmatpush2.msra.mxu0 0.0
          %7052 = vmatprep.subr.mxu0 0.0
          %7053 = vmatpush2.msra.mxu0 0.0
          %7054 = vmatprep.subr.mxu0 0.0
          %7055 = vmatpush2.msra.mxu0 0.0
          %7056 = vmatprep.subr.mxu0 0.0
          %7057 = vmatpush2.msra.mxu0 0.0
          %7058 = vmatprep.subr.mxu0 0.0
          %7059 = vmatpush2.msra.mxu0 0.0
          %7060 = vmatprep.subr.mxu0 0.0
          %7061 = vmatpush2.msra.mxu0 0.0
          %7062 = vmatprep.subr.mxu0 0.0
          %7063 = vmatpush2.msra.mxu0 0.0
          %7064 = vmatprep.subr.mxu0 0.0
          %7065 = vmatpush2.msra.mxu0 0.0
          %7066 = vmatprep.mubr.f32.mxu0 0.0
          %7067 = vmatmul.mubr.f32.gmra.mxu0 %v6997
          %v7068 = vpop.f32.mrf.mxu0
          %v7069 = vadd.f32 %v6994, %v7068
          %v7070 = vpop.f32.mrf.mxu0
          %7071 = vdwg.mxu0
          %v7072 = vmax.f32 %v7069, 0.0
          %v7073 = vld [vmem:[%s17] sm:$0xff]
          %v7074 = vld [vmem:[%s17 + $0x8] sm:$0xff]
          %v7075 = vld [vmem:[%s17 + $0x10] sm:$0xff]
          %v7076 = vld [vmem:[%s17 + $0x18] sm:$0xff]
          %v7077 = vld [vmem:[%s17 + $0x20] sm:$0xff]
          %v7078 = vld [vmem:[%s17 + $0x28] sm:$0xff]
          %v7079 = vld [vmem:[%s17 + $0x30] sm:$0x1]
          %v7080 = vld [vmem:[%s18] sm:$0x1]
          %v7082 = vlaneseq
          %v7083 = vshrl.u32 %v7082, 7
          %v7084 = vsub.s32 0, %v7083
          %v7085 = vrot.slane %v7080, %v7084
          %v7088 = vsel %vm6559, %v7072, 0
          %v7091 = vsel %vm6563, %v7079, 0
          %7093 = vmatprep.subr.mxu0 0.0
          %7094 = vmatpush1.msra.mxu0 0.0
          %7095 = vmatprep.subr.mxu0 0.0
          %7096 = vmatpush1.msra.mxu0 0.0
          %7097 = vmatprep.subr.mxu0 0.0
          %7098 = vmatpush1.msra.mxu0 0.0
          %7099 = vmatprep.subr.mxu0 0.0
          %7100 = vmatpush1.msra.mxu0 0.0
          %7101 = vmatprep.subr.mxu0 0.0
          %7102 = vmatpush1.msra.mxu0 0.0
          %7103 = vmatprep.subr.mxu0 0.0
          %7104 = vmatpush1.msra.mxu0 0.0
          %7105 = vmatprep.subr.mxu0 0.0
          %7106 = vmatpush1.msra.mxu0 0.0
          %7107 = vmatprep.subr.mxu0 0.0
          %7108 = vmatpush1.msra.mxu0 0.0
          %7109 = vmatprep.subr.mxu0 0.0
          %7110 = vmatpush1.msra.mxu0 0.0
          %7111 = vmatprep.subr.mxu0 0.0
          %7112 = vmatpush1.msra.mxu0 %v7091
          %7113 = vmatprep.subr.mxu0 0.0
          %7114 = vmatpush1.msra.mxu0 %v7078
          %7115 = vmatprep.subr.mxu0 0.0
          %7116 = vmatpush1.msra.mxu0 %v7077
          %7117 = vmatprep.subr.mxu0 0.0
          %7118 = vmatpush1.msra.mxu0 %v7076
          %7119 = vmatprep.subr.mxu0 0.0
          %7120 = vmatpush1.msra.mxu0 %v7075
          %7121 = vmatprep.subr.mxu0 0.0
          %7122 = vmatpush1.msra.mxu0 %v7074
          %7123 = vmatprep.subr.mxu0 0.0
          %7124 = vmatpush1.msra.mxu0 %v7073
          %7125 = vmatprep.subr.mxu0 0.0
          %7126 = vmatpush2.msra.mxu0 0.0
          %7127 = vmatprep.subr.mxu0 0.0
          %7128 = vmatpush2.msra.mxu0 0.0
          %7129 = vmatprep.subr.mxu0 0.0
          %7130 = vmatpush2.msra.mxu0 0.0
          %7131 = vmatprep.subr.mxu0 0.0
          %7132 = vmatpush2.msra.mxu0 0.0
          %7133 = vmatprep.subr.mxu0 0.0
          %7134 = vmatpush2.msra.mxu0 0.0
          %7135 = vmatprep.subr.mxu0 0.0
          %7136 = vmatpush2.msra.mxu0 0.0
          %7137 = vmatprep.subr.mxu0 0.0
          %7138 = vmatpush2.msra.mxu0 0.0
          %7139 = vmatprep.subr.mxu0 0.0
          %7140 = vmatpush2.msra.mxu0 0.0
          %7141 = vmatprep.subr.mxu0 0.0
          %7142 = vmatpush2.msra.mxu0 0.0
          %7143 = vmatprep.subr.mxu0 0.0
          %7144 = vmatpush2.msra.mxu0 0.0
          %7145 = vmatprep.subr.mxu0 0.0
          %7146 = vmatpush2.msra.mxu0 0.0
          %7147 = vmatprep.subr.mxu0 0.0
          %7148 = vmatpush2.msra.mxu0 0.0
          %7149 = vmatprep.subr.mxu0 0.0
          %7150 = vmatpush2.msra.mxu0 0.0
          %7151 = vmatprep.subr.mxu0 0.0
          %7152 = vmatpush2.msra.mxu0 0.0
          %7153 = vmatprep.subr.mxu0 0.0
          %7154 = vmatpush2.msra.mxu0 0.0
          %7155 = vmatprep.subr.mxu0 0.0
          %7156 = vmatpush2.msra.mxu0 0.0
          %7157 = vmatprep.mubr.f32.mxu0 0.0
          %7158 = vmatmul.mubr.f32.gmra.mxu0 %v7088
          %v7159 = vpop.f32.mrf.mxu0
          %v7160 = vadd.f32 %v7085, %v7159
          %v7161 = vpop.f32.mrf.mxu0
          %7162 = vdwg.mxu0
          %v7163 = vmax.f32 %v7160, 0.0
          %7164 = vst.msk [vmem:[#allocation2] sm:$0x3] %vm6430, %v7163
        $region104: #{tpu_custom_call.1} parent=95 // pred_fallthru
          _
        // Predicated region
        $region105: #{tpu_custom_call.1} parent=95 // pred_check
          %p7165 = pneg %p453
        $region106: #{tpu_custom_call.1} parent=95 // pred_check_branch
          %7167 = sbr.rel (%p7165) target = $region108
        $region107: #{tpu_custom_call.1} parent=95 // pred_region
          %s7169 = ssub.s32 32, 32
          %7170 = vsyncadd [#allocation3], %s7169
          %s7172 = sshll.u32 [#allocation2], 4
          %s7173 = int_to_ptr.vmem [resolvable:$true] %s7172
          %7175 = dma.vmem_to_hbm [thread:$0]  %s7173, 32, %s19, [#allocation3]
        $region108: #{tpu_custom_call.1} parent=95 // pred_fallthru
          _
        // Predicated region
        $region109: #{tpu_custom_call.1} parent=95 // pred_check
          %p7176 = pneg %p453
        $region110: #{tpu_custom_call.1} parent=95 // pred_check_branch
          %7178 = sbr.rel (%p7176) target = $region112
        $region111: #{tpu_custom_call.1} parent=95 // pred_region
          %7179 = dma.done [#allocation3], 32
        $region112: #{tpu_custom_call.1} parent=95 // pred_fallthru
          _
      $region96: #{tpu_custom_call.1} parent=5 // pred_fallthru
        _
      %p7180 = scmp.le.s32.totalorder 2, %s26
      // Predicated region
      $region113: #{tpu_custom_call.1} parent=5 // pred_check
        %p7181 = pneg %p7180
      $region114: #{tpu_custom_call.1} parent=5 // pred_check_branch
        %7183 = sbr.rel (%p7181) target = $region116
      $region115: #{tpu_custom_call.1} parent=5 // pred_region
        %s7184 = ssub.s32 %s26, 2
      $region116: #{tpu_custom_call.1} parent=5 // pred_fallthru
        _
    $region6: #{tpu_custom_call.1} parent=1 // loop_footer
      %s30 = sadd.s32 1, %s26
    $region7: #{tpu_custom_call.1} parent=1 // loop_footer_branch
      %25 = sbr.rel target = $region3
    $region8: #{tpu_custom_call.1} parent=1 // loop_exit
      _
    %7185 = vsyncpa [#allocation3], 1
    %s7186 = scalar_lea.sflag [#allocation3], 1
    %7187 = vsyncpa %s7186, 1

</llo_original>
